<compile_context>
chip_gen: v7x
topology: tpu7x:2x2x1
jax: 0.10.0
libtpu: 0.0.40
codegen_flags: <defaults>
</compile_context>

<pallas_src>
import functools

import jax
import jax.numpy as jnp
from jax.experimental import pallas as pl
from jax.experimental.pallas import tpu as pltpu


# ----------------------------- helpers ------------------------------------- #

def _round_up(x, m):
    return ((x + m - 1) // m) * m


def _pad_rows(x, m_pad):
    m = x.shape[0]
    if m_pad == m:
        return x
    pad = [(0, m_pad - m)] + [(0, 0)] * (x.ndim - 1)
    return jnp.pad(x, pad)


def _ln_f32(v, g_ref, b_ref, eps):
    mean = jnp.mean(v, axis=-1, keepdims=True)
    vc = v - mean
    var = jnp.mean(vc * vc, axis=-1, keepdims=True)
    return (vc * jax.lax.rsqrt(var + eps) * g_ref[...].astype(jnp.float32)
            + b_ref[...].astype(jnp.float32))


def _mha_rows(q, kv_k, kv_v, heads, scale):
    """q: (Nq, E), kv_k/kv_v: (Nk, E) laid out head-major; returns (Nq, E)."""
    E = q.shape[-1]
    D = E // heads
    outs = []
    for h in range(heads):
        qh = q[:, h * D:(h + 1) * D]
        kh = kv_k[:, h * D:(h + 1) * D]
        vh = kv_v[:, h * D:(h + 1) * D]
        s = jax.lax.dot_general(qh, kh, (((1,), (1,)), ((), ())),
                                preferred_element_type=jnp.float32) * scale
        m = jnp.max(s, axis=-1, keepdims=True)
        p = jnp.exp(s - m)
        p = p / jnp.sum(p, axis=-1, keepdims=True)
        outs.append(jnp.dot(p, vh, preferred_element_type=jnp.float32))
    return jnp.concatenate(outs, axis=-1)     # lane-dense (Nq, E)


# ----------------------------- kernels ------------------------------------- #

def _patch_embed_kernel(x_ref, w_ref, b_ref, pos_ref, o_ref):
    # out = patches @ W + b + pos_embedding   (Conv2d k=stride=patch as matmul)
    x = x_ref[0].astype(jnp.float32)                             # (P, K)
    y = jnp.dot(x, w_ref[...].astype(jnp.float32),
                preferred_element_type=jnp.float32)
    y = y + b_ref[...].astype(jnp.float32) + pos_ref[0].astype(jnp.float32)
    o_ref[0] = y.astype(o_ref.dtype)


def _encoder_layer_kernel(x_ref, ln1g, ln1b, qkvw, qkvb, projw, projb, g1,
                          ln2g, ln2b, fc1w, fc1b, fc2w, fc2b, g2, o_ref,
                          *, heads, scale, eps):
    x = x_ref[0].astype(jnp.float32)                             # (N, E)
    E = x.shape[-1]

    # --- MHSA sub-block
    h = _ln_f32(x, ln1g, ln1b, eps)
    qkv = jnp.dot(h, qkvw[...].astype(jnp.float32),
                  preferred_element_type=jnp.float32) + qkvb[...].astype(jnp.float32)
    a = _mha_rows(qkv[:, 0:E], qkv[:, E:2 * E], qkv[:, 2 * E:3 * E], heads, scale)
    a = jnp.dot(a, projw[...].astype(jnp.float32),
                preferred_element_type=jnp.float32) + projb[...].astype(jnp.float32)
    x = x + g1[...].astype(jnp.float32) * a

    # --- FFN sub-block
    h = _ln_f32(x, ln2g, ln2b, eps)
    f = jnp.dot(h, fc1w[...].astype(jnp.float32),
                preferred_element_type=jnp.float32) + fc1b[...].astype(jnp.float32)
    f = jax.nn.gelu(f, approximate=True)
    y = jnp.dot(f, fc2w[...].astype(jnp.float32),
                preferred_element_type=jnp.float32) + fc2b[...].astype(jnp.float32)
    x = x + g2[...].astype(jnp.float32) * y
    o_ref[0] = x.astype(o_ref.dtype)


def _decoder_layer_kernel(x_ref, kv_ref, ln1g, ln1b, qkvw, qkvb, p1w, p1b,
                          ln2g, ln2b, p2w, p2b, ln3g, ln3b, fc1w, fc1b,
                          fc2w, fc2b, o_ref, *, heads, scale, eps):
    x = x_ref[0].astype(jnp.float32)                             # (1, E)
    kv = kv_ref[0].astype(jnp.float32)                           # (P, E)
    E = x.shape[-1]

    # --- self-attention on a length-1 query sequence.
    # softmax over a single key is exactly 1.0, so attn @ v == v; the merged
    # head output is just the value columns of the qkv projection.
    h = _ln_f32(x, ln1g, ln1b, eps)
    qkv = jnp.dot(h, qkvw[...].astype(jnp.float32),
                  preferred_element_type=jnp.float32) + qkvb[...].astype(jnp.float32)
    v_self = qkv[:, 2 * E:3 * E]                                 # (1, E)
    a = jnp.dot(v_self, p1w[...].astype(jnp.float32),
                preferred_element_type=jnp.float32) + p1b[...].astype(jnp.float32)
    x = x + a

    # --- cross-attention: q = norm2(x) (no projection), k = v = encoder tokens.
    h = _ln_f32(x, ln2g, ln2b, eps)
    a = _mha_rows(h, kv, kv, heads, scale)
    a = jnp.dot(a, p2w[...].astype(jnp.float32),
                preferred_element_type=jnp.float32) + p2b[...].astype(jnp.float32)
    x = x + a

    # --- FFN
    h = _ln_f32(x, ln3g, ln3b, eps)
    f = jnp.dot(h, fc1w[...].astype(jnp.float32),
                preferred_element_type=jnp.float32) + fc1b[...].astype(jnp.float32)
    f = jax.nn.gelu(f, approximate=True)
    y = jnp.dot(f, fc2w[...].astype(jnp.float32),
                preferred_element_type=jnp.float32) + fc2b[...].astype(jnp.float32)
    x = x + y
    o_ref[0] = x.astype(o_ref.dtype)


def _layernorm_kernel(x_ref, g_ref, b_ref, o_ref, *, eps):
    x = x_ref[...].astype(jnp.float32)
    o_ref[...] = _ln_f32(x, g_ref, b_ref, eps).astype(o_ref.dtype)


# ----------------------------- wrappers ------------------------------------ #

def pallas_patch_embed(patches, w, b, pos):
    """patches: (B, P, K), w: (K, E), b: (E,), pos: (1, P, E) -> (B, P, E)."""
    B, P, K = patches.shape
    E = w.shape[1]
    cost = pl.CostEstimate(flops=2 * B * P * K * E, transcendentals=0,
                           bytes_accessed=4 * (B * P * K + K * E + 2 * B * P * E + P * E))
    return pl.pallas_call(
        _patch_embed_kernel,
        out_shape=jax.ShapeDtypeStruct((B, P, E), patches.dtype),
        grid_spec=pltpu.PrefetchScalarGridSpec(
            num_scalar_prefetch=0, grid=(B,),
            in_specs=[
                pl.BlockSpec((1, P, K), lambda i: (i, 0, 0)),
                pl.BlockSpec((K, E), lambda i: (0, 0)),
                pl.BlockSpec((1, E), lambda i: (0, 0)),
                pl.BlockSpec((1, P, E), lambda i: (0, 0, 0)),
            ],
            out_specs=pl.BlockSpec((1, P, E), lambda i: (i, 0, 0)),
        ),
        compiler_params=pltpu.CompilerParams(dimension_semantics=("parallel",)),
        cost_estimate=cost,
    )(patches, w, b.reshape(1, E), pos)


def pallas_encoder_layer(seq, lp, *, heads, scale, eps=1e-5):
    """Fused encoder layer over (B, N, E), grid over batch."""
    B, N, E = seq.shape
    hidden = lp["fc1_b"].shape[0]
    D = E // heads
    flops = B * (2 * N * E * 3 * E + 4 * heads * N * N * D + 2 * N * E * E
                 + 4 * N * E * hidden)
    cost = pl.CostEstimate(
        flops=flops,
        transcendentals=B * (heads * N * N + N * hidden),
        bytes_accessed=4 * (2 * B * N * E + 3 * E * E + E * E + 2 * E * hidden + 10 * E))
    vec = lambda v: v.reshape(1, -1)
    kern = functools.partial(_encoder_layer_kernel, heads=heads, scale=scale, eps=eps)
    return pl.pallas_call(
        kern,
        out_shape=jax.ShapeDtypeStruct((B, N, E), seq.dtype),
        grid_spec=pltpu.PrefetchScalarGridSpec(
            num_scalar_prefetch=0, grid=(B,),
            in_specs=[
                pl.BlockSpec((1, N, E), lambda i: (i, 0, 0)),      # x
                pl.BlockSpec((1, E), lambda i: (0, 0)),            # ln1_g
                pl.BlockSpec((1, E), lambda i: (0, 0)),            # ln1_b
                pl.BlockSpec((E, 3 * E), lambda i: (0, 0)),        # qkv_w
                pl.BlockSpec((1, 3 * E), lambda i: (0, 0)),        # qkv_b
                pl.BlockSpec((E, E), lambda i: (0, 0)),            # proj_w
                pl.BlockSpec((1, E), lambda i: (0, 0)),            # proj_b
                pl.BlockSpec((1, E), lambda i: (0, 0)),            # gamma1
                pl.BlockSpec((1, E), lambda i: (0, 0)),            # ln2_g
                pl.BlockSpec((1, E), lambda i: (0, 0)),            # ln2_b
                pl.BlockSpec((E, hidden), lambda i: (0, 0)),       # fc1_w
                pl.BlockSpec((1, hidden), lambda i: (0, 0)),       # fc1_b
                pl.BlockSpec((hidden, E), lambda i: (0, 0)),       # fc2_w
                pl.BlockSpec((1, E), lambda i: (0, 0)),            # fc2_b
                pl.BlockSpec((1, E), lambda i: (0, 0)),            # gamma2
            ],
            out_specs=pl.BlockSpec((1, N, E), lambda i: (i, 0, 0)),
        ),
        compiler_params=pltpu.CompilerParams(dimension_semantics=("parallel",)),
        cost_estimate=cost,
    )(seq, vec(lp["ln1_g"]), vec(lp["ln1_b"]), lp["qkv_w"], vec(lp["qkv_b"]),
      lp["proj_w"], vec(lp["proj_b"]), vec(lp["gamma1"]),
      vec(lp["ln2_g"]), vec(lp["ln2_b"]), lp["fc1_w"], vec(lp["fc1_b"]),
      lp["fc2_w"], vec(lp["fc2_b"]), vec(lp["gamma2"]))


def pallas_decoder_layer(q_seq, kv, lp, *, heads, scale, eps=1e-5):
    """Fused decoder layer. q_seq: (B, 1, E), kv: (B, P, E) -> (B, 1, E)."""
    B, _, E = q_seq.shape
    P = kv.shape[1]
    hidden = lp["fc1_b"].shape[0]
    D = E // heads
    flops = B * (2 * E * 3 * E + 2 * 2 * E * E + 4 * heads * P * D + 4 * E * hidden)
    cost = pl.CostEstimate(
        flops=flops,
        transcendentals=B * (heads * P + hidden),
        bytes_accessed=4 * (2 * B * E + B * P * E + 3 * E * E + 2 * E * E
                            + 2 * E * hidden + 10 * E))
    vec = lambda v: v.reshape(1, -1)
    kern = functools.partial(_decoder_layer_kernel, heads=heads, scale=scale, eps=eps)
    return pl.pallas_call(
        kern,
        out_shape=jax.ShapeDtypeStruct((B, 1, E), q_seq.dtype),
        grid_spec=pltpu.PrefetchScalarGridSpec(
            num_scalar_prefetch=0, grid=(B,),
            in_specs=[
                pl.BlockSpec((1, 1, E), lambda i: (i, 0, 0)),      # query token
                pl.BlockSpec((1, P, E), lambda i: (i, 0, 0)),      # encoder tokens
                pl.BlockSpec((1, E), lambda i: (0, 0)),            # ln1_g
                pl.BlockSpec((1, E), lambda i: (0, 0)),            # ln1_b
                pl.BlockSpec((E, 3 * E), lambda i: (0, 0)),        # qkv_w
                pl.BlockSpec((1, 3 * E), lambda i: (0, 0)),        # qkv_b
                pl.BlockSpec((E, E), lambda i: (0, 0)),            # proj1_w
                pl.BlockSpec((1, E), lambda i: (0, 0)),            # proj1_b
                pl.BlockSpec((1, E), lambda i: (0, 0)),            # ln2_g
                pl.BlockSpec((1, E), lambda i: (0, 0)),            # ln2_b
                pl.BlockSpec((E, E), lambda i: (0, 0)),            # proj2_w
                pl.BlockSpec((1, E), lambda i: (0, 0)),            # proj2_b
                pl.BlockSpec((1, E), lambda i: (0, 0)),            # ln3_g
                pl.BlockSpec((1, E), lambda i: (0, 0)),            # ln3_b
                pl.BlockSpec((E, hidden), lambda i: (0, 0)),       # fc1_w
                pl.BlockSpec((1, hidden), lambda i: (0, 0)),       # fc1_b
                pl.BlockSpec((hidden, E), lambda i: (0, 0)),       # fc2_w
                pl.BlockSpec((1, E), lambda i: (0, 0)),            # fc2_b
            ],
            out_specs=pl.BlockSpec((1, 1, E), lambda i: (i, 0, 0)),
        ),
        compiler_params=pltpu.CompilerParams(dimension_semantics=("parallel",)),
        cost_estimate=cost,
    )(q_seq, kv, vec(lp["ln1_g"]), vec(lp["ln1_b"]), lp["qkv_w"], vec(lp["qkv_b"]),
      lp["proj1_w"], vec(lp["proj1_b"]), vec(lp["ln2_g"]), vec(lp["ln2_b"]),
      lp["proj2_w"], vec(lp["proj2_b"]), vec(lp["ln3_g"]), vec(lp["ln3_b"]),
      lp["fc1_w"], vec(lp["fc1_b"]), lp["fc2_w"], vec(lp["fc2_b"]))


def pallas_layernorm(x, gamma, beta, eps=1e-5):
    """Row-wise LayerNorm. x: (M, C). Full-array block when small (no padding)."""
    M, C = x.shape
    if M <= 1024:
        tm, Mp, ntiles, xp = M, M, 1, x
    else:
        ntiles = pl.cdiv(M, 512)
        tm = _round_up(-(-M // ntiles), 8)
        Mp = tm * ntiles
        xp = _pad_rows(x, Mp)
    out = pl.pallas_call(
        functools.partial(_layernorm_kernel, eps=eps),
        out_shape=jax.ShapeDtypeStruct((Mp, C), x.dtype),
        grid_spec=pltpu.PrefetchScalarGridSpec(
            num_scalar_prefetch=0, grid=(ntiles,),
            in_specs=[
                pl.BlockSpec((tm, C), lambda i: (i, 0)),
                pl.BlockSpec((1, C), lambda i: (0, 0)),
                pl.BlockSpec((1, C), lambda i: (0, 0)),
            ],
            out_specs=pl.BlockSpec((tm, C), lambda i: (i, 0)),
        ),
        compiler_params=pltpu.CompilerParams(dimension_semantics=("parallel",)),
    )(xp, gamma.reshape(1, C), beta.reshape(1, C))
    return out[:M]


# ----------------------------- Pallas forward ------------------------------ #

def transformer_branch_forward_pallas(params, x, *, heads, patch_size):
    B, Cin, H, W = x.shape
    ps = patch_size
    Hp, Wp = H // ps, W // ps
    P = Hp * Wp
    E = params["patch_b"].shape[0]
    D = E // heads
    scale = D ** -0.5

    # Patch extraction (layout only) + fused (matmul + bias + pos_emb) kernel.
    patches = x.reshape(B, Cin, Hp, ps, Wp, ps)
    patches = patches.transpose(0, 2, 4, 1, 3, 5).reshape(B, P, Cin * ps * ps)
    tok = pallas_patch_embed(patches, params["patch_w"], params["patch_b"],
                             params["pos_emb"])                   # (B, P, E)

    cls = jnp.broadcast_to(params["token"], (B, 1, E)).astype(tok.dtype)
    seq = jnp.concatenate([cls, tok], axis=1)                     # (B, N, E)
    N = P + 1

    # Encoder: one fused pallas_call per layer.
    for lp in params["enc_layers"]:
        seq = pallas_encoder_layer(seq, lp, heads=heads, scale=scale)

    xe = pallas_layernorm(seq.reshape(B * N, E), params["enc_norm_g"],
                          params["enc_norm_b"]).reshape(B, N, E)
    q_seq = xe[:, 0:1, :]                                         # (B, 1, E)
    kv = xe[:, 1:, :]                                             # (B, P, E)

    # Decoder: one fused pallas_call per layer.
    for lp in params["dec_layers"]:
        q_seq = pallas_decoder_layer(q_seq, kv, lp, heads=heads, scale=scale)

    # Decoder final norm + flatten(x, 1) on (B, 1, E) -> (B, E).
    return pallas_layernorm(q_seq.reshape(B, E), params["dec_norm_g"],
                            params["dec_norm_b"])


# -------------------------- pure-JAX reference ------------------------------ #

def _ref_ln(v, g, b, eps=1e-5):
    mean = jnp.mean(v, axis=-1, keepdims=True)
    var = jnp.mean((v - mean) ** 2, axis=-1, keepdims=True)
    return (v - mean) * jax.lax.rsqrt(var + eps) * g + b


def _ref_mhsa_self(x, qkv_w, qkv_b, proj_w, proj_b, heads, scale):
    B, N, E = x.shape
    D = E // heads
    qkv = x @ qkv_w + qkv_b
    qkv = qkv.reshape(B, N, 3, heads, D).transpose(2, 0, 3, 1, 4)
    q, k, v = qkv[0], qkv[1], qkv[2]
    s = jnp.einsum("bhnd,bhmd->bhnm", q, k) * scale
    p = jax.nn.softmax(s, axis=-1)
    o = jnp.einsum("bhnm,bhmd->bhnd", p, v).transpose(0, 2, 1, 3).reshape(B, N, E)
    return o @ proj_w + proj_b


def _ref_mhsa_cross(q_in, kv, proj_w, proj_b, heads, scale):
    B, Nq, E = q_in.shape
    Nk = kv.shape[1]
    D = E // heads
    q = q_in.reshape(B, Nq, heads, D).transpose(0, 2, 1, 3)
    k = kv.reshape(B, Nk, heads, D).transpose(0, 2, 1, 3)
    v = k
    s = jnp.einsum("bhnd,bhmd->bhnm", q, k) * scale
    p = jax.nn.softmax(s, axis=-1)
    o = jnp.einsum("bhnm,bhmd->bhnd", p, v).transpose(0, 2, 1, 3).reshape(B, Nq, E)
    return o @ proj_w + proj_b


def transformer_branch_forward_ref(params, x, *, heads, patch_size):
    B, Cin, H, W = x.shape
    ps = patch_size
    Hp, Wp = H // ps, W // ps
    P = Hp * Wp
    E = params["patch_b"].shape[0]
    D = E // heads
    scale = D ** -0.5

    patches = x.reshape(B, Cin, Hp, ps, Wp, ps)
    patches = patches.transpose(0, 2, 4, 1, 3, 5).reshape(B, P, Cin * ps * ps)
    tok = patches @ params["patch_w"] + params["patch_b"] + params["pos_emb"]
    cls = jnp.broadcast_to(params["token"], (B, 1, E))
    xt = jnp.concatenate([cls, tok], axis=1)

    for lp in params["enc_layers"]:
        h = _ref_ln(xt, lp["ln1_g"], lp["ln1_b"])
        a = _ref_mhsa_self(h, lp["qkv_w"], lp["qkv_b"], lp["proj_w"], lp["proj_b"],
                           heads, scale)
        xt = xt + lp["gamma1"] * a
        h = _ref_ln(xt, lp["ln2_g"], lp["ln2_b"])
        f = jax.nn.gelu(h @ lp["fc1_w"] + lp["fc1_b"], approximate=True)
        xt = xt + lp["gamma2"] * (f @ lp["fc2_w"] + lp["fc2_b"])

    xt = _ref_ln(xt, params["enc_norm_g"], params["enc_norm_b"])
    q_seq = xt[:, 0:1, :]
    kv = xt[:, 1:, :]

    for lp in params["dec_layers"]:
        h = _ref_ln(q_seq, lp["ln1_g"], lp["ln1_b"])
        a = _ref_mhsa_self(h, lp["qkv_w"], lp["qkv_b"], lp["proj1_w"], lp["proj1_b"],
                           heads, scale)
        q_seq = q_seq + a
        h = _ref_ln(q_seq, lp["ln2_g"], lp["ln2_b"])
        a = _ref_mhsa_cross(h, kv, lp["proj2_w"], lp["proj2_b"], heads, scale)
        q_seq = q_seq + a
        h = _ref_ln(q_seq, lp["ln3_g"], lp["ln3_b"])
        f = jax.nn.gelu(h @ lp["fc1_w"] + lp["fc1_b"], approximate=True)
        q_seq = q_seq + f @ lp["fc2_w"] + lp["fc2_b"]

    out = _ref_ln(q_seq, params["dec_norm_g"], params["dec_norm_b"])
    return out.reshape(B, E)


# ----------------------------- parameter init ------------------------------ #

def init_params(key, *, in_channels, patch_size, embed_dim, enc_depth,
                dec_depth, ffn_ratio, patches, init_value):
    hidden = int(embed_dim * ffn_ratio)
    keys = iter(jax.random.split(key, 4096))

    def nrm(shape, std=0.02):
        return std * jax.random.normal(next(keys), shape, dtype=jnp.float32)

    def ln_pair():
        return (1.0 + nrm((embed_dim,), 0.05), nrm((embed_dim,), 0.05))

    params = {
        "patch_w": nrm((in_channels * patch_size * patch_size, embed_dim)),
        "patch_b": nrm((embed_dim,)),
        "token": nrm((1, 1, embed_dim)),
        "pos_emb": nrm((1, patches, embed_dim)),
        "enc_layers": [],
        "dec_layers": [],
    }
    params["enc_norm_g"], params["enc_norm_b"] = ln_pair()
    params["dec_norm_g"], params["dec_norm_b"] = ln_pair()

    for _ in range(enc_depth):
        g1, b1 = ln_pair()
        g2, b2 = ln_pair()
        params["enc_layers"].append({
            "ln1_g": g1, "ln1_b": b1,
            "qkv_w": nrm((embed_dim, 3 * embed_dim)), "qkv_b": nrm((3 * embed_dim,)),
            "proj_w": nrm((embed_dim, embed_dim)), "proj_b": nrm((embed_dim,)),
            "gamma1": init_value * jnp.ones((embed_dim,), jnp.float32),
            "ln2_g": g2, "ln2_b": b2,
            "fc1_w": nrm((embed_dim, hidden)), "fc1_b": nrm((hidden,)),
            "fc2_w": nrm((hidden, embed_dim)), "fc2_b": nrm((embed_dim,)),
            "gamma2": init_value * jnp.ones((embed_dim,), jnp.float32),
        })
    for _ in range(dec_depth):
        g1, b1 = ln_pair()
        g2, b2 = ln_pair()
        g3, b3 = ln_pair()
        params["dec_layers"].append({
            "ln1_g": g1, "ln1_b": b1,
            "qkv_w": nrm((embed_dim, 3 * embed_dim)), "qkv_b": nrm((3 * embed_dim,)),
            "proj1_w": nrm((embed_dim, embed_dim)), "proj1_b": nrm((embed_dim,)),
            "ln2_g": g2, "ln2_b": b2,
            "proj2_w": nrm((embed_dim, embed_dim)), "proj2_b": nrm((embed_dim,)),
            "ln3_g": g3, "ln3_b": b3,
            "fc1_w": nrm((embed_dim, hidden)), "fc1_b": nrm((hidden,)),
            "fc2_w": nrm((hidden, embed_dim)), "fc2_b": nrm((embed_dim,)),
        })
    return params


# --------------------------------- main ------------------------------------ #

if __name__ == "__main__":
    # Small config consistent with TransformerBranch (scaled-down defaults):
    # 32x32 RGB, patch 16 -> 4 patches (+1 class token), embed 128, 4 heads,
    # 2 encoder layers, 1 decoder layer, ffn_ratio 4, qkv_bias, dropouts 0.
    B, Cin, Hin, Win = 2, 3, 32, 32
    patch_size = 16
    embed_dim = 128
    heads = 4
    enc_depth = 2
    dec_depth = 1
    ffn_ratio = 4.0
    init_value = 0.1
    patches = (Hin // patch_size) * (Win // patch_size)

    key = jax.random.PRNGKey(0)
    kx, kp = jax.random.split(key)
    x = jax.random.normal(kx, (B, Cin, Hin, Win), dtype=jnp.float32)
    params = init_params(kp, in_channels=Cin, patch_size=patch_size,
                         embed_dim=embed_dim, enc_depth=enc_depth,
                         dec_depth=dec_depth, ffn_ratio=ffn_ratio,
                         patches=patches, init_value=init_value)

    fwd_pallas = jax.jit(lambda xx: transformer_branch_forward_pallas(
        params, xx, heads=heads, patch_size=patch_size))
    fwd_ref = jax.jit(lambda xx: transformer_branch_forward_ref(
        params, xx, heads=heads, patch_size=patch_size))

    out = jax.block_until_ready(fwd_pallas(x))
    ref = jax.block_until_ready(fwd_ref(x))

    assert out.shape == (B, embed_dim), out.shape
    assert bool(jnp.all(jnp.isfinite(out))), "non-finite output"
    err = float(jnp.max(jnp.abs(out - ref)))
    assert jnp.allclose(out, ref, atol=2e-3, rtol=2e-3), \
        f"mismatch vs reference, max abs err={err}"

    print("KERNEL_OK")
</pallas_src>

<mosaic_0001>
module attributes {stable_mosaic.version = 11 : i64} {
  func.func @_patch_embed_kernel(%arg0: i32, %arg1: memref<1x4x768xf32, #tpu.memory_space<vmem>>, %arg2: memref<768x128xf32, #tpu.memory_space<vmem>>, %arg3: memref<1x128xf32, #tpu.memory_space<vmem>>, %arg4: memref<1x4x128xf32, #tpu.memory_space<vmem>>, %arg5: memref<1x4x128xf32, #tpu.memory_space<vmem>>) attributes {dimension_semantics = [#tpu.dimension_semantics<parallel>], iteration_bounds = array<i64: 2>, scalar_prefetch = 0 : i64, scratch_operands = 0 : i64, tpu.core_type = #tpu.core_type<tc>, window_params = [{transform_indices = @transform_0, window_bounds = array<i64: 1, 4, 768>}, {pipeline_mode = #tpu.pipeline_mode<synchronous>, transform_indices = @transform_1, window_bounds = array<i64: 768, 128>}, {pipeline_mode = #tpu.pipeline_mode<synchronous>, transform_indices = @transform_2, window_bounds = array<i64: 1, 128>}, {pipeline_mode = #tpu.pipeline_mode<synchronous>, transform_indices = @transform_3, window_bounds = array<i64: 1, 4, 128>}, {transform_indices = @transform_4, window_bounds = array<i64: 1, 4, 128>}]} {
    %c0 = arith.constant 0 : index
    %c0_0 = arith.constant 0 : index
    %c0_1 = arith.constant 0 : index
    %0 = vector.load %arg1[%c0, %c0_0, %c0_1] : memref<1x4x768xf32, #tpu.memory_space<vmem>>, vector<1x4x768xf32>
    %1 = vector.shape_cast %0 : vector<1x4x768xf32> to vector<4x768xf32>
    %c0_2 = arith.constant 0 : index
    %c0_3 = arith.constant 0 : index
    %2 = vector.load %arg2[%c0_2, %c0_3] : memref<768x128xf32, #tpu.memory_space<vmem>>, vector<768x128xf32>
    %cst = arith.constant dense<0.000000e+00> : vector<4x128xf32>
    %3 = tpu.matmul %1, %2, %cst {dimension_numbers = #tpu.dot_dimension_numbers<[1], [0], [0], [1], [0, 0, 1, 1], [], []>} : vector<4x768xf32>, vector<768x128xf32>, vector<4x128xf32> -> vector<4x128xf32>
    %c0_4 = arith.constant 0 : index
    %c0_5 = arith.constant 0 : index
    %4 = vector.load %arg3[%c0_4, %c0_5] : memref<1x128xf32, #tpu.memory_space<vmem>>, vector<1x128xf32>
    %5 = vector.broadcast %4 : vector<1x128xf32> to vector<4x128xf32>
    %6 = arith.addf %3, %5 : vector<4x128xf32>
    %c0_6 = arith.constant 0 : index
    %c0_7 = arith.constant 0 : index
    %c0_8 = arith.constant 0 : index
    %7 = vector.load %arg4[%c0_6, %c0_7, %c0_8] : memref<1x4x128xf32, #tpu.memory_space<vmem>>, vector<1x4x128xf32>
    %8 = vector.shape_cast %7 : vector<1x4x128xf32> to vector<4x128xf32>
    %9 = arith.addf %6, %8 : vector<4x128xf32>
    %c0_9 = arith.constant 0 : index
    %c0_10 = arith.constant 0 : index
    %c0_11 = arith.constant 0 : index
    %10 = vector.load %arg5[%c0_9, %c0_10, %c0_11] : memref<1x4x128xf32, #tpu.memory_space<vmem>>, vector<1x4x128xf32>
    %11 = vector.shape_cast %10 : vector<1x4x128xf32> to vector<4x128xf32>
    %12 = vector.shape_cast %9 : vector<4x128xf32> to vector<1x4x128xf32>
    tpu.vector_store %arg5[%c0_9, %c0_10, %c0_11], %12 {strides = array<i32>} : memref<1x4x128xf32, #tpu.memory_space<vmem>>, vector<1x4x128xf32>,
    return
  }
  func.func @transform_0(%arg0: i32) -> (i32, i32, i32) {
    %c0_i32 = arith.constant 0 : i32
    %c0_i32_0 = arith.constant 0 : i32
    %c0_i32_1 = arith.constant 0 : i32
    return %arg0, %c0_i32, %c0_i32_0 : i32, i32, i32
  }
  func.func @transform_1(%arg0: i32) -> (i32, i32) {
    %c0_i32 = arith.constant 0 : i32
    %c0_i32_0 = arith.constant 0 : i32
    %c0_i32_1 = arith.constant 0 : i32
    return %c0_i32, %c0_i32_0 : i32, i32
  }
  func.func @transform_2(%arg0: i32) -> (i32, i32) {
    %c0_i32 = arith.constant 0 : i32
    %c0_i32_0 = arith.constant 0 : i32
    %c0_i32_1 = arith.constant 0 : i32
    return %c0_i32, %c0_i32_0 : i32, i32
  }
  func.func @transform_3(%arg0: i32) -> (i32, i32, i32) {
    %c0_i32 = arith.constant 0 : i32
    %c0_i32_0 = arith.constant 0 : i32
    %c0_i32_1 = arith.constant 0 : i32
    %c0_i32_2 = arith.constant 0 : i32
    return %c0_i32, %c0_i32_0, %c0_i32_1 : i32, i32, i32
  }
  func.func @transform_4(%arg0: i32) -> (i32, i32, i32) {
    %c0_i32 = arith.constant 0 : i32
    %c0_i32_0 = arith.constant 0 : i32
    %c0_i32_1 = arith.constant 0 : i32
    return %arg0, %c0_i32, %c0_i32_0 : i32, i32, i32
  }
}

module attributes {stable_mosaic.version = 11 : i64} {
  func.func @_layernorm_kernel(%arg0: i32, %arg1: memref<10x128xf32, #tpu.memory_space<vmem>>, %arg2: memref<1x128xf32, #tpu.memory_space<vmem>>, %arg3: memref<1x128xf32, #tpu.memory_space<vmem>>, %arg4: memref<10x128xf32, #tpu.memory_space<vmem>>) attributes {dimension_semantics = [#tpu.dimension_semantics<parallel>], iteration_bounds = array<i64: 1>, scalar_prefetch = 0 : i64, scratch_operands = 0 : i64, tpu.core_type = #tpu.core_type<tc>, window_params = [{transform_indices = @transform_0, window_bounds = array<i64: 10, 128>}, {pipeline_mode = #tpu.pipeline_mode<synchronous>, transform_indices = @transform_1, window_bounds = array<i64: 1, 128>}, {pipeline_mode = #tpu.pipeline_mode<synchronous>, transform_indices = @transform_2, window_bounds = array<i64: 1, 128>}, {transform_indices = @transform_3, window_bounds = array<i64: 10, 128>}]} {
    %c0 = arith.constant 0 : index
    %c0_0 = arith.constant 0 : index
    %0 = vector.load %arg1[%c0, %c0_0] : memref<10x128xf32, #tpu.memory_space<vmem>>, vector<10x128xf32>
    %cst = arith.constant dense<0.000000e+00> : vector<10xf32>
    %1 = vector.multi_reduction <add>, %0, %cst [1] : vector<10x128xf32> to vector<10xf32>
    %2 = vector.shape_cast %1 : vector<10xf32> to vector<10x1xf32>
    %cst_1 = arith.constant 1.280000e+02 : f32
    %3 = vector.broadcast %cst_1 : f32 to vector<10x1xf32>
    %4 = arith.divf %2, %3 : vector<10x1xf32>
    %5 = vector.broadcast %4 : vector<10x1xf32> to vector<10x128xf32>
    %6 = arith.subf %0, %5 : vector<10x128xf32>
    %7 = arith.mulf %6, %6 : vector<10x128xf32>
    %cst_2 = arith.constant dense<0.000000e+00> : vector<10xf32>
    %8 = vector.multi_reduction <add>, %7, %cst_2 [1] : vector<10x128xf32> to vector<10xf32>
    %9 = vector.shape_cast %8 : vector<10xf32> to vector<10x1xf32>
    %cst_3 = arith.constant 1.280000e+02 : f32
    %10 = vector.broadcast %cst_3 : f32 to vector<10x1xf32>
    %11 = arith.divf %9, %10 : vector<10x1xf32>
    %cst_4 = arith.constant 9.99999974E-6 : f32
    %12 = vector.broadcast %cst_4 : f32 to vector<10x1xf32>
    %13 = arith.addf %11, %12 : vector<10x1xf32>
    %14 = math.rsqrt %13 : vector<10x1xf32>
    %15 = vector.broadcast %14 : vector<10x1xf32> to vector<10x128xf32>
    %16 = arith.mulf %6, %15 : vector<10x128xf32>
    %c0_5 = arith.constant 0 : index
    %c0_6 = arith.constant 0 : index
    %17 = vector.load %arg2[%c0_5, %c0_6] : memref<1x128xf32, #tpu.memory_space<vmem>>, vector<1x128xf32>
    %18 = vector.broadcast %17 : vector<1x128xf32> to vector<10x128xf32>
    %19 = arith.mulf %16, %18 : vector<10x128xf32>
    %c0_7 = arith.constant 0 : index
    %c0_8 = arith.constant 0 : index
    %20 = vector.load %arg3[%c0_7, %c0_8] : memref<1x128xf32, #tpu.memory_space<vmem>>, vector<1x128xf32>
    %21 = vector.broadcast %20 : vector<1x128xf32> to vector<10x128xf32>
    %22 = arith.addf %19, %21 : vector<10x128xf32>
    %c0_9 = arith.constant 0 : index
    %c0_10 = arith.constant 0 : index
    %23 = vector.load %arg4[%c0_9, %c0_10] : memref<10x128xf32, #tpu.memory_space<vmem>>, vector<10x128xf32>
    tpu.vector_store %arg4[%c0_9, %c0_10], %22 {strides = array<i32>} : memref<10x128xf32, #tpu.memory_space<vmem>>, vector<10x128xf32>,
    return
  }
  func.func @transform_0(%arg0: i32) -> (i32, i32) {
    %c0_i32 = arith.constant 0 : i32
    %c0_i32_0 = arith.constant 0 : i32
    return %arg0, %c0_i32 : i32, i32
  }
  func.func @transform_1(%arg0: i32) -> (i32, i32) {
    %c0_i32 = arith.constant 0 : i32
    %c0_i32_0 = arith.constant 0 : i32
    %c0_i32_1 = arith.constant 0 : i32
    return %c0_i32, %c0_i32_0 : i32, i32
  }
  func.func @transform_2(%arg0: i32) -> (i32, i32) {
    %c0_i32 = arith.constant 0 : i32
    %c0_i32_0 = arith.constant 0 : i32
    %c0_i32_1 = arith.constant 0 : i32
    return %c0_i32, %c0_i32_0 : i32, i32
  }
  func.func @transform_3(%arg0: i32) -> (i32, i32) {
    %c0_i32 = arith.constant 0 : i32
    %c0_i32_0 = arith.constant 0 : i32
    return %arg0, %c0_i32 : i32, i32
  }
}

module attributes {stable_mosaic.version = 11 : i64} {
  func.func @_encoder_layer_kernel(%arg0: i32, %arg1: memref<1x5x128xf32, #tpu.memory_space<vmem>>, %arg2: memref<1x128xf32, #tpu.memory_space<vmem>>, %arg3: memref<1x128xf32, #tpu.memory_space<vmem>>, %arg4: memref<128x384xf32, #tpu.memory_space<vmem>>, %arg5: memref<1x384xf32, #tpu.memory_space<vmem>>, %arg6: memref<128x128xf32, #tpu.memory_space<vmem>>, %arg7: memref<1x128xf32, #tpu.memory_space<vmem>>, %arg8: memref<1x128xf32, #tpu.memory_space<vmem>>, %arg9: memref<1x128xf32, #tpu.memory_space<vmem>>, %arg10: memref<1x128xf32, #tpu.memory_space<vmem>>, %arg11: memref<128x512xf32, #tpu.memory_space<vmem>>, %arg12: memref<1x512xf32, #tpu.memory_space<vmem>>, %arg13: memref<512x128xf32, #tpu.memory_space<vmem>>, %arg14: memref<1x128xf32, #tpu.memory_space<vmem>>, %arg15: memref<1x128xf32, #tpu.memory_space<vmem>>, %arg16: memref<1x5x128xf32, #tpu.memory_space<vmem>>) attributes {dimension_semantics = [#tpu.dimension_semantics<parallel>], iteration_bounds = array<i64: 2>, scalar_prefetch = 0 : i64, scratch_operands = 0 : i64, tpu.core_type = #tpu.core_type<tc>, window_params = [{transform_indices = @transform_0, window_bounds = array<i64: 1, 5, 128>}, {pipeline_mode = #tpu.pipeline_mode<synchronous>, transform_indices = @transform_1, window_bounds = array<i64: 1, 128>}, {pipeline_mode = #tpu.pipeline_mode<synchronous>, transform_indices = @transform_2, window_bounds = array<i64: 1, 128>}, {pipeline_mode = #tpu.pipeline_mode<synchronous>, transform_indices = @transform_3, window_bounds = array<i64: 128, 384>}, {pipeline_mode = #tpu.pipeline_mode<synchronous>, transform_indices = @transform_4, window_bounds = array<i64: 1, 384>}, {pipeline_mode = #tpu.pipeline_mode<synchronous>, transform_indices = @transform_5, window_bounds = array<i64: 128, 128>}, {pipeline_mode = #tpu.pipeline_mode<synchronous>, transform_indices = @transform_6, window_bounds = array<i64: 1, 128>}, {pipeline_mode = #tpu.pipeline_mode<synchronous>, transform_indices = @transform_7, window_bounds = array<i64: 1, 128>}, {pipeline_mode = #tpu.pipeline_mode<synchronous>, transform_indices = @transform_8, window_bounds = array<i64: 1, 128>}, {pipeline_mode = #tpu.pipeline_mode<synchronous>, transform_indices = @transform_9, window_bounds = array<i64: 1, 128>}, {pipeline_mode = #tpu.pipeline_mode<synchronous>, transform_indices = @transform_10, window_bounds = array<i64: 128, 512>}, {pipeline_mode = #tpu.pipeline_mode<synchronous>, transform_indices = @transform_11, window_bounds = array<i64: 1, 512>}, {pipeline_mode = #tpu.pipeline_mode<synchronous>, transform_indices = @transform_12, window_bounds = array<i64: 512, 128>}, {pipeline_mode = #tpu.pipeline_mode<synchronous>, transform_indices = @transform_13, window_bounds = array<i64: 1, 128>}, {pipeline_mode = #tpu.pipeline_mode<synchronous>, transform_indices = @transform_14, window_bounds = array<i64: 1, 128>}, {transform_indices = @transform_15, window_bounds = array<i64: 1, 5, 128>}]} {
    %c0 = arith.constant 0 : index
    %c0_0 = arith.constant 0 : index
    %c0_1 = arith.constant 0 : index
    %0 = vector.load %arg1[%c0, %c0_0, %c0_1] : memref<1x5x128xf32, #tpu.memory_space<vmem>>, vector<1x5x128xf32>
    %1 = vector.shape_cast %0 : vector<1x5x128xf32> to vector<5x128xf32>
    %cst = arith.constant dense<0.000000e+00> : vector<5xf32>
    %2 = vector.multi_reduction <add>, %1, %cst [1] : vector<5x128xf32> to vector<5xf32>
    %3 = vector.shape_cast %2 : vector<5xf32> to vector<5x1xf32>
    %cst_2 = arith.constant 1.280000e+02 : f32
    %4 = vector.broadcast %cst_2 : f32 to vector<5x1xf32>
    %5 = arith.divf %3, %4 : vector<5x1xf32>
    %6 = vector.broadcast %5 : vector<5x1xf32> to vector<5x128xf32>
    %7 = arith.subf %1, %6 : vector<5x128xf32>
    %8 = arith.mulf %7, %7 : vector<5x128xf32>
    %cst_3 = arith.constant dense<0.000000e+00> : vector<5xf32>
    %9 = vector.multi_reduction <add>, %8, %cst_3 [1] : vector<5x128xf32> to vector<5xf32>
    %10 = vector.shape_cast %9 : vector<5xf32> to vector<5x1xf32>
    %cst_4 = arith.constant 1.280000e+02 : f32
    %11 = vector.broadcast %cst_4 : f32 to vector<5x1xf32>
    %12 = arith.divf %10, %11 : vector<5x1xf32>
    %cst_5 = arith.constant 9.99999974E-6 : f32
    %13 = vector.broadcast %cst_5 : f32 to vector<5x1xf32>
    %14 = arith.addf %12, %13 : vector<5x1xf32>
    %15 = math.rsqrt %14 : vector<5x1xf32>
    %16 = vector.broadcast %15 : vector<5x1xf32> to vector<5x128xf32>
    %17 = arith.mulf %7, %16 : vector<5x128xf32>
    %c0_6 = arith.constant 0 : index
    %c0_7 = arith.constant 0 : index
    %18 = vector.load %arg2[%c0_6, %c0_7] : memref<1x128xf32, #tpu.memory_space<vmem>>, vector<1x128xf32>
    %19 = vector.broadcast %18 : vector<1x128xf32> to vector<5x128xf32>
    %20 = arith.mulf %17, %19 : vector<5x128xf32>
    %c0_8 = arith.constant 0 : index
    %c0_9 = arith.constant 0 : index
    %21 = vector.load %arg3[%c0_8, %c0_9] : memref<1x128xf32, #tpu.memory_space<vmem>>, vector<1x128xf32>
    %22 = vector.broadcast %21 : vector<1x128xf32> to vector<5x128xf32>
    %23 = arith.addf %20, %22 : vector<5x128xf32>
    %c0_10 = arith.constant 0 : index
    %c0_11 = arith.constant 0 : index
    %24 = vector.load %arg4[%c0_10, %c0_11] : memref<128x384xf32, #tpu.memory_space<vmem>>, vector<128x384xf32>
    %cst_12 = arith.constant dense<0.000000e+00> : vector<5x384xf32>
    %25 = tpu.matmul %23, %24, %cst_12 {dimension_numbers = #tpu.dot_dimension_numbers<[1], [0], [0], [1], [0, 0, 1, 1], [], []>} : vector<5x128xf32>, vector<128x384xf32>, vector<5x384xf32> -> vector<5x384xf32>
    %c0_13 = arith.constant 0 : index
    %c0_14 = arith.constant 0 : index
    %26 = vector.load %arg5[%c0_13, %c0_14] : memref<1x384xf32, #tpu.memory_space<vmem>>, vector<1x384xf32>
    %27 = vector.broadcast %26 : vector<1x384xf32> to vector<5x384xf32>
    %28 = arith.addf %25, %27 : vector<5x384xf32>
    %29 = vector.extract_strided_slice %28 {offsets = [0, 0], sizes = [5, 128], strides = [1, 1]} : vector<5x384xf32> to vector<5x128xf32>
    %30 = vector.extract_strided_slice %28 {offsets = [0, 128], sizes = [5, 128], strides = [1, 1]} : vector<5x384xf32> to vector<5x128xf32>
    %31 = vector.extract_strided_slice %28 {offsets = [0, 256], sizes = [5, 128], strides = [1, 1]} : vector<5x384xf32> to vector<5x128xf32>
    %32 = vector.extract_strided_slice %29 {offsets = [0, 0], sizes = [5, 32], strides = [1, 1]} : vector<5x128xf32> to vector<5x32xf32>
    %33 = vector.extract_strided_slice %30 {offsets = [0, 0], sizes = [5, 32], strides = [1, 1]} : vector<5x128xf32> to vector<5x32xf32>
    %34 = vector.extract_strided_slice %31 {offsets = [0, 0], sizes = [5, 32], strides = [1, 1]} : vector<5x128xf32> to vector<5x32xf32>
    %cst_15 = arith.constant dense<0.000000e+00> : vector<5x5xf32>
    %35 = tpu.matmul %32, %33, %cst_15 {dimension_numbers = #tpu.dot_dimension_numbers<[1], [1], [0], [0], [0, 0, 1, 0], [], []>} : vector<5x32xf32>, vector<5x32xf32>, vector<5x5xf32> -> vector<5x5xf32>
    %cst_16 = arith.constant 0.176776692 : f32
    %36 = vector.broadcast %cst_16 : f32 to vector<5x5xf32>
    %37 = arith.mulf %35, %36 : vector<5x5xf32>
    %cst_17 = arith.constant dense<0xFF800000> : vector<5xf32>
    %38 = vector.multi_reduction <maximumf>, %37, %cst_17 [1] : vector<5x5xf32> to vector<5xf32>
    %39 = vector.shape_cast %38 : vector<5xf32> to vector<5x1xf32>
    %40 = vector.broadcast %39 : vector<5x1xf32> to vector<5x5xf32>
    %41 = arith.subf %37, %40 : vector<5x5xf32>
    %42 = math.exp %41 : vector<5x5xf32>
    %cst_18 = arith.constant dense<0.000000e+00> : vector<5xf32>
    %43 = vector.multi_reduction <add>, %42, %cst_18 [1] : vector<5x5xf32> to vector<5xf32>
    %44 = vector.shape_cast %43 : vector<5xf32> to vector<5x1xf32>
    %45 = vector.broadcast %44 : vector<5x1xf32> to vector<5x5xf32>
    %46 = arith.divf %42, %45 : vector<5x5xf32>
    %cst_19 = arith.constant dense<0.000000e+00> : vector<5x32xf32>
    %47 = tpu.matmul %46, %34, %cst_19 {dimension_numbers = #tpu.dot_dimension_numbers<[1], [0], [0], [1], [0, 0, 1, 1], [], []>} : vector<5x5xf32>, vector<5x32xf32>, vector<5x32xf32> -> vector<5x32xf32>
    %48 = vector.extract_strided_slice %29 {offsets = [0, 32], sizes = [5, 32], strides = [1, 1]} : vector<5x128xf32> to vector<5x32xf32>
    %49 = vector.extract_strided_slice %30 {offsets = [0, 32], sizes = [5, 32], strides = [1, 1]} : vector<5x128xf32> to vector<5x32xf32>
    %50 = vector.extract_strided_slice %31 {offsets = [0, 32], sizes = [5, 32], strides = [1, 1]} : vector<5x128xf32> to vector<5x32xf32>
    %cst_20 = arith.constant dense<0.000000e+00> : vector<5x5xf32>
    %51 = tpu.matmul %48, %49, %cst_20 {dimension_numbers = #tpu.dot_dimension_numbers<[1], [1], [0], [0], [0, 0, 1, 0], [], []>} : vector<5x32xf32>, vector<5x32xf32>, vector<5x5xf32> -> vector<5x5xf32>
    %cst_21 = arith.constant 0.176776692 : f32
    %52 = vector.broadcast %cst_21 : f32 to vector<5x5xf32>
    %53 = arith.mulf %51, %52 : vector<5x5xf32>
    %cst_22 = arith.constant dense<0xFF800000> : vector<5xf32>
    %54 = vector.multi_reduction <maximumf>, %53, %cst_22 [1] : vector<5x5xf32> to vector<5xf32>
    %55 = vector.shape_cast %54 : vector<5xf32> to vector<5x1xf32>
    %56 = vector.broadcast %55 : vector<5x1xf32> to vector<5x5xf32>
    %57 = arith.subf %53, %56 : vector<5x5xf32>
    %58 = math.exp %57 : vector<5x5xf32>
    %cst_23 = arith.constant dense<0.000000e+00> : vector<5xf32>
    %59 = vector.multi_reduction <add>, %58, %cst_23 [1] : vector<5x5xf32> to vector<5xf32>
    %60 = vector.shape_cast %59 : vector<5xf32> to vector<5x1xf32>
    %61 = vector.broadcast %60 : vector<5x1xf32> to vector<5x5xf32>
    %62 = arith.divf %58, %61 : vector<5x5xf32>
    %cst_24 = arith.constant dense<0.000000e+00> : vector<5x32xf32>
    %63 = tpu.matmul %62, %50, %cst_24 {dimension_numbers = #tpu.dot_dimension_numbers<[1], [0], [0], [1], [0, 0, 1, 1], [], []>} : vector<5x5xf32>, vector<5x32xf32>, vector<5x32xf32> -> vector<5x32xf32>
    %64 = vector.extract_strided_slice %29 {offsets = [0, 64], sizes = [5, 32], strides = [1, 1]} : vector<5x128xf32> to vector<5x32xf32>
    %65 = vector.extract_strided_slice %30 {offsets = [0, 64], sizes = [5, 32], strides = [1, 1]} : vector<5x128xf32> to vector<5x32xf32>
    %66 = vector.extract_strided_slice %31 {offsets = [0, 64], sizes = [5, 32], strides = [1, 1]} : vector<5x128xf32> to vector<5x32xf32>
    %cst_25 = arith.constant dense<0.000000e+00> : vector<5x5xf32>
    %67 = tpu.matmul %64, %65, %cst_25 {dimension_numbers = #tpu.dot_dimension_numbers<[1], [1], [0], [0], [0, 0, 1, 0], [], []>} : vector<5x32xf32>, vector<5x32xf32>, vector<5x5xf32> -> vector<5x5xf32>
    %cst_26 = arith.constant 0.176776692 : f32
    %68 = vector.broadcast %cst_26 : f32 to vector<5x5xf32>
    %69 = arith.mulf %67, %68 : vector<5x5xf32>
    %cst_27 = arith.constant dense<0xFF800000> : vector<5xf32>
    %70 = vector.multi_reduction <maximumf>, %69, %cst_27 [1] : vector<5x5xf32> to vector<5xf32>
    %71 = vector.shape_cast %70 : vector<5xf32> to vector<5x1xf32>
    %72 = vector.broadcast %71 : vector<5x1xf32> to vector<5x5xf32>
    %73 = arith.subf %69, %72 : vector<5x5xf32>
    %74 = math.exp %73 : vector<5x5xf32>
    %cst_28 = arith.constant dense<0.000000e+00> : vector<5xf32>
    %75 = vector.multi_reduction <add>, %74, %cst_28 [1] : vector<5x5xf32> to vector<5xf32>
    %76 = vector.shape_cast %75 : vector<5xf32> to vector<5x1xf32>
    %77 = vector.broadcast %76 : vector<5x1xf32> to vector<5x5xf32>
    %78 = arith.divf %74, %77 : vector<5x5xf32>
    %cst_29 = arith.constant dense<0.000000e+00> : vector<5x32xf32>
    %79 = tpu.matmul %78, %66, %cst_29 {dimension_numbers = #tpu.dot_dimension_numbers<[1], [0], [0], [1], [0, 0, 1, 1], [], []>} : vector<5x5xf32>, vector<5x32xf32>, vector<5x32xf32> -> vector<5x32xf32>
    %80 = vector.extract_strided_slice %29 {offsets = [0, 96], sizes = [5, 32], strides = [1, 1]} : vector<5x128xf32> to vector<5x32xf32>
    %81 = vector.extract_strided_slice %30 {offsets = [0, 96], sizes = [5, 32], strides = [1, 1]} : vector<5x128xf32> to vector<5x32xf32>
    %82 = vector.extract_strided_slice %31 {offsets = [0, 96], sizes = [5, 32], strides = [1, 1]} : vector<5x128xf32> to vector<5x32xf32>
    %cst_30 = arith.constant dense<0.000000e+00> : vector<5x5xf32>
    %83 = tpu.matmul %80, %81, %cst_30 {dimension_numbers = #tpu.dot_dimension_numbers<[1], [1], [0], [0], [0, 0, 1, 0], [], []>} : vector<5x32xf32>, vector<5x32xf32>, vector<5x5xf32> -> vector<5x5xf32>
    %cst_31 = arith.constant 0.176776692 : f32
    %84 = vector.broadcast %cst_31 : f32 to vector<5x5xf32>
    %85 = arith.mulf %83, %84 : vector<5x5xf32>
    %cst_32 = arith.constant dense<0xFF800000> : vector<5xf32>
    %86 = vector.multi_reduction <maximumf>, %85, %cst_32 [1] : vector<5x5xf32> to vector<5xf32>
    %87 = vector.shape_cast %86 : vector<5xf32> to vector<5x1xf32>
    %88 = vector.broadcast %87 : vector<5x1xf32> to vector<5x5xf32>
    %89 = arith.subf %85, %88 : vector<5x5xf32>
    %90 = math.exp %89 : vector<5x5xf32>
    %cst_33 = arith.constant dense<0.000000e+00> : vector<5xf32>
    %91 = vector.multi_reduction <add>, %90, %cst_33 [1] : vector<5x5xf32> to vector<5xf32>
    %92 = vector.shape_cast %91 : vector<5xf32> to vector<5x1xf32>
    %93 = vector.broadcast %92 : vector<5x1xf32> to vector<5x5xf32>
    %94 = arith.divf %90, %93 : vector<5x5xf32>
    %cst_34 = arith.constant dense<0.000000e+00> : vector<5x32xf32>
    %95 = tpu.matmul %94, %82, %cst_34 {dimension_numbers = #tpu.dot_dimension_numbers<[1], [0], [0], [1], [0, 0, 1, 1], [], []>} : vector<5x5xf32>, vector<5x32xf32>, vector<5x32xf32> -> vector<5x32xf32>
    %96 = tpu.concatenate %47, %63, %79, %95 in 1 : vector<5x32xf32>, vector<5x32xf32>, vector<5x32xf32>, vector<5x32xf32> -> vector<5x128xf32>
    %c0_35 = arith.constant 0 : index
    %c0_36 = arith.constant 0 : index
    %97 = vector.load %arg6[%c0_35, %c0_36] : memref<128x128xf32, #tpu.memory_space<vmem>>, vector<128x128xf32>
    %cst_37 = arith.constant dense<0.000000e+00> : vector<5x128xf32>
    %98 = tpu.matmul %96, %97, %cst_37 {dimension_numbers = #tpu.dot_dimension_numbers<[1], [0], [0], [1], [0, 0, 1, 1], [], []>} : vector<5x128xf32>, vector<128x128xf32>, vector<5x128xf32> -> vector<5x128xf32>
    %c0_38 = arith.constant 0 : index
    %c0_39 = arith.constant 0 : index
    %99 = vector.load %arg7[%c0_38, %c0_39] : memref<1x128xf32, #tpu.memory_space<vmem>>, vector<1x128xf32>
    %100 = vector.broadcast %99 : vector<1x128xf32> to vector<5x128xf32>
    %101 = arith.addf %98, %100 : vector<5x128xf32>
    %c0_40 = arith.constant 0 : index
    %c0_41 = arith.constant 0 : index
    %102 = vector.load %arg8[%c0_40, %c0_41] : memref<1x128xf32, #tpu.memory_space<vmem>>, vector<1x128xf32>
    %103 = vector.broadcast %102 : vector<1x128xf32> to vector<5x128xf32>
    %104 = arith.mulf %103, %101 : vector<5x128xf32>
    %105 = arith.addf %1, %104 : vector<5x128xf32>
    %cst_42 = arith.constant dense<0.000000e+00> : vector<5xf32>
    %106 = vector.multi_reduction <add>, %105, %cst_42 [1] : vector<5x128xf32> to vector<5xf32>
    %107 = vector.shape_cast %106 : vector<5xf32> to vector<5x1xf32>
    %cst_43 = arith.constant 1.280000e+02 : f32
    %108 = vector.broadcast %cst_43 : f32 to vector<5x1xf32>
    %109 = arith.divf %107, %108 : vector<5x1xf32>
    %110 = vector.broadcast %109 : vector<5x1xf32> to vector<5x128xf32>
    %111 = arith.subf %105, %110 : vector<5x128xf32>
    %112 = arith.mulf %111, %111 : vector<5x128xf32>
    %cst_44 = arith.constant dense<0.000000e+00> : vector<5xf32>
    %113 = vector.multi_reduction <add>, %112, %cst_44 [1] : vector<5x128xf32> to vector<5xf32>
    %114 = vector.shape_cast %113 : vector<5xf32> to vector<5x1xf32>
    %cst_45 = arith.constant 1.280000e+02 : f32
    %115 = vector.broadcast %cst_45 : f32 to vector<5x1xf32>
    %116 = arith.divf %114, %115 : vector<5x1xf32>
    %cst_46 = arith.constant 9.99999974E-6 : f32
    %117 = vector.broadcast %cst_46 : f32 to vector<5x1xf32>
    %118 = arith.addf %116, %117 : vector<5x1xf32>
    %119 = math.rsqrt %118 : vector<5x1xf32>
    %120 = vector.broadcast %119 : vector<5x1xf32> to vector<5x128xf32>
    %121 = arith.mulf %111, %120 : vector<5x128xf32>
    %c0_47 = arith.constant 0 : index
    %c0_48 = arith.constant 0 : index
    %122 = vector.load %arg9[%c0_47, %c0_48] : memref<1x128xf32, #tpu.memory_space<vmem>>, vector<1x128xf32>
    %123 = vector.broadcast %122 : vector<1x128xf32> to vector<5x128xf32>
    %124 = arith.mulf %121, %123 : vector<5x128xf32>
    %c0_49 = arith.constant 0 : index
    %c0_50 = arith.constant 0 : index
    %125 = vector.load %arg10[%c0_49, %c0_50] : memref<1x128xf32, #tpu.memory_space<vmem>>, vector<1x128xf32>
    %126 = vector.broadcast %125 : vector<1x128xf32> to vector<5x128xf32>
    %127 = arith.addf %124, %126 : vector<5x128xf32>
    %c0_51 = arith.constant 0 : index
    %c0_52 = arith.constant 0 : index
    %128 = vector.load %arg11[%c0_51, %c0_52] : memref<128x512xf32, #tpu.memory_space<vmem>>, vector<128x512xf32>
    %cst_53 = arith.constant dense<0.000000e+00> : vector<5x512xf32>
    %129 = tpu.matmul %127, %128, %cst_53 {dimension_numbers = #tpu.dot_dimension_numbers<[1], [0], [0], [1], [0, 0, 1, 1], [], []>} : vector<5x128xf32>, vector<128x512xf32>, vector<5x512xf32> -> vector<5x512xf32>
    %c0_54 = arith.constant 0 : index
    %c0_55 = arith.constant 0 : index
    %130 = vector.load %arg12[%c0_54, %c0_55] : memref<1x512xf32, #tpu.memory_space<vmem>>, vector<1x512xf32>
    %131 = vector.broadcast %130 : vector<1x512xf32> to vector<5x512xf32>
    %132 = arith.addf %129, %131 : vector<5x512xf32>
    %133 = arith.mulf %132, %132 : vector<5x512xf32>
    %134 = arith.mulf %132, %133 : vector<5x512xf32>
    %cst_56 = arith.constant 4.471500e-02 : f32
    %135 = vector.broadcast %cst_56 : f32 to vector<5x512xf32>
    %136 = arith.mulf %135, %134 : vector<5x512xf32>
    %137 = arith.addf %132, %136 : vector<5x512xf32>
    %cst_57 = arith.constant 0.797884583 : f32
    %138 = vector.broadcast %cst_57 : f32 to vector<5x512xf32>
    %139 = arith.mulf %138, %137 : vector<5x512xf32>
    %140 = math.tanh %139 : vector<5x512xf32>
    %cst_58 = arith.constant 1.000000e+00 : f32
    %141 = vector.broadcast %cst_58 : f32 to vector<5x512xf32>
    %142 = arith.addf %141, %140 : vector<5x512xf32>
    %cst_59 = arith.constant 5.000000e-01 : f32
    %143 = vector.broadcast %cst_59 : f32 to vector<5x512xf32>
    %144 = arith.mulf %143, %142 : vector<5x512xf32>
    %145 = arith.mulf %132, %144 : vector<5x512xf32>
    %c0_60 = arith.constant 0 : index
    %c0_61 = arith.constant 0 : index
    %146 = vector.load %arg13[%c0_60, %c0_61] : memref<512x128xf32, #tpu.memory_space<vmem>>, vector<512x128xf32>
    %cst_62 = arith.constant dense<0.000000e+00> : vector<5x128xf32>
    %147 = tpu.matmul %145, %146, %cst_62 {dimension_numbers = #tpu.dot_dimension_numbers<[1], [0], [0], [1], [0, 0, 1, 1], [], []>} : vector<5x512xf32>, vector<512x128xf32>, vector<5x128xf32> -> vector<5x128xf32>
    %c0_63 = arith.constant 0 : index
    %c0_64 = arith.constant 0 : index
    %148 = vector.load %arg14[%c0_63, %c0_64] : memref<1x128xf32, #tpu.memory_space<vmem>>, vector<1x128xf32>
    %149 = vector.broadcast %148 : vector<1x128xf32> to vector<5x128xf32>
    %150 = arith.addf %147, %149 : vector<5x128xf32>
    %c0_65 = arith.constant 0 : index
    %c0_66 = arith.constant 0 : index
    %151 = vector.load %arg15[%c0_65, %c0_66] : memref<1x128xf32, #tpu.memory_space<vmem>>, vector<1x128xf32>
    %152 = vector.broadcast %151 : vector<1x128xf32> to vector<5x128xf32>
    %153 = arith.mulf %152, %150 : vector<5x128xf32>
    %154 = arith.addf %105, %153 : vector<5x128xf32>
    %c0_67 = arith.constant 0 : index
    %c0_68 = arith.constant 0 : index
    %c0_69 = arith.constant 0 : index
    %155 = vector.load %arg16[%c0_67, %c0_68, %c0_69] : memref<1x5x128xf32, #tpu.memory_space<vmem>>, vector<1x5x128xf32>
    %156 = vector.shape_cast %155 : vector<1x5x128xf32> to vector<5x128xf32>
    %157 = vector.shape_cast %154 : vector<5x128xf32> to vector<1x5x128xf32>
    tpu.vector_store %arg16[%c0_67, %c0_68, %c0_69], %157 {strides = array<i32>} : memref<1x5x128xf32, #tpu.memory_space<vmem>>, vector<1x5x128xf32>,
    return
  }
  func.func @transform_0(%arg0: i32) -> (i32, i32, i32) {
    %c0_i32 = arith.constant 0 : i32
    %c0_i32_0 = arith.constant 0 : i32
    %c0_i32_1 = arith.constant 0 : i32
    return %arg0, %c0_i32, %c0_i32_0 : i32, i32, i32
  }
  func.func @transform_1(%arg0: i32) -> (i32, i32) {
    %c0_i32 = arith.constant 0 : i32
    %c0_i32_0 = arith.constant 0 : i32
    %c0_i32_1 = arith.constant 0 : i32
    return %c0_i32, %c0_i32_0 : i32, i32
  }
  func.func @transform_2(%arg0: i32) -> (i32, i32) {
    %c0_i32 = arith.constant 0 : i32
    %c0_i32_0 = arith.constant 0 : i32
    %c0_i32_1 = arith.constant 0 : i32
    return %c0_i32, %c0_i32_0 : i32, i32
  }
  func.func @transform_3(%arg0: i32) -> (i32, i32) {
    %c0_i32 = arith.constant 0 : i32
    %c0_i32_0 = arith.constant 0 : i32
    %c0_i32_1 = arith.constant 0 : i32
    return %c0_i32, %c0_i32_0 : i32, i32
  }
  func.func @transform_4(%arg0: i32) -> (i32, i32) {
    %c0_i32 = arith.constant 0 : i32
    %c0_i32_0 = arith.constant 0 : i32
    %c0_i32_1 = arith.constant 0 : i32
    return %c0_i32, %c0_i32_0 : i32, i32
  }
  func.func @transform_5(%arg0: i32) -> (i32, i32) {
    %c0_i32 = arith.constant 0 : i32
    %c0_i32_0 = arith.constant 0 : i32
    %c0_i32_1 = arith.constant 0 : i32
    return %c0_i32, %c0_i32_0 : i32, i32
  }
  func.func @transform_6(%arg0: i32) -> (i32, i32) {
    %c0_i32 = arith.constant 0 : i32
    %c0_i32_0 = arith.constant 0 : i32
    %c0_i32_1 = arith.constant 0 : i32
    return %c0_i32, %c0_i32_0 : i32, i32
  }
  func.func @transform_7(%arg0: i32) -> (i32, i32) {
    %c0_i32 = arith.constant 0 : i32
    %c0_i32_0 = arith.constant 0 : i32
    %c0_i32_1 = arith.constant 0 : i32
    return %c0_i32, %c0_i32_0 : i32, i32
  }
  func.func @transform_8(%arg0: i32) -> (i32, i32) {
    %c0_i32 = arith.constant 0 : i32
    %c0_i32_0 = arith.constant 0 : i32
    %c0_i32_1 = arith.constant 0 : i32
    return %c0_i32, %c0_i32_0 : i32, i32
  }
  func.func @transform_9(%arg0: i32) -> (i32, i32) {
    %c0_i32 = arith.constant 0 : i32
    %c0_i32_0 = arith.constant 0 : i32
    %c0_i32_1 = arith.constant 0 : i32
    return %c0_i32, %c0_i32_0 : i32, i32
  }
  func.func @transform_10(%arg0: i32) -> (i32, i32) {
    %c0_i32 = arith.constant 0 : i32
    %c0_i32_0 = arith.constant 0 : i32
    %c0_i32_1 = arith.constant 0 : i32
    return %c0_i32, %c0_i32_0 : i32, i32
  }
  func.func @transform_11(%arg0: i32) -> (i32, i32) {
    %c0_i32 = arith.constant 0 : i32
    %c0_i32_0 = arith.constant 0 : i32
    %c0_i32_1 = arith.constant 0 : i32
    return %c0_i32, %c0_i32_0 : i32, i32
  }
  func.func @transform_12(%arg0: i32) -> (i32, i32) {
    %c0_i32 = arith.constant 0 : i32
    %c0_i32_0 = arith.constant 0 : i32
    %c0_i32_1 = arith.constant 0 : i32
    return %c0_i32, %c0_i32_0 : i32, i32
  }
  func.func @transform_13(%arg0: i32) -> (i32, i32) {
    %c0_i32 = arith.constant 0 : i32
    %c0_i32_0 = arith.constant 0 : i32
    %c0_i32_1 = arith.constant 0 : i32
    return %c0_i32, %c0_i32_0 : i32, i32
  }
  func.func @transform_14(%arg0: i32) -> (i32, i32) {
    %c0_i32 = arith.constant 0 : i32
    %c0_i32_0 = arith.constant 0 : i32
    %c0_i32_1 = arith.constant 0 : i32
    return %c0_i32, %c0_i32_0 : i32, i32
  }
  func.func @transform_15(%arg0: i32) -> (i32, i32, i32) {
    %c0_i32 = arith.constant 0 : i32
    %c0_i32_0 = arith.constant 0 : i32
    %c0_i32_1 = arith.constant 0 : i32
    return %arg0, %c0_i32, %c0_i32_0 : i32, i32, i32
  }
}

module attributes {stable_mosaic.version = 11 : i64} {
  func.func @_decoder_layer_kernel(%arg0: i32, %arg1: memref<1x1x128xf32, #tpu.memory_space<vmem>>, %arg2: memref<1x4x128xf32, #tpu.memory_space<vmem>>, %arg3: memref<1x128xf32, #tpu.memory_space<vmem>>, %arg4: memref<1x128xf32, #tpu.memory_space<vmem>>, %arg5: memref<128x384xf32, #tpu.memory_space<vmem>>, %arg6: memref<1x384xf32, #tpu.memory_space<vmem>>, %arg7: memref<128x128xf32, #tpu.memory_space<vmem>>, %arg8: memref<1x128xf32, #tpu.memory_space<vmem>>, %arg9: memref<1x128xf32, #tpu.memory_space<vmem>>, %arg10: memref<1x128xf32, #tpu.memory_space<vmem>>, %arg11: memref<128x128xf32, #tpu.memory_space<vmem>>, %arg12: memref<1x128xf32, #tpu.memory_space<vmem>>, %arg13: memref<1x128xf32, #tpu.memory_space<vmem>>, %arg14: memref<1x128xf32, #tpu.memory_space<vmem>>, %arg15: memref<128x512xf32, #tpu.memory_space<vmem>>, %arg16: memref<1x512xf32, #tpu.memory_space<vmem>>, %arg17: memref<512x128xf32, #tpu.memory_space<vmem>>, %arg18: memref<1x128xf32, #tpu.memory_space<vmem>>, %arg19: memref<1x1x128xf32, #tpu.memory_space<vmem>>) attributes {dimension_semantics = [#tpu.dimension_semantics<parallel>], iteration_bounds = array<i64: 2>, scalar_prefetch = 0 : i64, scratch_operands = 0 : i64, tpu.core_type = #tpu.core_type<tc>, window_params = [{transform_indices = @transform_0, window_bounds = array<i64: 1, 1, 128>}, {transform_indices = @transform_1, window_bounds = array<i64: 1, 4, 128>}, {pipeline_mode = #tpu.pipeline_mode<synchronous>, transform_indices = @transform_2, window_bounds = array<i64: 1, 128>}, {pipeline_mode = #tpu.pipeline_mode<synchronous>, transform_indices = @transform_3, window_bounds = array<i64: 1, 128>}, {pipeline_mode = #tpu.pipeline_mode<synchronous>, transform_indices = @transform_4, window_bounds = array<i64: 128, 384>}, {pipeline_mode = #tpu.pipeline_mode<synchronous>, transform_indices = @transform_5, window_bounds = array<i64: 1, 384>}, {pipeline_mode = #tpu.pipeline_mode<synchronous>, transform_indices = @transform_6, window_bounds = array<i64: 128, 128>}, {pipeline_mode = #tpu.pipeline_mode<synchronous>, transform_indices = @transform_7, window_bounds = array<i64: 1, 128>}, {pipeline_mode = #tpu.pipeline_mode<synchronous>, transform_indices = @transform_8, window_bounds = array<i64: 1, 128>}, {pipeline_mode = #tpu.pipeline_mode<synchronous>, transform_indices = @transform_9, window_bounds = array<i64: 1, 128>}, {pipeline_mode = #tpu.pipeline_mode<synchronous>, transform_indices = @transform_10, window_bounds = array<i64: 128, 128>}, {pipeline_mode = #tpu.pipeline_mode<synchronous>, transform_indices = @transform_11, window_bounds = array<i64: 1, 128>}, {pipeline_mode = #tpu.pipeline_mode<synchronous>, transform_indices = @transform_12, window_bounds = array<i64: 1, 128>}, {pipeline_mode = #tpu.pipeline_mode<synchronous>, transform_indices = @transform_13, window_bounds = array<i64: 1, 128>}, {pipeline_mode = #tpu.pipeline_mode<synchronous>, transform_indices = @transform_14, window_bounds = array<i64: 128, 512>}, {pipeline_mode = #tpu.pipeline_mode<synchronous>, transform_indices = @transform_15, window_bounds = array<i64: 1, 512>}, {pipeline_mode = #tpu.pipeline_mode<synchronous>, transform_indices = @transform_16, window_bounds = array<i64: 512, 128>}, {pipeline_mode = #tpu.pipeline_mode<synchronous>, transform_indices = @transform_17, window_bounds = array<i64: 1, 128>}, {transform_indices = @transform_18, window_bounds = array<i64: 1, 1, 128>}]} {
    %c0 = arith.constant 0 : index
    %c0_0 = arith.constant 0 : index
    %c0_1 = arith.constant 0 : index
    %0 = vector.load %arg1[%c0, %c0_0, %c0_1] : memref<1x1x128xf32, #tpu.memory_space<vmem>>, vector<1x1x128xf32>
    %1 = vector.shape_cast %0 : vector<1x1x128xf32> to vector<1x128xf32>
    %c0_2 = arith.constant 0 : index
    %c0_3 = arith.constant 0 : index
    %c0_4 = arith.constant 0 : index
    %2 = vector.load %arg2[%c0_2, %c0_3, %c0_4] : memref<1x4x128xf32, #tpu.memory_space<vmem>>, vector<1x4x128xf32>
    %3 = vector.shape_cast %2 : vector<1x4x128xf32> to vector<4x128xf32>
    %cst = arith.constant dense<0.000000e+00> : vector<1xf32>
    %4 = vector.multi_reduction <add>, %1, %cst [1] : vector<1x128xf32> to vector<1xf32>
    %5 = vector.shape_cast %4 : vector<1xf32> to vector<1x1xf32>
    %cst_5 = arith.constant 1.280000e+02 : f32
    %6 = vector.broadcast %cst_5 : f32 to vector<1x1xf32>
    %7 = arith.divf %5, %6 : vector<1x1xf32>
    %8 = vector.broadcast %7 : vector<1x1xf32> to vector<1x128xf32>
    %9 = arith.subf %1, %8 : vector<1x128xf32>
    %10 = arith.mulf %9, %9 : vector<1x128xf32>
    %cst_6 = arith.constant dense<0.000000e+00> : vector<1xf32>
    %11 = vector.multi_reduction <add>, %10, %cst_6 [1] : vector<1x128xf32> to vector<1xf32>
    %12 = vector.shape_cast %11 : vector<1xf32> to vector<1x1xf32>
    %cst_7 = arith.constant 1.280000e+02 : f32
    %13 = vector.broadcast %cst_7 : f32 to vector<1x1xf32>
    %14 = arith.divf %12, %13 : vector<1x1xf32>
    %cst_8 = arith.constant 9.99999974E-6 : f32
    %15 = vector.broadcast %cst_8 : f32 to vector<1x1xf32>
    %16 = arith.addf %14, %15 : vector<1x1xf32>
    %17 = math.rsqrt %16 : vector<1x1xf32>
    %18 = vector.broadcast %17 : vector<1x1xf32> to vector<1x128xf32>
    %19 = arith.mulf %9, %18 : vector<1x128xf32>
    %c0_9 = arith.constant 0 : index
    %c0_10 = arith.constant 0 : index
    %20 = vector.load %arg3[%c0_9, %c0_10] : memref<1x128xf32, #tpu.memory_space<vmem>>, vector<1x128xf32>
    %21 = arith.mulf %19, %20 : vector<1x128xf32>
    %c0_11 = arith.constant 0 : index
    %c0_12 = arith.constant 0 : index
    %22 = vector.load %arg4[%c0_11, %c0_12] : memref<1x128xf32, #tpu.memory_space<vmem>>, vector<1x128xf32>
    %23 = arith.addf %21, %22 : vector<1x128xf32>
    %c0_13 = arith.constant 0 : index
    %c0_14 = arith.constant 0 : index
    %24 = vector.load %arg5[%c0_13, %c0_14] : memref<128x384xf32, #tpu.memory_space<vmem>>, vector<128x384xf32>
    %cst_15 = arith.constant dense<0.000000e+00> : vector<1x384xf32>
    %25 = tpu.matmul %23, %24, %cst_15 {dimension_numbers = #tpu.dot_dimension_numbers<[1], [0], [0], [1], [0, 0, 1, 1], [], []>} : vector<1x128xf32>, vector<128x384xf32>, vector<1x384xf32> -> vector<1x384xf32>
    %c0_16 = arith.constant 0 : index
    %c0_17 = arith.constant 0 : index
    %26 = vector.load %arg6[%c0_16, %c0_17] : memref<1x384xf32, #tpu.memory_space<vmem>>, vector<1x384xf32>
    %27 = arith.addf %25, %26 : vector<1x384xf32>
    %28 = vector.extract_strided_slice %27 {offsets = [0, 256], sizes = [1, 128], strides = [1, 1]} : vector<1x384xf32> to vector<1x128xf32>
    %c0_18 = arith.constant 0 : index
    %c0_19 = arith.constant 0 : index
    %29 = vector.load %arg7[%c0_18, %c0_19] : memref<128x128xf32, #tpu.memory_space<vmem>>, vector<128x128xf32>
    %cst_20 = arith.constant dense<0.000000e+00> : vector<1x128xf32>
    %30 = tpu.matmul %28, %29, %cst_20 {dimension_numbers = #tpu.dot_dimension_numbers<[1], [0], [0], [1], [0, 0, 1, 1], [], []>} : vector<1x128xf32>, vector<128x128xf32>, vector<1x128xf32> -> vector<1x128xf32>
    %c0_21 = arith.constant 0 : index
    %c0_22 = arith.constant 0 : index
    %31 = vector.load %arg8[%c0_21, %c0_22] : memref<1x128xf32, #tpu.memory_space<vmem>>, vector<1x128xf32>
    %32 = arith.addf %30, %31 : vector<1x128xf32>
    %33 = arith.addf %1, %32 : vector<1x128xf32>
    %cst_23 = arith.constant dense<0.000000e+00> : vector<1xf32>
    %34 = vector.multi_reduction <add>, %33, %cst_23 [1] : vector<1x128xf32> to vector<1xf32>
    %35 = vector.shape_cast %34 : vector<1xf32> to vector<1x1xf32>
    %cst_24 = arith.constant 1.280000e+02 : f32
    %36 = vector.broadcast %cst_24 : f32 to vector<1x1xf32>
    %37 = arith.divf %35, %36 : vector<1x1xf32>
    %38 = vector.broadcast %37 : vector<1x1xf32> to vector<1x128xf32>
    %39 = arith.subf %33, %38 : vector<1x128xf32>
    %40 = arith.mulf %39, %39 : vector<1x128xf32>
    %cst_25 = arith.constant dense<0.000000e+00> : vector<1xf32>
    %41 = vector.multi_reduction <add>, %40, %cst_25 [1] : vector<1x128xf32> to vector<1xf32>
    %42 = vector.shape_cast %41 : vector<1xf32> to vector<1x1xf32>
    %cst_26 = arith.constant 1.280000e+02 : f32
    %43 = vector.broadcast %cst_26 : f32 to vector<1x1xf32>
    %44 = arith.divf %42, %43 : vector<1x1xf32>
    %cst_27 = arith.constant 9.99999974E-6 : f32
    %45 = vector.broadcast %cst_27 : f32 to vector<1x1xf32>
    %46 = arith.addf %44, %45 : vector<1x1xf32>
    %47 = math.rsqrt %46 : vector<1x1xf32>
    %48 = vector.broadcast %47 : vector<1x1xf32> to vector<1x128xf32>
    %49 = arith.mulf %39, %48 : vector<1x128xf32>
    %c0_28 = arith.constant 0 : index
    %c0_29 = arith.constant 0 : index
    %50 = vector.load %arg9[%c0_28, %c0_29] : memref<1x128xf32, #tpu.memory_space<vmem>>, vector<1x128xf32>
    %51 = arith.mulf %49, %50 : vector<1x128xf32>
    %c0_30 = arith.constant 0 : index
    %c0_31 = arith.constant 0 : index
    %52 = vector.load %arg10[%c0_30, %c0_31] : memref<1x128xf32, #tpu.memory_space<vmem>>, vector<1x128xf32>
    %53 = arith.addf %51, %52 : vector<1x128xf32>
    %54 = vector.extract_strided_slice %53 {offsets = [0, 0], sizes = [1, 32], strides = [1, 1]} : vector<1x128xf32> to vector<1x32xf32>
    %55 = vector.extract_strided_slice %3 {offsets = [0, 0], sizes = [4, 32], strides = [1, 1]} : vector<4x128xf32> to vector<4x32xf32>
    %56 = vector.extract_strided_slice %3 {offsets = [0, 0], sizes = [4, 32], strides = [1, 1]} : vector<4x128xf32> to vector<4x32xf32>
    %cst_32 = arith.constant dense<0.000000e+00> : vector<1x4xf32>
    %57 = tpu.matmul %54, %55, %cst_32 {dimension_numbers = #tpu.dot_dimension_numbers<[1], [1], [0], [0], [0, 0, 1, 0], [], []>} : vector<1x32xf32>, vector<4x32xf32>, vector<1x4xf32> -> vector<1x4xf32>
    %cst_33 = arith.constant 0.176776692 : f32
    %58 = vector.broadcast %cst_33 : f32 to vector<1x4xf32>
    %59 = arith.mulf %57, %58 : vector<1x4xf32>
    %cst_34 = arith.constant dense<0xFF800000> : vector<1xf32>
    %60 = vector.multi_reduction <maximumf>, %59, %cst_34 [1] : vector<1x4xf32> to vector<1xf32>
    %61 = vector.shape_cast %60 : vector<1xf32> to vector<1x1xf32>
    %62 = vector.broadcast %61 : vector<1x1xf32> to vector<1x4xf32>
    %63 = arith.subf %59, %62 : vector<1x4xf32>
    %64 = math.exp %63 : vector<1x4xf32>
    %cst_35 = arith.constant dense<0.000000e+00> : vector<1xf32>
    %65 = vector.multi_reduction <add>, %64, %cst_35 [1] : vector<1x4xf32> to vector<1xf32>
    %66 = vector.shape_cast %65 : vector<1xf32> to vector<1x1xf32>
    %67 = vector.broadcast %66 : vector<1x1xf32> to vector<1x4xf32>
    %68 = arith.divf %64, %67 : vector<1x4xf32>
    %cst_36 = arith.constant dense<0.000000e+00> : vector<1x32xf32>
    %69 = tpu.matmul %68, %56, %cst_36 {dimension_numbers = #tpu.dot_dimension_numbers<[1], [0], [0], [1], [0, 0, 1, 1], [], []>} : vector<1x4xf32>, vector<4x32xf32>, vector<1x32xf32> -> vector<1x32xf32>
    %70 = vector.extract_strided_slice %53 {offsets = [0, 32], sizes = [1, 32], strides = [1, 1]} : vector<1x128xf32> to vector<1x32xf32>
    %71 = vector.extract_strided_slice %3 {offsets = [0, 32], sizes = [4, 32], strides = [1, 1]} : vector<4x128xf32> to vector<4x32xf32>
    %72 = vector.extract_strided_slice %3 {offsets = [0, 32], sizes = [4, 32], strides = [1, 1]} : vector<4x128xf32> to vector<4x32xf32>
    %cst_37 = arith.constant dense<0.000000e+00> : vector<1x4xf32>
    %73 = tpu.matmul %70, %71, %cst_37 {dimension_numbers = #tpu.dot_dimension_numbers<[1], [1], [0], [0], [0, 0, 1, 0], [], []>} : vector<1x32xf32>, vector<4x32xf32>, vector<1x4xf32> -> vector<1x4xf32>
    %cst_38 = arith.constant 0.176776692 : f32
    %74 = vector.broadcast %cst_38 : f32 to vector<1x4xf32>
    %75 = arith.mulf %73, %74 : vector<1x4xf32>
    %cst_39 = arith.constant dense<0xFF800000> : vector<1xf32>
    %76 = vector.multi_reduction <maximumf>, %75, %cst_39 [1] : vector<1x4xf32> to vector<1xf32>
    %77 = vector.shape_cast %76 : vector<1xf32> to vector<1x1xf32>
    %78 = vector.broadcast %77 : vector<1x1xf32> to vector<1x4xf32>
    %79 = arith.subf %75, %78 : vector<1x4xf32>
    %80 = math.exp %79 : vector<1x4xf32>
    %cst_40 = arith.constant dense<0.000000e+00> : vector<1xf32>
    %81 = vector.multi_reduction <add>, %80, %cst_40 [1] : vector<1x4xf32> to vector<1xf32>
    %82 = vector.shape_cast %81 : vector<1xf32> to vector<1x1xf32>
    %83 = vector.broadcast %82 : vector<1x1xf32> to vector<1x4xf32>
    %84 = arith.divf %80, %83 : vector<1x4xf32>
    %cst_41 = arith.constant dense<0.000000e+00> : vector<1x32xf32>
    %85 = tpu.matmul %84, %72, %cst_41 {dimension_numbers = #tpu.dot_dimension_numbers<[1], [0], [0], [1], [0, 0, 1, 1], [], []>} : vector<1x4xf32>, vector<4x32xf32>, vector<1x32xf32> -> vector<1x32xf32>
    %86 = vector.extract_strided_slice %53 {offsets = [0, 64], sizes = [1, 32], strides = [1, 1]} : vector<1x128xf32> to vector<1x32xf32>
    %87 = vector.extract_strided_slice %3 {offsets = [0, 64], sizes = [4, 32], strides = [1, 1]} : vector<4x128xf32> to vector<4x32xf32>
    %88 = vector.extract_strided_slice %3 {offsets = [0, 64], sizes = [4, 32], strides = [1, 1]} : vector<4x128xf32> to vector<4x32xf32>
    %cst_42 = arith.constant dense<0.000000e+00> : vector<1x4xf32>
    %89 = tpu.matmul %86, %87, %cst_42 {dimension_numbers = #tpu.dot_dimension_numbers<[1], [1], [0], [0], [0, 0, 1, 0], [], []>} : vector<1x32xf32>, vector<4x32xf32>, vector<1x4xf32> -> vector<1x4xf32>
    %cst_43 = arith.constant 0.176776692 : f32
    %90 = vector.broadcast %cst_43 : f32 to vector<1x4xf32>
    %91 = arith.mulf %89, %90 : vector<1x4xf32>
    %cst_44 = arith.constant dense<0xFF800000> : vector<1xf32>
    %92 = vector.multi_reduction <maximumf>, %91, %cst_44 [1] : vector<1x4xf32> to vector<1xf32>
    %93 = vector.shape_cast %92 : vector<1xf32> to vector<1x1xf32>
    %94 = vector.broadcast %93 : vector<1x1xf32> to vector<1x4xf32>
    %95 = arith.subf %91, %94 : vector<1x4xf32>
    %96 = math.exp %95 : vector<1x4xf32>
    %cst_45 = arith.constant dense<0.000000e+00> : vector<1xf32>
    %97 = vector.multi_reduction <add>, %96, %cst_45 [1] : vector<1x4xf32> to vector<1xf32>
    %98 = vector.shape_cast %97 : vector<1xf32> to vector<1x1xf32>
    %99 = vector.broadcast %98 : vector<1x1xf32> to vector<1x4xf32>
    %100 = arith.divf %96, %99 : vector<1x4xf32>
    %cst_46 = arith.constant dense<0.000000e+00> : vector<1x32xf32>
    %101 = tpu.matmul %100, %88, %cst_46 {dimension_numbers = #tpu.dot_dimension_numbers<[1], [0], [0], [1], [0, 0, 1, 1], [], []>} : vector<1x4xf32>, vector<4x32xf32>, vector<1x32xf32> -> vector<1x32xf32>
    %102 = vector.extract_strided_slice %53 {offsets = [0, 96], sizes = [1, 32], strides = [1, 1]} : vector<1x128xf32> to vector<1x32xf32>
    %103 = vector.extract_strided_slice %3 {offsets = [0, 96], sizes = [4, 32], strides = [1, 1]} : vector<4x128xf32> to vector<4x32xf32>
    %104 = vector.extract_strided_slice %3 {offsets = [0, 96], sizes = [4, 32], strides = [1, 1]} : vector<4x128xf32> to vector<4x32xf32>
    %cst_47 = arith.constant dense<0.000000e+00> : vector<1x4xf32>
    %105 = tpu.matmul %102, %103, %cst_47 {dimension_numbers = #tpu.dot_dimension_numbers<[1], [1], [0], [0], [0, 0, 1, 0], [], []>} : vector<1x32xf32>, vector<4x32xf32>, vector<1x4xf32> -> vector<1x4xf32>
    %cst_48 = arith.constant 0.176776692 : f32
    %106 = vector.broadcast %cst_48 : f32 to vector<1x4xf32>
    %107 = arith.mulf %105, %106 : vector<1x4xf32>
    %cst_49 = arith.constant dense<0xFF800000> : vector<1xf32>
    %108 = vector.multi_reduction <maximumf>, %107, %cst_49 [1] : vector<1x4xf32> to vector<1xf32>
    %109 = vector.shape_cast %108 : vector<1xf32> to vector<1x1xf32>
    %110 = vector.broadcast %109 : vector<1x1xf32> to vector<1x4xf32>
    %111 = arith.subf %107, %110 : vector<1x4xf32>
    %112 = math.exp %111 : vector<1x4xf32>
    %cst_50 = arith.constant dense<0.000000e+00> : vector<1xf32>
    %113 = vector.multi_reduction <add>, %112, %cst_50 [1] : vector<1x4xf32> to vector<1xf32>
    %114 = vector.shape_cast %113 : vector<1xf32> to vector<1x1xf32>
    %115 = vector.broadcast %114 : vector<1x1xf32> to vector<1x4xf32>
    %116 = arith.divf %112, %115 : vector<1x4xf32>
    %cst_51 = arith.constant dense<0.000000e+00> : vector<1x32xf32>
    %117 = tpu.matmul %116, %104, %cst_51 {dimension_numbers = #tpu.dot_dimension_numbers<[1], [0], [0], [1], [0, 0, 1, 1], [], []>} : vector<1x4xf32>, vector<4x32xf32>, vector<1x32xf32> -> vector<1x32xf32>
    %118 = tpu.concatenate %69, %85, %101, %117 in 1 : vector<1x32xf32>, vector<1x32xf32>, vector<1x32xf32>, vector<1x32xf32> -> vector<1x128xf32>
    %c0_52 = arith.constant 0 : index
    %c0_53 = arith.constant 0 : index
    %119 = vector.load %arg11[%c0_52, %c0_53] : memref<128x128xf32, #tpu.memory_space<vmem>>, vector<128x128xf32>
    %cst_54 = arith.constant dense<0.000000e+00> : vector<1x128xf32>
    %120 = tpu.matmul %118, %119, %cst_54 {dimension_numbers = #tpu.dot_dimension_numbers<[1], [0], [0], [1], [0, 0, 1, 1], [], []>} : vector<1x128xf32>, vector<128x128xf32>, vector<1x128xf32> -> vector<1x128xf32>
    %c0_55 = arith.constant 0 : index
    %c0_56 = arith.constant 0 : index
    %121 = vector.load %arg12[%c0_55, %c0_56] : memref<1x128xf32, #tpu.memory_space<vmem>>, vector<1x128xf32>
    %122 = arith.addf %120, %121 : vector<1x128xf32>
    %123 = arith.addf %33, %122 : vector<1x128xf32>
    %cst_57 = arith.constant dense<0.000000e+00> : vector<1xf32>
    %124 = vector.multi_reduction <add>, %123, %cst_57 [1] : vector<1x128xf32> to vector<1xf32>
    %125 = vector.shape_cast %124 : vector<1xf32> to vector<1x1xf32>
    %cst_58 = arith.constant 1.280000e+02 : f32
    %126 = vector.broadcast %cst_58 : f32 to vector<1x1xf32>
    %127 = arith.divf %125, %126 : vector<1x1xf32>
    %128 = vector.broadcast %127 : vector<1x1xf32> to vector<1x128xf32>
    %129 = arith.subf %123, %128 : vector<1x128xf32>
    %130 = arith.mulf %129, %129 : vector<1x128xf32>
    %cst_59 = arith.constant dense<0.000000e+00> : vector<1xf32>
    %131 = vector.multi_reduction <add>, %130, %cst_59 [1] : vector<1x128xf32> to vector<1xf32>
    %132 = vector.shape_cast %131 : vector<1xf32> to vector<1x1xf32>
    %cst_60 = arith.constant 1.280000e+02 : f32
    %133 = vector.broadcast %cst_60 : f32 to vector<1x1xf32>
    %134 = arith.divf %132, %133 : vector<1x1xf32>
    %cst_61 = arith.constant 9.99999974E-6 : f32
    %135 = vector.broadcast %cst_61 : f32 to vector<1x1xf32>
    %136 = arith.addf %134, %135 : vector<1x1xf32>
    %137 = math.rsqrt %136 : vector<1x1xf32>
    %138 = vector.broadcast %137 : vector<1x1xf32> to vector<1x128xf32>
    %139 = arith.mulf %129, %138 : vector<1x128xf32>
    %c0_62 = arith.constant 0 : index
    %c0_63 = arith.constant 0 : index
    %140 = vector.load %arg13[%c0_62, %c0_63] : memref<1x128xf32, #tpu.memory_space<vmem>>, vector<1x128xf32>
    %141 = arith.mulf %139, %140 : vector<1x128xf32>
    %c0_64 = arith.constant 0 : index
    %c0_65 = arith.constant 0 : index
    %142 = vector.load %arg14[%c0_64, %c0_65] : memref<1x128xf32, #tpu.memory_space<vmem>>, vector<1x128xf32>
    %143 = arith.addf %141, %142 : vector<1x128xf32>
    %c0_66 = arith.constant 0 : index
    %c0_67 = arith.constant 0 : index
    %144 = vector.load %arg15[%c0_66, %c0_67] : memref<128x512xf32, #tpu.memory_space<vmem>>, vector<128x512xf32>
    %cst_68 = arith.constant dense<0.000000e+00> : vector<1x512xf32>
    %145 = tpu.matmul %143, %144, %cst_68 {dimension_numbers = #tpu.dot_dimension_numbers<[1], [0], [0], [1], [0, 0, 1, 1], [], []>} : vector<1x128xf32>, vector<128x512xf32>, vector<1x512xf32> -> vector<1x512xf32>
    %c0_69 = arith.constant 0 : index
    %c0_70 = arith.constant 0 : index
    %146 = vector.load %arg16[%c0_69, %c0_70] : memref<1x512xf32, #tpu.memory_space<vmem>>, vector<1x512xf32>
    %147 = arith.addf %145, %146 : vector<1x512xf32>
    %148 = arith.mulf %147, %147 : vector<1x512xf32>
    %149 = arith.mulf %147, %148 : vector<1x512xf32>
    %cst_71 = arith.constant 4.471500e-02 : f32
    %150 = vector.broadcast %cst_71 : f32 to vector<1x512xf32>
    %151 = arith.mulf %150, %149 : vector<1x512xf32>
    %152 = arith.addf %147, %151 : vector<1x512xf32>
    %cst_72 = arith.constant 0.797884583 : f32
    %153 = vector.broadcast %cst_72 : f32 to vector<1x512xf32>
    %154 = arith.mulf %153, %152 : vector<1x512xf32>
    %155 = math.tanh %154 : vector<1x512xf32>
    %cst_73 = arith.constant 1.000000e+00 : f32
    %156 = vector.broadcast %cst_73 : f32 to vector<1x512xf32>
    %157 = arith.addf %156, %155 : vector<1x512xf32>
    %cst_74 = arith.constant 5.000000e-01 : f32
    %158 = vector.broadcast %cst_74 : f32 to vector<1x512xf32>
    %159 = arith.mulf %158, %157 : vector<1x512xf32>
    %160 = arith.mulf %147, %159 : vector<1x512xf32>
    %c0_75 = arith.constant 0 : index
    %c0_76 = arith.constant 0 : index
    %161 = vector.load %arg17[%c0_75, %c0_76] : memref<512x128xf32, #tpu.memory_space<vmem>>, vector<512x128xf32>
    %cst_77 = arith.constant dense<0.000000e+00> : vector<1x128xf32>
    %162 = tpu.matmul %160, %161, %cst_77 {dimension_numbers = #tpu.dot_dimension_numbers<[1], [0], [0], [1], [0, 0, 1, 1], [], []>} : vector<1x512xf32>, vector<512x128xf32>, vector<1x128xf32> -> vector<1x128xf32>
    %c0_78 = arith.constant 0 : index
    %c0_79 = arith.constant 0 : index
    %163 = vector.load %arg18[%c0_78, %c0_79] : memref<1x128xf32, #tpu.memory_space<vmem>>, vector<1x128xf32>
    %164 = arith.addf %162, %163 : vector<1x128xf32>
    %165 = arith.addf %123, %164 : vector<1x128xf32>
    %c0_80 = arith.constant 0 : index
    %c0_81 = arith.constant 0 : index
    %c0_82 = arith.constant 0 : index
    %166 = vector.load %arg19[%c0_80, %c0_81, %c0_82] : memref<1x1x128xf32, #tpu.memory_space<vmem>>, vector<1x1x128xf32>
    %167 = vector.shape_cast %166 : vector<1x1x128xf32> to vector<1x128xf32>
    %168 = vector.shape_cast %165 : vector<1x128xf32> to vector<1x1x128xf32>
    tpu.vector_store %arg19[%c0_80, %c0_81, %c0_82], %168 {strides = array<i32>} : memref<1x1x128xf32, #tpu.memory_space<vmem>>, vector<1x1x128xf32>,
    return
  }
  func.func @transform_0(%arg0: i32) -> (i32, i32, i32) {
    %c0_i32 = arith.constant 0 : i32
    %c0_i32_0 = arith.constant 0 : i32
    %c0_i32_1 = arith.constant 0 : i32
    return %arg0, %c0_i32, %c0_i32_0 : i32, i32, i32
  }
  func.func @transform_1(%arg0: i32) -> (i32, i32, i32) {
    %c0_i32 = arith.constant 0 : i32
    %c0_i32_0 = arith.constant 0 : i32
    %c0_i32_1 = arith.constant 0 : i32
    return %arg0, %c0_i32, %c0_i32_0 : i32, i32, i32
  }
  func.func @transform_2(%arg0: i32) -> (i32, i32) {
    %c0_i32 = arith.constant 0 : i32
    %c0_i32_0 = arith.constant 0 : i32
    %c0_i32_1 = arith.constant 0 : i32
    return %c0_i32, %c0_i32_0 : i32, i32
  }
  func.func @transform_3(%arg0: i32) -> (i32, i32) {
    %c0_i32 = arith.constant 0 : i32
    %c0_i32_0 = arith.constant 0 : i32
    %c0_i32_1 = arith.constant 0 : i32
    return %c0_i32, %c0_i32_0 : i32, i32
  }
  func.func @transform_4(%arg0: i32) -> (i32, i32) {
    %c0_i32 = arith.constant 0 : i32
    %c0_i32_0 = arith.constant 0 : i32
    %c0_i32_1 = arith.constant 0 : i32
    return %c0_i32, %c0_i32_0 : i32, i32
  }
  func.func @transform_5(%arg0: i32) -> (i32, i32) {
    %c0_i32 = arith.constant 0 : i32
    %c0_i32_0 = arith.constant 0 : i32
    %c0_i32_1 = arith.constant 0 : i32
    return %c0_i32, %c0_i32_0 : i32, i32
  }
  func.func @transform_6(%arg0: i32) -> (i32, i32) {
    %c0_i32 = arith.constant 0 : i32
    %c0_i32_0 = arith.constant 0 : i32
    %c0_i32_1 = arith.constant 0 : i32
    return %c0_i32, %c0_i32_0 : i32, i32
  }
  func.func @transform_7(%arg0: i32) -> (i32, i32) {
    %c0_i32 = arith.constant 0 : i32
    %c0_i32_0 = arith.constant 0 : i32
    %c0_i32_1 = arith.constant 0 : i32
    return %c0_i32, %c0_i32_0 : i32, i32
  }
  func.func @transform_8(%arg0: i32) -> (i32, i32) {
    %c0_i32 = arith.constant 0 : i32
    %c0_i32_0 = arith.constant 0 : i32
    %c0_i32_1 = arith.constant 0 : i32
    return %c0_i32, %c0_i32_0 : i32, i32
  }
  func.func @transform_9(%arg0: i32) -> (i32, i32) {
    %c0_i32 = arith.constant 0 : i32
    %c0_i32_0 = arith.constant 0 : i32
    %c0_i32_1 = arith.constant 0 : i32
    return %c0_i32, %c0_i32_0 : i32, i32
  }
  func.func @transform_10(%arg0: i32) -> (i32, i32) {
    %c0_i32 = arith.constant 0 : i32
    %c0_i32_0 = arith.constant 0 : i32
    %c0_i32_1 = arith.constant 0 : i32
    return %c0_i32, %c0_i32_0 : i32, i32
  }
  func.func @transform_11(%arg0: i32) -> (i32, i32) {
    %c0_i32 = arith.constant 0 : i32
    %c0_i32_0 = arith.constant 0 : i32
    %c0_i32_1 = arith.constant 0 : i32
    return %c0_i32, %c0_i32_0 : i32, i32
  }
  func.func @transform_12(%arg0: i32) -> (i32, i32) {
    %c0_i32 = arith.constant 0 : i32
    %c0_i32_0 = arith.constant 0 : i32
    %c0_i32_1 = arith.constant 0 : i32
    return %c0_i32, %c0_i32_0 : i32, i32
  }
  func.func @transform_13(%arg0: i32) -> (i32, i32) {
    %c0_i32 = arith.constant 0 : i32
    %c0_i32_0 = arith.constant 0 : i32
    %c0_i32_1 = arith.constant 0 : i32
    return %c0_i32, %c0_i32_0 : i32, i32
  }
  func.func @transform_14(%arg0: i32) -> (i32, i32) {
    %c0_i32 = arith.constant 0 : i32
    %c0_i32_0 = arith.constant 0 : i32
    %c0_i32_1 = arith.constant 0 : i32
    return %c0_i32, %c0_i32_0 : i32, i32
  }
  func.func @transform_15(%arg0: i32) -> (i32, i32) {
    %c0_i32 = arith.constant 0 : i32
    %c0_i32_0 = arith.constant 0 : i32
    %c0_i32_1 = arith.constant 0 : i32
    return %c0_i32, %c0_i32_0 : i32, i32
  }
  func.func @transform_16(%arg0: i32) -> (i32, i32) {
    %c0_i32 = arith.constant 0 : i32
    %c0_i32_0 = arith.constant 0 : i32
    %c0_i32_1 = arith.constant 0 : i32
    return %c0_i32, %c0_i32_0 : i32, i32
  }
  func.func @transform_17(%arg0: i32) -> (i32, i32) {
    %c0_i32 = arith.constant 0 : i32
    %c0_i32_0 = arith.constant 0 : i32
    %c0_i32_1 = arith.constant 0 : i32
    return %c0_i32, %c0_i32_0 : i32, i32
  }
  func.func @transform_18(%arg0: i32) -> (i32, i32, i32) {
    %c0_i32 = arith.constant 0 : i32
    %c0_i32_0 = arith.constant 0 : i32
    %c0_i32_1 = arith.constant 0 : i32
    return %arg0, %c0_i32, %c0_i32_0 : i32, i32, i32
  }
}

module attributes {stable_mosaic.version = 11 : i64} {
  func.func @_layernorm_kernel(%arg0: i32, %arg1: memref<2x128xf32, #tpu.memory_space<vmem>>, %arg2: memref<1x128xf32, #tpu.memory_space<vmem>>, %arg3: memref<1x128xf32, #tpu.memory_space<vmem>>, %arg4: memref<2x128xf32, #tpu.memory_space<vmem>>) attributes {dimension_semantics = [#tpu.dimension_semantics<parallel>], iteration_bounds = array<i64: 1>, scalar_prefetch = 0 : i64, scratch_operands = 0 : i64, tpu.core_type = #tpu.core_type<tc>, window_params = [{transform_indices = @transform_0, window_bounds = array<i64: 2, 128>}, {pipeline_mode = #tpu.pipeline_mode<synchronous>, transform_indices = @transform_1, window_bounds = array<i64: 1, 128>}, {pipeline_mode = #tpu.pipeline_mode<synchronous>, transform_indices = @transform_2, window_bounds = array<i64: 1, 128>}, {transform_indices = @transform_3, window_bounds = array<i64: 2, 128>}]} {
    %c0 = arith.constant 0 : index
    %c0_0 = arith.constant 0 : index
    %0 = vector.load %arg1[%c0, %c0_0] : memref<2x128xf32, #tpu.memory_space<vmem>>, vector<2x128xf32>
    %cst = arith.constant dense<0.000000e+00> : vector<2xf32>
    %1 = vector.multi_reduction <add>, %0, %cst [1] : vector<2x128xf32> to vector<2xf32>
    %2 = vector.shape_cast %1 : vector<2xf32> to vector<2x1xf32>
    %cst_1 = arith.constant 1.280000e+02 : f32
    %3 = vector.broadcast %cst_1 : f32 to vector<2x1xf32>
    %4 = arith.divf %2, %3 : vector<2x1xf32>
    %5 = vector.broadcast %4 : vector<2x1xf32> to vector<2x128xf32>
    %6 = arith.subf %0, %5 : vector<2x128xf32>
    %7 = arith.mulf %6, %6 : vector<2x128xf32>
    %cst_2 = arith.constant dense<0.000000e+00> : vector<2xf32>
    %8 = vector.multi_reduction <add>, %7, %cst_2 [1] : vector<2x128xf32> to vector<2xf32>
    %9 = vector.shape_cast %8 : vector<2xf32> to vector<2x1xf32>
    %cst_3 = arith.constant 1.280000e+02 : f32
    %10 = vector.broadcast %cst_3 : f32 to vector<2x1xf32>
    %11 = arith.divf %9, %10 : vector<2x1xf32>
    %cst_4 = arith.constant 9.99999974E-6 : f32
    %12 = vector.broadcast %cst_4 : f32 to vector<2x1xf32>
    %13 = arith.addf %11, %12 : vector<2x1xf32>
    %14 = math.rsqrt %13 : vector<2x1xf32>
    %15 = vector.broadcast %14 : vector<2x1xf32> to vector<2x128xf32>
    %16 = arith.mulf %6, %15 : vector<2x128xf32>
    %c0_5 = arith.constant 0 : index
    %c0_6 = arith.constant 0 : index
    %17 = vector.load %arg2[%c0_5, %c0_6] : memref<1x128xf32, #tpu.memory_space<vmem>>, vector<1x128xf32>
    %18 = vector.broadcast %17 : vector<1x128xf32> to vector<2x128xf32>
    %19 = arith.mulf %16, %18 : vector<2x128xf32>
    %c0_7 = arith.constant 0 : index
    %c0_8 = arith.constant 0 : index
    %20 = vector.load %arg3[%c0_7, %c0_8] : memref<1x128xf32, #tpu.memory_space<vmem>>, vector<1x128xf32>
    %21 = vector.broadcast %20 : vector<1x128xf32> to vector<2x128xf32>
    %22 = arith.addf %19, %21 : vector<2x128xf32>
    %c0_9 = arith.constant 0 : index
    %c0_10 = arith.constant 0 : index
    %23 = vector.load %arg4[%c0_9, %c0_10] : memref<2x128xf32, #tpu.memory_space<vmem>>, vector<2x128xf32>
    tpu.vector_store %arg4[%c0_9, %c0_10], %22 {strides = array<i32>} : memref<2x128xf32, #tpu.memory_space<vmem>>, vector<2x128xf32>,
    return
  }
  func.func @transform_0(%arg0: i32) -> (i32, i32) {
    %c0_i32 = arith.constant 0 : i32
    %c0_i32_0 = arith.constant 0 : i32
    return %arg0, %c0_i32 : i32, i32
  }
  func.func @transform_1(%arg0: i32) -> (i32, i32) {
    %c0_i32 = arith.constant 0 : i32
    %c0_i32_0 = arith.constant 0 : i32
    %c0_i32_1 = arith.constant 0 : i32
    return %c0_i32, %c0_i32_0 : i32, i32
  }
  func.func @transform_2(%arg0: i32) -> (i32, i32) {
    %c0_i32 = arith.constant 0 : i32
    %c0_i32_0 = arith.constant 0 : i32
    %c0_i32_1 = arith.constant 0 : i32
    return %c0_i32, %c0_i32_0 : i32, i32
  }
  func.func @transform_3(%arg0: i32) -> (i32, i32) {
    %c0_i32 = arith.constant 0 : i32
    %c0_i32_0 = arith.constant 0 : i32
    return %arg0, %c0_i32 : i32, i32
  }
}

</mosaic_0001>

<llo_original>
// kernel: _lambda_.6
$region0: #{_lambda_.6}
  #allocation0 [shape = 'u32[]', space=smem, size = 0x4, offset = 0x4, fixed_abs, tag = 'smem constant byte address 0x4 - core index']
  #allocation1 [shape = 'u32[144,128]{1,0:T(1,128)}', space=vmem, size = 0x12000, scoped, tag = 'internal scratch']
  %s0 = inlined_call_operand.vmem [shape: f32[2,4,768], index: 0, kind: input, shape index: {}]
  %s1 = inlined_call_operand.vmem [shape: f32[768,128], index: 1, kind: input, shape index: {}]
  %s2 = inlined_call_operand.vmem [shape: f32[1,128], index: 2, kind: input, shape index: {}]
  %s3 = inlined_call_operand.vmem [shape: f32[1,4,128], index: 3, kind: input, shape index: {}]
  %s4 = inlined_call_operand.vmem [shape: f32[2,4,128], index: 4, kind: output, shape index: {}]
  %s5 = sld [smem:[#allocation0]]
  $region49: #{_lambda_.6} parent=0
    _
  %s7 = ssub.s32 1, %s5
  %s8 = scalar_select 0, %s7, %s5
  loop: start=0, step=1, limit=4
  $region2: #{_lambda_.6} parent=0 // loop_pre_header
    _
  $region3: #{_lambda_.6} parent=0 // loop_header
    %s10 = sphi 0, %s14
    %p11 = scmp.ge.s32.totalorder %s10, 4
    %s20 = sphi 0, %s22
    %s23 = sphi 0, %s20
    %s24 = sphi 0, %s23
    %s40 = sphi 0, %s24
    %s44 = sphi 0, %s44
    %s46 = sphi 0, %s44
    %s47 = sphi 0, %s46
    %s61 = sphi 0, %s47
    %s65 = sphi 0, %s65
    %s67 = sphi 0, %s65
    %s68 = sphi 0, %s67
    %s82 = sphi 0, %s68
    %s86 = sphi 0, %s86
    %s88 = sphi 0, %s86
    %s89 = sphi 0, %s88
    %s103 = sphi 0, %s89
    %s109 = sphi 0, %s111
    %s112 = sphi 0, %s109
    %s113 = sphi 0, %s112
    %s129 = sphi 0, %s113
  $region4: #{_lambda_.6} parent=0 // loop_header_branch
    %13 = sbr.rel (%p11) target = $region8
  $region5: #{_lambda_.6} parent=0 // loop_body
    %s15 = ssub.s32 %s10, 1
    %s16 = ssub.s32 %s10, 2
    %s17 = sadd.s32 %s10, 1
    %s18 = ssub.s32 %s10, %s17
    %p19 = scmp.eq.s32.totalorder %s18, 0
    %s21 = sadd.s32 %s20, 1
    %s22 = scalar_select %p19, %s20, %s21
    %p25 = pneg %p19
    %p26 = scmp.eq.s32.totalorder %s10, 1
    %p27 = por %p25, %p26
    %p28 = scmp.ne.s32.totalorder %s20, %s23
    %p29 = scmp.eq.s32.totalorder %s10, 0
    %p30 = por %p28, %p29
    %p31 = scmp.ne.s32.totalorder %s20, %s23
    %p32 = scmp.eq.s32.totalorder %s15, 1
    %p33 = por %p31, %p32
    %p34 = scmp.ne.s32.totalorder %s23, %s24
    %p35 = scmp.eq.s32.totalorder %s15, 0
    %p36 = por %p34, %p35
    %p37 = scmp.ne.s32.totalorder %s23, %s24
    %p38 = scmp.eq.s32.totalorder %s16, 1
    %p39 = por %p37, %p38
    %p41 = scmp.ne.s32.totalorder %s24, %s40
    %p42 = scmp.eq.s32.totalorder %s16, 0
    %p43 = por %p41, %p42
    %s45 = sadd.s32 %s44, 1
    %p48 = scmp.eq.s32.totalorder %s10, 1
    %p49 = scmp.ne.s32.totalorder %s44, %s46
    %p50 = scmp.eq.s32.totalorder %s10, 0
    %p51 = por %p49, %p50
    %p52 = scmp.ne.s32.totalorder %s44, %s46
    %p53 = scmp.eq.s32.totalorder %s15, 1
    %p54 = por %p52, %p53
    %p55 = scmp.ne.s32.totalorder %s46, %s47
    %p56 = scmp.eq.s32.totalorder %s15, 0
    %p57 = por %p55, %p56
    %p58 = scmp.ne.s32.totalorder %s46, %s47
    %p59 = scmp.eq.s32.totalorder %s16, 1
    %p60 = por %p58, %p59
    %p62 = scmp.ne.s32.totalorder %s47, %s61
    %p63 = scmp.eq.s32.totalorder %s16, 0
    %p64 = por %p62, %p63
    %s66 = sadd.s32 %s65, 1
    %p69 = scmp.eq.s32.totalorder %s10, 1
    %p70 = scmp.ne.s32.totalorder %s65, %s67
    %p71 = scmp.eq.s32.totalorder %s10, 0
    %p72 = por %p70, %p71
    %p73 = scmp.ne.s32.totalorder %s65, %s67
    %p74 = scmp.eq.s32.totalorder %s15, 1
    %p75 = por %p73, %p74
    %p76 = scmp.ne.s32.totalorder %s67, %s68
    %p77 = scmp.eq.s32.totalorder %s15, 0
    %p78 = por %p76, %p77
    %p79 = scmp.ne.s32.totalorder %s67, %s68
    %p80 = scmp.eq.s32.totalorder %s16, 1
    %p81 = por %p79, %p80
    %p83 = scmp.ne.s32.totalorder %s68, %s82
    %p84 = scmp.eq.s32.totalorder %s16, 0
    %p85 = por %p83, %p84
    %s87 = sadd.s32 %s86, 1
    %p90 = scmp.eq.s32.totalorder %s10, 1
    %p91 = scmp.ne.s32.totalorder %s86, %s88
    %p92 = scmp.eq.s32.totalorder %s10, 0
    %p93 = por %p91, %p92
    %p94 = scmp.ne.s32.totalorder %s86, %s88
    %p95 = scmp.eq.s32.totalorder %s15, 1
    %p96 = por %p94, %p95
    %p97 = scmp.ne.s32.totalorder %s88, %s89
    %p98 = scmp.eq.s32.totalorder %s15, 0
    %p99 = por %p97, %p98
    %p100 = scmp.ne.s32.totalorder %s88, %s89
    %p101 = scmp.eq.s32.totalorder %s16, 1
    %p102 = por %p100, %p101
    %p104 = scmp.ne.s32.totalorder %s89, %s103
    %p105 = scmp.eq.s32.totalorder %s16, 0
    %p106 = por %p104, %p105
    %s107 = ssub.s32 %s10, %s17
    %p108 = scmp.eq.s32.totalorder %s107, 0
    %s110 = sadd.s32 %s109, 1
    %s111 = scalar_select %p108, %s109, %s110
    %p114 = pneg %p108
    %p115 = scmp.eq.s32.totalorder %s10, 1
    %p116 = por %p114, %p115
    %p117 = scmp.ne.s32.totalorder %s109, %s112
    %p118 = scmp.eq.s32.totalorder %s10, 0
    %p119 = por %p117, %p118
    %p120 = scmp.ne.s32.totalorder %s109, %s112
    %p121 = scmp.eq.s32.totalorder %s15, 1
    %p122 = por %p120, %p121
    %p123 = scmp.ne.s32.totalorder %s112, %s113
    %p124 = scmp.eq.s32.totalorder %s15, 0
    %p125 = por %p123, %p124
    %p126 = scmp.ne.s32.totalorder %s112, %s113
    %p127 = scmp.eq.s32.totalorder %s16, 1
    %p128 = por %p126, %p127
    %p130 = scmp.ne.s32.totalorder %s113, %s129
    %p131 = scmp.eq.s32.totalorder %s16, 0
    %p132 = por %p130, %p131
    %p133 = scmp.le.s32.totalorder 1, %s10
    %p134 = scmp.lt.s32.totalorder %s10, 3
    %p135 = pnand %p133, %p134
    %p136 = pneg %p135
    // Predicated region
    $region9: #{_lambda_.6} parent=5 // pred_check
      _
    $region10: #{_lambda_.6} parent=5 // pred_check_branch
      %138 = sbr.rel (%p135) target = $region12
    $region11: #{_lambda_.6} parent=5 // pred_region
      %s139 = ssub.s32 %s10, 1
      // Predicated region
      $region13: #{_lambda_.6} parent=11 // pred_check
        %p140 = pneg %p57
      $region14: #{_lambda_.6} parent=11 // pred_check_branch
        %142 = sbr.rel (%p140) target = $region16
      $region15: #{_lambda_.6} parent=11 // pred_region
        _
      $region16: #{_lambda_.6} parent=11 // pred_fallthru
        _
      // Predicated region
      $region17: #{_lambda_.6} parent=11 // pred_check
        %p143 = pneg %p78
      $region18: #{_lambda_.6} parent=11 // pred_check_branch
        %145 = sbr.rel (%p143) target = $region20
      $region19: #{_lambda_.6} parent=11 // pred_region
        _
      $region20: #{_lambda_.6} parent=11 // pred_fallthru
        _
      // Predicated region
      $region21: #{_lambda_.6} parent=11 // pred_check
        %p146 = pneg %p99
      $region22: #{_lambda_.6} parent=11 // pred_check_branch
        %148 = sbr.rel (%p146) target = $region24
      $region23: #{_lambda_.6} parent=11 // pred_region
        _
      $region24: #{_lambda_.6} parent=11 // pred_fallthru
        _
    $region12: #{_lambda_.6} parent=5 // pred_fallthru
      _
    %p149 = scmp.lt.s32.totalorder %s10, 2
    // Predicated region
    $region25: #{_lambda_.6} parent=5 // pred_check
      %p150 = pneg %p149
    $region26: #{_lambda_.6} parent=5 // pred_check_branch
      %152 = sbr.rel (%p150) target = $region28
    $region27: #{_lambda_.6} parent=5 // pred_region
      // Predicated region
      $region29: #{_lambda_.6} parent=27 // pred_check
        %p153 = pneg %p30
      $region30: #{_lambda_.6} parent=27 // pred_check_branch
        %155 = sbr.rel (%p153) target = $region32
      $region31: #{_lambda_.6} parent=27 // pred_region
        %p156 = scmp.lt.s32.totalorder %s10, 1
        %s157 = scalar_select %p156, %s10, 1
        %s158 = smul.addr %s157, 6
        %s159 = smul.addr %s158, 4
        %s160 = scalar_lea.vmem %s0, %s159
      $region32: #{_lambda_.6} parent=27 // pred_fallthru
        _
    $region28: #{_lambda_.6} parent=5 // pred_fallthru
      _
    %p161 = scmp.le.s32.totalorder 1, %s10
    %p162 = scmp.lt.s32.totalorder %s10, 3
    %p163 = pnand %p161, %p162
    %p164 = pneg %p163
    // Predicated region
    $region33: #{_lambda_.6} parent=5 // pred_check
      _
    $region34: #{_lambda_.6} parent=5 // pred_check_branch
      %166 = sbr.rel (%p163) target = $region36
    $region35: #{_lambda_.6} parent=5 // pred_region
      %s167 = ssub.s32 %s10, 1
      %p168 = scmp.lt.s32.totalorder %s15, 1
      %s169 = scalar_select %p168, %s15, 1
      %s170 = smul.addr %s169, 6
      %s171 = smul.addr %s170, 4
      %s172 = scalar_lea.vmem %s0, %s171
      %p173 = pneg %p36
      %p174 = pneg %p33
      %p175 = pneg %p57
      %p176 = pneg %p54
      %p177 = pneg %p78
      %p178 = pneg %p75
      %p179 = pneg %p99
      %p180 = pneg %p96
      %p181 = pneg %p125
      %p182 = pneg %p122
      %p183 = scmp.lt.s32.totalorder %s15, 1
      %s184 = scalar_select %p183, %s15, 1
      %s185 = smul.addr %s184, 4
      %s186 = scalar_lea.vmem %s4, %s185
      %p187 = scmp.lt.s32.totalorder %s15, 1
      %s188 = scalar_select %p187, %s15, 1
      %s189 = smul.addr %s188, 6
      %s190 = smul.addr %s189, 4
      %s191 = scalar_lea.vmem %s0, %s190
      %p192 = scmp.lt.s32.totalorder %s15, 1
      %s193 = scalar_select %p192, %s15, 1
      %s194 = smul.addr %s193, 4
      %s195 = scalar_lea.vmem %s4, %s194
      %v196 = vld [vmem:[%s191] sm:$0xff]
      %v197 = vld [vmem:[%s191 + $0x8] sm:$0xff]
      %v198 = vld [vmem:[%s191 + $0x10] sm:$0xff]
      %v199 = vld [vmem:[%s1] sm:$0xff]
      %v200 = vld [vmem:[%s1 + $0x8] sm:$0xff]
      %v201 = vld [vmem:[%s1 + $0x10] sm:$0xff]
      %v202 = vld [vmem:[%s1 + $0x18] sm:$0xff]
      %v203 = vld [vmem:[%s1 + $0x20] sm:$0xff]
      %v204 = vld [vmem:[%s1 + $0x28] sm:$0xff]
      %v205 = vld [vmem:[%s1 + $0x30] sm:$0xff]
      %v206 = vld [vmem:[%s1 + $0x38] sm:$0xff]
      %v207 = vld [vmem:[%s1 + $0x40] sm:$0xff]
      %v208 = vld [vmem:[%s1 + $0x48] sm:$0xff]
      %v209 = vld [vmem:[%s1 + $0x50] sm:$0xff]
      %v210 = vld [vmem:[%s1 + $0x58] sm:$0xff]
      %v211 = vld [vmem:[%s1 + $0x60] sm:$0xff]
      %v212 = vld [vmem:[%s1 + $0x68] sm:$0xff]
      %v213 = vld [vmem:[%s1 + $0x70] sm:$0xff]
      %v214 = vld [vmem:[%s1 + $0x78] sm:$0xff]
      %v215 = vld [vmem:[%s1 + $0x80] sm:$0xff]
      %v216 = vld [vmem:[%s1 + $0x88] sm:$0xff]
      %v217 = vld [vmem:[%s1 + $0x90] sm:$0xff]
      %v218 = vld [vmem:[%s1 + $0x98] sm:$0xff]
      %v219 = vld [vmem:[%s1 + $0xa0] sm:$0xff]
      %v220 = vld [vmem:[%s1 + $0xa8] sm:$0xff]
      %v221 = vld [vmem:[%s1 + $0xb0] sm:$0xff]
      %v222 = vld [vmem:[%s1 + $0xb8] sm:$0xff]
      %v223 = vld [vmem:[%s1 + $0xc0] sm:$0xff]
      %v224 = vld [vmem:[%s1 + $0xc8] sm:$0xff]
      %v225 = vld [vmem:[%s1 + $0xd0] sm:$0xff]
      %v226 = vld [vmem:[%s1 + $0xd8] sm:$0xff]
      %v227 = vld [vmem:[%s1 + $0xe0] sm:$0xff]
      %v228 = vld [vmem:[%s1 + $0xe8] sm:$0xff]
      %v229 = vld [vmem:[%s1 + $0xf0] sm:$0xff]
      %v230 = vld [vmem:[%s1 + $0xf8] sm:$0xff]
      %v231 = vld [vmem:[%s1 + $0x100] sm:$0xff]
      %v232 = vld [vmem:[%s1 + $0x108] sm:$0xff]
      %v233 = vld [vmem:[%s1 + $0x110] sm:$0xff]
      %v234 = vld [vmem:[%s1 + $0x118] sm:$0xff]
      %v235 = vld [vmem:[%s1 + $0x120] sm:$0xff]
      %v236 = vld [vmem:[%s1 + $0x128] sm:$0xff]
      %v237 = vld [vmem:[%s1 + $0x130] sm:$0xff]
      %v238 = vld [vmem:[%s1 + $0x138] sm:$0xff]
      %v239 = vld [vmem:[%s1 + $0x140] sm:$0xff]
      %v240 = vld [vmem:[%s1 + $0x148] sm:$0xff]
      %v241 = vld [vmem:[%s1 + $0x150] sm:$0xff]
      %v242 = vld [vmem:[%s1 + $0x158] sm:$0xff]
      %v243 = vld [vmem:[%s1 + $0x160] sm:$0xff]
      %v244 = vld [vmem:[%s1 + $0x168] sm:$0xff]
      %v245 = vld [vmem:[%s1 + $0x170] sm:$0xff]
      %v246 = vld [vmem:[%s1 + $0x178] sm:$0xff]
      %v247 = vld [vmem:[%s1 + $0x180] sm:$0xff]
      %v248 = vld [vmem:[%s1 + $0x188] sm:$0xff]
      %v249 = vld [vmem:[%s1 + $0x190] sm:$0xff]
      %v250 = vld [vmem:[%s1 + $0x198] sm:$0xff]
      %v251 = vld [vmem:[%s1 + $0x1a0] sm:$0xff]
      %v252 = vld [vmem:[%s1 + $0x1a8] sm:$0xff]
      %v253 = vld [vmem:[%s1 + $0x1b0] sm:$0xff]
      %v254 = vld [vmem:[%s1 + $0x1b8] sm:$0xff]
      %v255 = vld [vmem:[%s1 + $0x1c0] sm:$0xff]
      %v256 = vld [vmem:[%s1 + $0x1c8] sm:$0xff]
      %v257 = vld [vmem:[%s1 + $0x1d0] sm:$0xff]
      %v258 = vld [vmem:[%s1 + $0x1d8] sm:$0xff]
      %v259 = vld [vmem:[%s1 + $0x1e0] sm:$0xff]
      %v260 = vld [vmem:[%s1 + $0x1e8] sm:$0xff]
      %v261 = vld [vmem:[%s1 + $0x1f0] sm:$0xff]
      %v262 = vld [vmem:[%s1 + $0x1f8] sm:$0xff]
      %v263 = vld [vmem:[%s1 + $0x200] sm:$0xff]
      %v264 = vld [vmem:[%s1 + $0x208] sm:$0xff]
      %v265 = vld [vmem:[%s1 + $0x210] sm:$0xff]
      %v266 = vld [vmem:[%s1 + $0x218] sm:$0xff]
      %v267 = vld [vmem:[%s1 + $0x220] sm:$0xff]
      %v268 = vld [vmem:[%s1 + $0x228] sm:$0xff]
      %v269 = vld [vmem:[%s1 + $0x230] sm:$0xff]
      %v270 = vld [vmem:[%s1 + $0x238] sm:$0xff]
      %v271 = vld [vmem:[%s1 + $0x240] sm:$0xff]
      %v272 = vld [vmem:[%s1 + $0x248] sm:$0xff]
      %v273 = vld [vmem:[%s1 + $0x250] sm:$0xff]
      %v274 = vld [vmem:[%s1 + $0x258] sm:$0xff]
      %v275 = vld [vmem:[%s1 + $0x260] sm:$0xff]
      %v276 = vld [vmem:[%s1 + $0x268] sm:$0xff]
      %v277 = vld [vmem:[%s1 + $0x270] sm:$0xff]
      %v278 = vld [vmem:[%s1 + $0x278] sm:$0xff]
      %v279 = vld [vmem:[%s1 + $0x280] sm:$0xff]
      %v280 = vld [vmem:[%s1 + $0x288] sm:$0xff]
      %v281 = vld [vmem:[%s1 + $0x290] sm:$0xff]
      %v282 = vld [vmem:[%s1 + $0x298] sm:$0xff]
      %v283 = vld [vmem:[%s1 + $0x2a0] sm:$0xff]
      %v284 = vld [vmem:[%s1 + $0x2a8] sm:$0xff]
      %v285 = vld [vmem:[%s1 + $0x2b0] sm:$0xff]
      %v286 = vld [vmem:[%s1 + $0x2b8] sm:$0xff]
      %v287 = vld [vmem:[%s1 + $0x2c0] sm:$0xff]
      %v288 = vld [vmem:[%s1 + $0x2c8] sm:$0xff]
      %v289 = vld [vmem:[%s1 + $0x2d0] sm:$0xff]
      %v290 = vld [vmem:[%s1 + $0x2d8] sm:$0xff]
      %v291 = vld [vmem:[%s1 + $0x2e0] sm:$0xff]
      %v292 = vld [vmem:[%s1 + $0x2e8] sm:$0xff]
      %v293 = vld [vmem:[%s1 + $0x2f0] sm:$0xff]
      %v294 = vld [vmem:[%s1 + $0x2f8] sm:$0xff]
      %v295 = vld [vmem:[%s2] sm:$0x1]
      %v297 = vlaneseq
      %v298 = vshrl.u32 %v297, 7
      %v299 = vsub.s32 0, %v298
      %v300 = vrot.slane %v295, %v299
      %v305 = vcombine.high %v196, %v196
      %v306 = vcombine.high %v197, %v197
      %v307 = vcombine.high %v198, %v198
      %311 = vmatprep.subr.mxu0 0.0
      %312 = vmatpush1.msra.mxu0 %v199
      %313 = vmatprep.subr.mxu0 0.0
      %314 = vmatpush1.msra.mxu0 %v200
      %315 = vmatprep.subr.mxu0 0.0
      %316 = vmatpush1.msra.mxu0 %v201
      %317 = vmatprep.subr.mxu0 0.0
      %318 = vmatpush1.msra.mxu0 %v202
      %319 = vmatprep.subr.mxu0 0.0
      %320 = vmatpush1.msra.mxu0 %v203
      %321 = vmatprep.subr.mxu0 0.0
      %322 = vmatpush1.msra.mxu0 %v204
      %323 = vmatprep.subr.mxu0 0.0
      %324 = vmatpush1.msra.mxu0 %v205
      %325 = vmatprep.subr.mxu0 0.0
      %326 = vmatpush1.msra.mxu0 %v206
      %327 = vmatprep.subr.mxu0 0.0
      %328 = vmatpush1.msra.mxu0 %v207
      %329 = vmatprep.subr.mxu0 0.0
      %330 = vmatpush1.msra.mxu0 %v208
      %331 = vmatprep.subr.mxu0 0.0
      %332 = vmatpush1.msra.mxu0 %v209
      %333 = vmatprep.subr.mxu0 0.0
      %334 = vmatpush1.msra.mxu0 %v210
      %335 = vmatprep.subr.mxu0 0.0
      %336 = vmatpush1.msra.mxu0 %v211
      %337 = vmatprep.subr.mxu0 0.0
      %338 = vmatpush1.msra.mxu0 %v212
      %339 = vmatprep.subr.mxu0 0.0
      %340 = vmatpush1.msra.mxu0 %v213
      %341 = vmatprep.subr.mxu0 0.0
      %342 = vmatpush1.msra.mxu0 %v214
      %343 = vmatprep.subr.mxu0 0.0
      %344 = vmatpush1.msra.mxu0 %v215
      %345 = vmatprep.subr.mxu0 0.0
      %346 = vmatpush1.msra.mxu0 %v216
      %347 = vmatprep.subr.mxu0 0.0
      %348 = vmatpush1.msra.mxu0 %v217
      %349 = vmatprep.subr.mxu0 0.0
      %350 = vmatpush1.msra.mxu0 %v218
      %351 = vmatprep.subr.mxu0 0.0
      %352 = vmatpush1.msra.mxu0 %v219
      %353 = vmatprep.subr.mxu0 0.0
      %354 = vmatpush1.msra.mxu0 %v220
      %355 = vmatprep.subr.mxu0 0.0
      %356 = vmatpush1.msra.mxu0 %v221
      %357 = vmatprep.subr.mxu0 0.0
      %358 = vmatpush1.msra.mxu0 %v222
      %359 = vmatprep.subr.mxu0 0.0
      %360 = vmatpush1.msra.mxu0 %v223
      %361 = vmatprep.subr.mxu0 0.0
      %362 = vmatpush1.msra.mxu0 %v224
      %363 = vmatprep.subr.mxu0 0.0
      %364 = vmatpush1.msra.mxu0 %v225
      %365 = vmatprep.subr.mxu0 0.0
      %366 = vmatpush1.msra.mxu0 %v226
      %367 = vmatprep.subr.mxu0 0.0
      %368 = vmatpush1.msra.mxu0 %v227
      %369 = vmatprep.subr.mxu0 0.0
      %370 = vmatpush1.msra.mxu0 %v228
      %371 = vmatprep.subr.mxu0 0.0
      %372 = vmatpush1.msra.mxu0 %v229
      %373 = vmatprep.subr.mxu0 0.0
      %374 = vmatpush1.msra.mxu0 %v230
      %375 = vmatprep.mubr.f32.mxu0 %v305
      %376 = vmatmul.mubr.f32.gmra.mrb[0].mxu0 %v196
      %v377 = vpop.f32.mrb[0].mxu0
      %v378 = vadd.f32 %v300, %v377
      %v379 = vpop.f32.mrb[0].mxu0
      %380 = vdwg.mxu0
      %381 = vmatprep.subr.mxu0 0.0
      %382 = vmatpush1.msra.mxu0 %v231
      %383 = vmatprep.subr.mxu0 0.0
      %384 = vmatpush1.msra.mxu0 %v232
      %385 = vmatprep.subr.mxu0 0.0
      %386 = vmatpush1.msra.mxu0 %v233
      %387 = vmatprep.subr.mxu0 0.0
      %388 = vmatpush1.msra.mxu0 %v234
      %389 = vmatprep.subr.mxu0 0.0
      %390 = vmatpush1.msra.mxu0 %v235
      %391 = vmatprep.subr.mxu0 0.0
      %392 = vmatpush1.msra.mxu0 %v236
      %393 = vmatprep.subr.mxu0 0.0
      %394 = vmatpush1.msra.mxu0 %v237
      %395 = vmatprep.subr.mxu0 0.0
      %396 = vmatpush1.msra.mxu0 %v238
      %397 = vmatprep.subr.mxu0 0.0
      %398 = vmatpush1.msra.mxu0 %v239
      %399 = vmatprep.subr.mxu0 0.0
      %400 = vmatpush1.msra.mxu0 %v240
      %401 = vmatprep.subr.mxu0 0.0
      %402 = vmatpush1.msra.mxu0 %v241
      %403 = vmatprep.subr.mxu0 0.0
      %404 = vmatpush1.msra.mxu0 %v242
      %405 = vmatprep.subr.mxu0 0.0
      %406 = vmatpush1.msra.mxu0 %v243
      %407 = vmatprep.subr.mxu0 0.0
      %408 = vmatpush1.msra.mxu0 %v244
      %409 = vmatprep.subr.mxu0 0.0
      %410 = vmatpush1.msra.mxu0 %v245
      %411 = vmatprep.subr.mxu0 0.0
      %412 = vmatpush1.msra.mxu0 %v246
      %413 = vmatprep.subr.mxu0 0.0
      %414 = vmatpush1.msra.mxu0 %v247
      %415 = vmatprep.subr.mxu0 0.0
      %416 = vmatpush1.msra.mxu0 %v248
      %417 = vmatprep.subr.mxu0 0.0
      %418 = vmatpush1.msra.mxu0 %v249
      %419 = vmatprep.subr.mxu0 0.0
      %420 = vmatpush1.msra.mxu0 %v250
      %421 = vmatprep.subr.mxu0 0.0
      %422 = vmatpush1.msra.mxu0 %v251
      %423 = vmatprep.subr.mxu0 0.0
      %424 = vmatpush1.msra.mxu0 %v252
      %425 = vmatprep.subr.mxu0 0.0
      %426 = vmatpush1.msra.mxu0 %v253
      %427 = vmatprep.subr.mxu0 0.0
      %428 = vmatpush1.msra.mxu0 %v254
      %429 = vmatprep.subr.mxu0 0.0
      %430 = vmatpush1.msra.mxu0 %v255
      %431 = vmatprep.subr.mxu0 0.0
      %432 = vmatpush1.msra.mxu0 %v256
      %433 = vmatprep.subr.mxu0 0.0
      %434 = vmatpush1.msra.mxu0 %v257
      %435 = vmatprep.subr.mxu0 0.0
      %436 = vmatpush1.msra.mxu0 %v258
      %437 = vmatprep.subr.mxu0 0.0
      %438 = vmatpush1.msra.mxu0 %v259
      %439 = vmatprep.subr.mxu0 0.0
      %440 = vmatpush1.msra.mxu0 %v260
      %441 = vmatprep.subr.mxu0 0.0
      %442 = vmatpush1.msra.mxu0 %v261
      %443 = vmatprep.subr.mxu0 0.0
      %444 = vmatpush1.msra.mxu0 %v262
      %445 = vmatprep.mubr.f32.mxu0 %v306
      %446 = vmatmul.mubr.f32.gmra.mrb[0].mxu0 %v197
      %v447 = vpop.f32.mrb[0].mxu0
      %v448 = vadd.f32 %v378, %v447
      %v449 = vpop.f32.mrb[0].mxu0
      %450 = vdwg.mxu0
      %451 = vmatprep.subr.mxu0 0.0
      %452 = vmatpush1.msra.mxu0 %v263
      %453 = vmatprep.subr.mxu0 0.0
      %454 = vmatpush1.msra.mxu0 %v264
      %455 = vmatprep.subr.mxu0 0.0
      %456 = vmatpush1.msra.mxu0 %v265
      %457 = vmatprep.subr.mxu0 0.0
      %458 = vmatpush1.msra.mxu0 %v266
      %459 = vmatprep.subr.mxu0 0.0
      %460 = vmatpush1.msra.mxu0 %v267
      %461 = vmatprep.subr.mxu0 0.0
      %462 = vmatpush1.msra.mxu0 %v268
      %463 = vmatprep.subr.mxu0 0.0
      %464 = vmatpush1.msra.mxu0 %v269
      %465 = vmatprep.subr.mxu0 0.0
      %466 = vmatpush1.msra.mxu0 %v270
      %467 = vmatprep.subr.mxu0 0.0
      %468 = vmatpush1.msra.mxu0 %v271
      %469 = vmatprep.subr.mxu0 0.0
      %470 = vmatpush1.msra.mxu0 %v272
      %471 = vmatprep.subr.mxu0 0.0
      %472 = vmatpush1.msra.mxu0 %v273
      %473 = vmatprep.subr.mxu0 0.0
      %474 = vmatpush1.msra.mxu0 %v274
      %475 = vmatprep.subr.mxu0 0.0
      %476 = vmatpush1.msra.mxu0 %v275
      %477 = vmatprep.subr.mxu0 0.0
      %478 = vmatpush1.msra.mxu0 %v276
      %479 = vmatprep.subr.mxu0 0.0
      %480 = vmatpush1.msra.mxu0 %v277
      %481 = vmatprep.subr.mxu0 0.0
      %482 = vmatpush1.msra.mxu0 %v278
      %483 = vmatprep.subr.mxu0 0.0
      %484 = vmatpush1.msra.mxu0 %v279
      %485 = vmatprep.subr.mxu0 0.0
      %486 = vmatpush1.msra.mxu0 %v280
      %487 = vmatprep.subr.mxu0 0.0
      %488 = vmatpush1.msra.mxu0 %v281
      %489 = vmatprep.subr.mxu0 0.0
      %490 = vmatpush1.msra.mxu0 %v282
      %491 = vmatprep.subr.mxu0 0.0
      %492 = vmatpush1.msra.mxu0 %v283
      %493 = vmatprep.subr.mxu0 0.0
      %494 = vmatpush1.msra.mxu0 %v284
      %495 = vmatprep.subr.mxu0 0.0
      %496 = vmatpush1.msra.mxu0 %v285
      %497 = vmatprep.subr.mxu0 0.0
      %498 = vmatpush1.msra.mxu0 %v286
      %499 = vmatprep.subr.mxu0 0.0
      %500 = vmatpush1.msra.mxu0 %v287
      %501 = vmatprep.subr.mxu0 0.0
      %502 = vmatpush1.msra.mxu0 %v288
      %503 = vmatprep.subr.mxu0 0.0
      %504 = vmatpush1.msra.mxu0 %v289
      %505 = vmatprep.subr.mxu0 0.0
      %506 = vmatpush1.msra.mxu0 %v290
      %507 = vmatprep.subr.mxu0 0.0
      %508 = vmatpush1.msra.mxu0 %v291
      %509 = vmatprep.subr.mxu0 0.0
      %510 = vmatpush1.msra.mxu0 %v292
      %511 = vmatprep.subr.mxu0 0.0
      %512 = vmatpush1.msra.mxu0 %v293
      %513 = vmatprep.subr.mxu0 0.0
      %514 = vmatpush1.msra.mxu0 %v294
      %515 = vmatprep.mubr.f32.mxu0 %v307
      %516 = vmatmul.mubr.f32.gmra.mrb[0].mxu0 %v198
      %v517 = vpop.f32.mrb[0].mxu0
      %v518 = vadd.f32 %v448, %v517
      %v519 = vpop.f32.mrb[0].mxu0
      %520 = vdwg.mxu0
      %v521 = vld [vmem:[%s3] sm:$0xf]
      %v522 = vadd.f32 %v518, %v521
      %523 = vst [vmem:[%s195] sm:$0xf] %v522
      %p524 = scmp.lt.s32.totalorder %s15, 1
      %s525 = scalar_select %p524, %s15, 1
      %s526 = smul.addr %s525, 4
      %s527 = scalar_lea.vmem %s4, %s526
      // Predicated region
      $region37: #{_lambda_.6} parent=35 // pred_check
        %p528 = pneg %p122
      $region38: #{_lambda_.6} parent=35 // pred_check_branch
        %530 = sbr.rel (%p528) target = $region40
      $region39: #{_lambda_.6} parent=35 // pred_region
        _
      $region40: #{_lambda_.6} parent=35 // pred_fallthru
        _
    $region36: #{_lambda_.6} parent=5 // pred_fallthru
      _
    %p531 = scmp.le.s32.totalorder 2, %s10
    // Predicated region
    $region41: #{_lambda_.6} parent=5 // pred_check
      %p532 = pneg %p531
    $region42: #{_lambda_.6} parent=5 // pred_check_branch
      %534 = sbr.rel (%p532) target = $region44
    $region43: #{_lambda_.6} parent=5 // pred_region
      %s535 = ssub.s32 %s10, 2
      // Predicated region
      $region45: #{_lambda_.6} parent=43 // pred_check
        %p536 = pneg %p128
      $region46: #{_lambda_.6} parent=43 // pred_check_branch
        %538 = sbr.rel (%p536) target = $region48
      $region47: #{_lambda_.6} parent=43 // pred_region
        %p539 = scmp.lt.s32.totalorder %s16, 1
        %s540 = scalar_select %p539, %s16, 1
        %s541 = smul.addr %s540, 4
        %s542 = scalar_lea.vmem %s4, %s541
      $region48: #{_lambda_.6} parent=43 // pred_fallthru
        _
    $region44: #{_lambda_.6} parent=5 // pred_fallthru
      _
  $region6: #{_lambda_.6} parent=0 // loop_footer
    %s14 = sadd.s32 1, %s10
  $region7: #{_lambda_.6} parent=0 // loop_footer_branch
    %9 = sbr.rel target = $region3
  $region8: #{_lambda_.6} parent=0 // loop_exit
    _

// kernel: _lambda_.9
$region0: #{_lambda_.9}
  #allocation0 [shape = 'u32[]', space=smem, size = 0x4, offset = 0x4, fixed_abs, tag = 'smem constant byte address 0x4 - core index']
  #allocation1 [shape = 'u32[144,128]{1,0:T(1,128)}', space=vmem, size = 0x12000, scoped, tag = 'internal scratch']
  %s0 = inlined_call_operand.vmem [shape: f32[10,128], index: 0, kind: input, shape index: {}]
  %s1 = inlined_call_operand.vmem [shape: f32[1,128], index: 1, kind: input, shape index: {}]
  %s2 = inlined_call_operand.vmem [shape: f32[1,128], index: 2, kind: input, shape index: {}]
  %s3 = inlined_call_operand.vmem [shape: f32[10,128], index: 3, kind: output, shape index: {}]
  %s4 = sld [smem:[#allocation0]]
  $region22: #{_lambda_.9} parent=0
    _
  %s6 = ssub.s32 1, %s4
  %s7 = scalar_select 0, %s6, %s4
  // Predicated region
  $region2: #{_lambda_.9} parent=0 // pred_check
    _
  $region3: #{_lambda_.9} parent=0 // pred_check_branch
    %9 = sbr.rel (0) target = $region5
  $region4: #{_lambda_.9} parent=0 // pred_region
    _
  $region5: #{_lambda_.9} parent=0 // pred_fallthru
    _
  // Predicated region
  $region6: #{_lambda_.9} parent=0 // pred_check
    _
  $region7: #{_lambda_.9} parent=0 // pred_check_branch
    %11 = sbr.rel (0) target = $region9
  $region8: #{_lambda_.9} parent=0 // pred_region
    _
  $region9: #{_lambda_.9} parent=0 // pred_fallthru
    _
  // Predicated region
  $region10: #{_lambda_.9} parent=0 // pred_check
    _
  $region11: #{_lambda_.9} parent=0 // pred_check_branch
    %13 = sbr.rel (0) target = $region13
  $region12: #{_lambda_.9} parent=0 // pred_region
    _
  $region13: #{_lambda_.9} parent=0 // pred_fallthru
    _
  %v14 = vld [vmem:[%s0] sm:$0xff]
  %v15 = vld [vmem:[%s0 + $0x8] sm:$0x3]
  %16 = vadd.xlane.f32.xlu0 %v14
  %v17 = vpop.xlane.xlu0 %16
  %vm18 = vcmask 1041408
  %v19 = vsel %vm18, %v15, 0.0
  %20 = vadd.xlane.f32.xlu0 %v19
  %v21 = vpop.xlane.xlu0 %20
  %v22 = vrcp.pop 128.0
  %v23 = vmul.f32 %v17, %v22
  %v24 = vmul.f32 %v21, %v22
  %v25 = vsub.f32 %v14, %v23
  %v26 = vsub.f32 %v15, %v24
  %v27 = vmul.f32 %v25, %v25
  %v28 = vmul.f32 %v26, %v26
  %29 = vadd.xlane.f32.xlu0 %v27
  %v30 = vpop.xlane.xlu0 %29
  %v31 = vsel %vm18, %v28, 0.0
  %32 = vadd.xlane.f32.xlu0 %v31
  %v33 = vpop.xlane.xlu0 %32
  %v34 = vmul.f32 %v30, %v22
  %v35 = vmul.f32 %v33, %v22
  %v36 = vadd.f32 %v34, 1e-05
  %v37 = vadd.f32 %v35, 1e-05
  %v38 = vrsqrt.pop %v36
  %v39 = vrsqrt.pop %v37
  %v40 = vmul.f32 %v25, %v38
  %v41 = vmul.f32 %v26, %v39
  %v42 = vld [vmem:[%s1] sm:$0x1]
  %v44 = vlaneseq
  %v45 = vshrl.u32 %v44, 7
  %v46 = vsub.s32 0, %v45
  %v47 = vrot.slane %v42, %v46
  %v49 = vmul.f32 %v40, %v47
  %v50 = vmul.f32 %v41, %v47
  %v51 = vld [vmem:[%s2] sm:$0x1]
  %v53 = vlaneseq
  %v54 = vshrl.u32 %v53, 7
  %v55 = vsub.s32 0, %v54
  %v56 = vrot.slane %v51, %v55
  %v58 = vadd.f32 %v49, %v56
  %v59 = vadd.f32 %v50, %v56
  %60 = vst [vmem:[%s3] sm:$0xff] %v58
  %61 = vst [vmem:[%s3 + $0x8] sm:$0x3] %v59
  // Predicated region
  $region14: #{_lambda_.9} parent=0 // pred_check
    _
  $region15: #{_lambda_.9} parent=0 // pred_check_branch
    %63 = sbr.rel (0) target = $region17
  $region16: #{_lambda_.9} parent=0 // pred_region
    _
  $region17: #{_lambda_.9} parent=0 // pred_fallthru
    _
  // Predicated region
  $region18: #{_lambda_.9} parent=0 // pred_check
    _
  $region19: #{_lambda_.9} parent=0 // pred_check_branch
    %65 = sbr.rel (0) target = $region21
  $region20: #{_lambda_.9} parent=0 // pred_region
    _
  $region21: #{_lambda_.9} parent=0 // pred_fallthru
    _

// kernel: _lambda_.11
$region0: #{_lambda_.11}
  #allocation0 [shape = 'u32[]', space=smem, size = 0x4, offset = 0x4, fixed_abs, tag = 'smem constant byte address 0x4 - core index']
  #allocation1 [shape = 'u32[144,128]{1,0:T(1,128)}', space=vmem, size = 0x12000, scoped, tag = 'internal scratch']
  %s0 = inlined_call_operand.vmem [shape: f32[2,128], index: 0, kind: input, shape index: {}]
  %s1 = inlined_call_operand.vmem [shape: f32[1,128], index: 1, kind: input, shape index: {}]
  %s2 = inlined_call_operand.vmem [shape: f32[1,128], index: 2, kind: input, shape index: {}]
  %s3 = inlined_call_operand.hbm [shape: f32[2,128], index: 3, kind: output, shape index: {}]
  %s4 = sld [smem:[#allocation0]]
  $region22: #{_lambda_.11} parent=0
    _
  %s6 = ssub.s32 1, %s4
  %s7 = scalar_select 0, %s6, %s4
  $region1: #{_lambda_.11} parent=0
    #allocation2 [shape = 'u8[1024]{0}', space=vmem, size = 0x400, scoped, tag = 'output window, operand 0, single buffered']
    #allocation3 [shape = 's32[1]{0}', space=sflag, size = 0x4, scoped, tag = 'scoped memory for _lambda_.11']
    %8 = vsyncpa [#allocation3], 0
    // Predicated region
    $region2: #{_lambda_.11} parent=1 // pred_check
      _
    $region3: #{_lambda_.11} parent=1 // pred_check_branch
      %10 = sbr.rel (0) target = $region5
    $region4: #{_lambda_.11} parent=1 // pred_region
      _
    $region5: #{_lambda_.11} parent=1 // pred_fallthru
      _
    // Predicated region
    $region6: #{_lambda_.11} parent=1 // pred_check
      _
    $region7: #{_lambda_.11} parent=1 // pred_check_branch
      %12 = sbr.rel (0) target = $region9
    $region8: #{_lambda_.11} parent=1 // pred_region
      _
    $region9: #{_lambda_.11} parent=1 // pred_fallthru
      _
    // Predicated region
    $region10: #{_lambda_.11} parent=1 // pred_check
      _
    $region11: #{_lambda_.11} parent=1 // pred_check_branch
      %14 = sbr.rel (0) target = $region13
    $region12: #{_lambda_.11} parent=1 // pred_region
      _
    $region13: #{_lambda_.11} parent=1 // pred_fallthru
      _
    %v15 = vld [vmem:[%s0] sm:$0x3]
    %vm16 = vcmask 1041408
    %v17 = vsel %vm16, %v15, 0.0
    %18 = vadd.xlane.f32.xlu0 %v17
    %v19 = vpop.xlane.xlu0 %18
    %v20 = vrcp.pop 128.0
    %v21 = vmul.f32 %v19, %v20
    %v22 = vsub.f32 %v15, %v21
    %v23 = vmul.f32 %v22, %v22
    %v24 = vsel %vm16, %v23, 0.0
    %25 = vadd.xlane.f32.xlu0 %v24
    %v26 = vpop.xlane.xlu0 %25
    %v27 = vmul.f32 %v26, %v20
    %v28 = vadd.f32 %v27, 1e-05
    %v29 = vrsqrt.pop %v28
    %v30 = vmul.f32 %v22, %v29
    %v31 = vld [vmem:[%s1] sm:$0x1]
    %v33 = vlaneseq
    %v34 = vshrl.u32 %v33, 7
    %v35 = vsub.s32 0, %v34
    %v36 = vrot.slane %v31, %v35
    %v38 = vmul.f32 %v30, %v36
    %v39 = vld [vmem:[%s2] sm:$0x1]
    %v41 = vlaneseq
    %v42 = vshrl.u32 %v41, 7
    %v43 = vsub.s32 0, %v42
    %v44 = vrot.slane %v39, %v43
    %v46 = vadd.f32 %v38, %v44
    %47 = vst [vmem:[#allocation2] sm:$0x3] %v46
    // Predicated region
    $region14: #{_lambda_.11} parent=1 // pred_check
      _
    $region15: #{_lambda_.11} parent=1 // pred_check_branch
      %49 = sbr.rel (0) target = $region17
    $region16: #{_lambda_.11} parent=1 // pred_region
      %s51 = ssub.s32 32, 32
      %52 = vsyncadd [#allocation3], %s51
      %s54 = sshll.u32 [#allocation2], 4
      %s55 = int_to_ptr.vmem [resolvable:$true] %s54
      %57 = dma.vmem_to_hbm [thread:$0]  %s55, 32, %s3, [#allocation3]
    $region17: #{_lambda_.11} parent=1 // pred_fallthru
      _
    // Predicated region
    $region18: #{_lambda_.11} parent=1 // pred_check
      _
    $region19: #{_lambda_.11} parent=1 // pred_check_branch
      %59 = sbr.rel (0) target = $region21
    $region20: #{_lambda_.11} parent=1 // pred_region
      %60 = dma.done [#allocation3], 32
    $region21: #{_lambda_.11} parent=1 // pred_fallthru
      _
    %61 = vsyncpa [#allocation3], 1

// kernel: _lambda_.7
$region0: #{_lambda_.7}
  #allocation0 [shape = 'u32[]', space=smem, size = 0x4, offset = 0x4, fixed_abs, tag = 'smem constant byte address 0x4 - core index']
  #allocation1 [shape = 'u32[144,128]{1,0:T(1,128)}', space=vmem, size = 0x12000, scoped, tag = 'internal scratch']
  %s0 = inlined_call_operand.vmem [shape: f32[2,5,128], index: 0, kind: input, shape index: {}]
  %s1 = inlined_call_operand.vmem [shape: f32[1,128], index: 1, kind: input, shape index: {}]
  %s2 = inlined_call_operand.vmem [shape: f32[1,128], index: 2, kind: input, shape index: {}]
  %s3 = inlined_call_operand.vmem [shape: f32[128,384], index: 3, kind: input, shape index: {}]
  %s4 = inlined_call_operand.vmem [shape: f32[1,384], index: 4, kind: input, shape index: {}]
  %s5 = inlined_call_operand.vmem [shape: f32[128,128], index: 5, kind: input, shape index: {}]
  %s6 = inlined_call_operand.vmem [shape: f32[1,128], index: 6, kind: input, shape index: {}]
  %s7 = inlined_call_operand.vmem [shape: f32[1,128], index: 7, kind: input, shape index: {}, may-alias: {7,14}]
  %s8 = inlined_call_operand.vmem [shape: f32[1,128], index: 8, kind: input, shape index: {}]
  %s9 = inlined_call_operand.vmem [shape: f32[1,128], index: 9, kind: input, shape index: {}]
  %s10 = inlined_call_operand.vmem [shape: f32[128,512], index: 10, kind: input, shape index: {}]
  %s11 = inlined_call_operand.vmem [shape: f32[1,512], index: 11, kind: input, shape index: {}]
  %s12 = inlined_call_operand.vmem [shape: f32[512,128], index: 12, kind: input, shape index: {}]
  %s13 = inlined_call_operand.vmem [shape: f32[1,128], index: 13, kind: input, shape index: {}]
  %s14 = inlined_call_operand.vmem [shape: f32[1,128], index: 14, kind: input, shape index: {}, may-alias: {7,14}]
  %s15 = inlined_call_operand.vmem [shape: f32[2,5,128], index: 15, kind: output, shape index: {}]
  %s16 = sld [smem:[#allocation0]]
  $region93: #{_lambda_.7} parent=0
    _
  %s18 = ssub.s32 1, %s16
  %s19 = scalar_select 0, %s18, %s16
  loop: start=0, step=1, limit=4
  $region2: #{_lambda_.7} parent=0 // loop_pre_header
    _
  $region3: #{_lambda_.7} parent=0 // loop_header
    %s21 = sphi 0, %s25
    %p22 = scmp.ge.s32.totalorder %s21, 4
    %s31 = sphi 0, %s33
    %s34 = sphi 0, %s31
    %s35 = sphi 0, %s34
    %s51 = sphi 0, %s35
    %s55 = sphi 0, %s55
    %s57 = sphi 0, %s55
    %s58 = sphi 0, %s57
    %s72 = sphi 0, %s58
    %s76 = sphi 0, %s76
    %s78 = sphi 0, %s76
    %s79 = sphi 0, %s78
    %s93 = sphi 0, %s79
    %s97 = sphi 0, %s97
    %s99 = sphi 0, %s97
    %s100 = sphi 0, %s99
    %s114 = sphi 0, %s100
    %s118 = sphi 0, %s118
    %s120 = sphi 0, %s118
    %s121 = sphi 0, %s120
    %s135 = sphi 0, %s121
    %s139 = sphi 0, %s139
    %s141 = sphi 0, %s139
    %s142 = sphi 0, %s141
    %s156 = sphi 0, %s142
    %s160 = sphi 0, %s160
    %s162 = sphi 0, %s160
    %s163 = sphi 0, %s162
    %s177 = sphi 0, %s163
    %s181 = sphi 0, %s181
    %s183 = sphi 0, %s181
    %s184 = sphi 0, %s183
    %s198 = sphi 0, %s184
    %s202 = sphi 0, %s202
    %s204 = sphi 0, %s202
    %s205 = sphi 0, %s204
    %s219 = sphi 0, %s205
    %s223 = sphi 0, %s223
    %s225 = sphi 0, %s223
    %s226 = sphi 0, %s225
    %s240 = sphi 0, %s226
    %s244 = sphi 0, %s244
    %s246 = sphi 0, %s244
    %s247 = sphi 0, %s246
    %s261 = sphi 0, %s247
    %s265 = sphi 0, %s265
    %s267 = sphi 0, %s265
    %s268 = sphi 0, %s267
    %s282 = sphi 0, %s268
    %s286 = sphi 0, %s286
    %s288 = sphi 0, %s286
    %s289 = sphi 0, %s288
    %s303 = sphi 0, %s289
    %s307 = sphi 0, %s307
    %s309 = sphi 0, %s307
    %s310 = sphi 0, %s309
    %s324 = sphi 0, %s310
    %s328 = sphi 0, %s328
    %s330 = sphi 0, %s328
    %s331 = sphi 0, %s330
    %s345 = sphi 0, %s331
    %s351 = sphi 0, %s353
    %s354 = sphi 0, %s351
    %s355 = sphi 0, %s354
    %s371 = sphi 0, %s355
  $region4: #{_lambda_.7} parent=0 // loop_header_branch
    %24 = sbr.rel (%p22) target = $region8
  $region5: #{_lambda_.7} parent=0 // loop_body
    %s26 = ssub.s32 %s21, 1
    %s27 = ssub.s32 %s21, 2
    %s28 = sadd.s32 %s21, 1
    %s29 = ssub.s32 %s21, %s28
    %p30 = scmp.eq.s32.totalorder %s29, 0
    %s32 = sadd.s32 %s31, 1
    %s33 = scalar_select %p30, %s31, %s32
    %p36 = pneg %p30
    %p37 = scmp.eq.s32.totalorder %s21, 1
    %p38 = por %p36, %p37
    %p39 = scmp.ne.s32.totalorder %s31, %s34
    %p40 = scmp.eq.s32.totalorder %s21, 0
    %p41 = por %p39, %p40
    %p42 = scmp.ne.s32.totalorder %s31, %s34
    %p43 = scmp.eq.s32.totalorder %s26, 1
    %p44 = por %p42, %p43
    %p45 = scmp.ne.s32.totalorder %s34, %s35
    %p46 = scmp.eq.s32.totalorder %s26, 0
    %p47 = por %p45, %p46
    %p48 = scmp.ne.s32.totalorder %s34, %s35
    %p49 = scmp.eq.s32.totalorder %s27, 1
    %p50 = por %p48, %p49
    %p52 = scmp.ne.s32.totalorder %s35, %s51
    %p53 = scmp.eq.s32.totalorder %s27, 0
    %p54 = por %p52, %p53
    %s56 = sadd.s32 %s55, 1
    %p59 = scmp.eq.s32.totalorder %s21, 1
    %p60 = scmp.ne.s32.totalorder %s55, %s57
    %p61 = scmp.eq.s32.totalorder %s21, 0
    %p62 = por %p60, %p61
    %p63 = scmp.ne.s32.totalorder %s55, %s57
    %p64 = scmp.eq.s32.totalorder %s26, 1
    %p65 = por %p63, %p64
    %p66 = scmp.ne.s32.totalorder %s57, %s58
    %p67 = scmp.eq.s32.totalorder %s26, 0
    %p68 = por %p66, %p67
    %p69 = scmp.ne.s32.totalorder %s57, %s58
    %p70 = scmp.eq.s32.totalorder %s27, 1
    %p71 = por %p69, %p70
    %p73 = scmp.ne.s32.totalorder %s58, %s72
    %p74 = scmp.eq.s32.totalorder %s27, 0
    %p75 = por %p73, %p74
    %s77 = sadd.s32 %s76, 1
    %p80 = scmp.eq.s32.totalorder %s21, 1
    %p81 = scmp.ne.s32.totalorder %s76, %s78
    %p82 = scmp.eq.s32.totalorder %s21, 0
    %p83 = por %p81, %p82
    %p84 = scmp.ne.s32.totalorder %s76, %s78
    %p85 = scmp.eq.s32.totalorder %s26, 1
    %p86 = por %p84, %p85
    %p87 = scmp.ne.s32.totalorder %s78, %s79
    %p88 = scmp.eq.s32.totalorder %s26, 0
    %p89 = por %p87, %p88
    %p90 = scmp.ne.s32.totalorder %s78, %s79
    %p91 = scmp.eq.s32.totalorder %s27, 1
    %p92 = por %p90, %p91
    %p94 = scmp.ne.s32.totalorder %s79, %s93
    %p95 = scmp.eq.s32.totalorder %s27, 0
    %p96 = por %p94, %p95
    %s98 = sadd.s32 %s97, 1
    %p101 = scmp.eq.s32.totalorder %s21, 1
    %p102 = scmp.ne.s32.totalorder %s97, %s99
    %p103 = scmp.eq.s32.totalorder %s21, 0
    %p104 = por %p102, %p103
    %p105 = scmp.ne.s32.totalorder %s97, %s99
    %p106 = scmp.eq.s32.totalorder %s26, 1
    %p107 = por %p105, %p106
    %p108 = scmp.ne.s32.totalorder %s99, %s100
    %p109 = scmp.eq.s32.totalorder %s26, 0
    %p110 = por %p108, %p109
    %p111 = scmp.ne.s32.totalorder %s99, %s100
    %p112 = scmp.eq.s32.totalorder %s27, 1
    %p113 = por %p111, %p112
    %p115 = scmp.ne.s32.totalorder %s100, %s114
    %p116 = scmp.eq.s32.totalorder %s27, 0
    %p117 = por %p115, %p116
    %s119 = sadd.s32 %s118, 1
    %p122 = scmp.eq.s32.totalorder %s21, 1
    %p123 = scmp.ne.s32.totalorder %s118, %s120
    %p124 = scmp.eq.s32.totalorder %s21, 0
    %p125 = por %p123, %p124
    %p126 = scmp.ne.s32.totalorder %s118, %s120
    %p127 = scmp.eq.s32.totalorder %s26, 1
    %p128 = por %p126, %p127
    %p129 = scmp.ne.s32.totalorder %s120, %s121
    %p130 = scmp.eq.s32.totalorder %s26, 0
    %p131 = por %p129, %p130
    %p132 = scmp.ne.s32.totalorder %s120, %s121
    %p133 = scmp.eq.s32.totalorder %s27, 1
    %p134 = por %p132, %p133
    %p136 = scmp.ne.s32.totalorder %s121, %s135
    %p137 = scmp.eq.s32.totalorder %s27, 0
    %p138 = por %p136, %p137
    %s140 = sadd.s32 %s139, 1
    %p143 = scmp.eq.s32.totalorder %s21, 1
    %p144 = scmp.ne.s32.totalorder %s139, %s141
    %p145 = scmp.eq.s32.totalorder %s21, 0
    %p146 = por %p144, %p145
    %p147 = scmp.ne.s32.totalorder %s139, %s141
    %p148 = scmp.eq.s32.totalorder %s26, 1
    %p149 = por %p147, %p148
    %p150 = scmp.ne.s32.totalorder %s141, %s142
    %p151 = scmp.eq.s32.totalorder %s26, 0
    %p152 = por %p150, %p151
    %p153 = scmp.ne.s32.totalorder %s141, %s142
    %p154 = scmp.eq.s32.totalorder %s27, 1
    %p155 = por %p153, %p154
    %p157 = scmp.ne.s32.totalorder %s142, %s156
    %p158 = scmp.eq.s32.totalorder %s27, 0
    %p159 = por %p157, %p158
    %s161 = sadd.s32 %s160, 1
    %p164 = scmp.eq.s32.totalorder %s21, 1
    %p165 = scmp.ne.s32.totalorder %s160, %s162
    %p166 = scmp.eq.s32.totalorder %s21, 0
    %p167 = por %p165, %p166
    %p168 = scmp.ne.s32.totalorder %s160, %s162
    %p169 = scmp.eq.s32.totalorder %s26, 1
    %p170 = por %p168, %p169
    %p171 = scmp.ne.s32.totalorder %s162, %s163
    %p172 = scmp.eq.s32.totalorder %s26, 0
    %p173 = por %p171, %p172
    %p174 = scmp.ne.s32.totalorder %s162, %s163
    %p175 = scmp.eq.s32.totalorder %s27, 1
    %p176 = por %p174, %p175
    %p178 = scmp.ne.s32.totalorder %s163, %s177
    %p179 = scmp.eq.s32.totalorder %s27, 0
    %p180 = por %p178, %p179
    %s182 = sadd.s32 %s181, 1
    %p185 = scmp.eq.s32.totalorder %s21, 1
    %p186 = scmp.ne.s32.totalorder %s181, %s183
    %p187 = scmp.eq.s32.totalorder %s21, 0
    %p188 = por %p186, %p187
    %p189 = scmp.ne.s32.totalorder %s181, %s183
    %p190 = scmp.eq.s32.totalorder %s26, 1
    %p191 = por %p189, %p190
    %p192 = scmp.ne.s32.totalorder %s183, %s184
    %p193 = scmp.eq.s32.totalorder %s26, 0
    %p194 = por %p192, %p193
    %p195 = scmp.ne.s32.totalorder %s183, %s184
    %p196 = scmp.eq.s32.totalorder %s27, 1
    %p197 = por %p195, %p196
    %p199 = scmp.ne.s32.totalorder %s184, %s198
    %p200 = scmp.eq.s32.totalorder %s27, 0
    %p201 = por %p199, %p200
    %s203 = sadd.s32 %s202, 1
    %p206 = scmp.eq.s32.totalorder %s21, 1
    %p207 = scmp.ne.s32.totalorder %s202, %s204
    %p208 = scmp.eq.s32.totalorder %s21, 0
    %p209 = por %p207, %p208
    %p210 = scmp.ne.s32.totalorder %s202, %s204
    %p211 = scmp.eq.s32.totalorder %s26, 1
    %p212 = por %p210, %p211
    %p213 = scmp.ne.s32.totalorder %s204, %s205
    %p214 = scmp.eq.s32.totalorder %s26, 0
    %p215 = por %p213, %p214
    %p216 = scmp.ne.s32.totalorder %s204, %s205
    %p217 = scmp.eq.s32.totalorder %s27, 1
    %p218 = por %p216, %p217
    %p220 = scmp.ne.s32.totalorder %s205, %s219
    %p221 = scmp.eq.s32.totalorder %s27, 0
    %p222 = por %p220, %p221
    %s224 = sadd.s32 %s223, 1
    %p227 = scmp.eq.s32.totalorder %s21, 1
    %p228 = scmp.ne.s32.totalorder %s223, %s225
    %p229 = scmp.eq.s32.totalorder %s21, 0
    %p230 = por %p228, %p229
    %p231 = scmp.ne.s32.totalorder %s223, %s225
    %p232 = scmp.eq.s32.totalorder %s26, 1
    %p233 = por %p231, %p232
    %p234 = scmp.ne.s32.totalorder %s225, %s226
    %p235 = scmp.eq.s32.totalorder %s26, 0
    %p236 = por %p234, %p235
    %p237 = scmp.ne.s32.totalorder %s225, %s226
    %p238 = scmp.eq.s32.totalorder %s27, 1
    %p239 = por %p237, %p238
    %p241 = scmp.ne.s32.totalorder %s226, %s240
    %p242 = scmp.eq.s32.totalorder %s27, 0
    %p243 = por %p241, %p242
    %s245 = sadd.s32 %s244, 1
    %p248 = scmp.eq.s32.totalorder %s21, 1
    %p249 = scmp.ne.s32.totalorder %s244, %s246
    %p250 = scmp.eq.s32.totalorder %s21, 0
    %p251 = por %p249, %p250
    %p252 = scmp.ne.s32.totalorder %s244, %s246
    %p253 = scmp.eq.s32.totalorder %s26, 1
    %p254 = por %p252, %p253
    %p255 = scmp.ne.s32.totalorder %s246, %s247
    %p256 = scmp.eq.s32.totalorder %s26, 0
    %p257 = por %p255, %p256
    %p258 = scmp.ne.s32.totalorder %s246, %s247
    %p259 = scmp.eq.s32.totalorder %s27, 1
    %p260 = por %p258, %p259
    %p262 = scmp.ne.s32.totalorder %s247, %s261
    %p263 = scmp.eq.s32.totalorder %s27, 0
    %p264 = por %p262, %p263
    %s266 = sadd.s32 %s265, 1
    %p269 = scmp.eq.s32.totalorder %s21, 1
    %p270 = scmp.ne.s32.totalorder %s265, %s267
    %p271 = scmp.eq.s32.totalorder %s21, 0
    %p272 = por %p270, %p271
    %p273 = scmp.ne.s32.totalorder %s265, %s267
    %p274 = scmp.eq.s32.totalorder %s26, 1
    %p275 = por %p273, %p274
    %p276 = scmp.ne.s32.totalorder %s267, %s268
    %p277 = scmp.eq.s32.totalorder %s26, 0
    %p278 = por %p276, %p277
    %p279 = scmp.ne.s32.totalorder %s267, %s268
    %p280 = scmp.eq.s32.totalorder %s27, 1
    %p281 = por %p279, %p280
    %p283 = scmp.ne.s32.totalorder %s268, %s282
    %p284 = scmp.eq.s32.totalorder %s27, 0
    %p285 = por %p283, %p284
    %s287 = sadd.s32 %s286, 1
    %p290 = scmp.eq.s32.totalorder %s21, 1
    %p291 = scmp.ne.s32.totalorder %s286, %s288
    %p292 = scmp.eq.s32.totalorder %s21, 0
    %p293 = por %p291, %p292
    %p294 = scmp.ne.s32.totalorder %s286, %s288
    %p295 = scmp.eq.s32.totalorder %s26, 1
    %p296 = por %p294, %p295
    %p297 = scmp.ne.s32.totalorder %s288, %s289
    %p298 = scmp.eq.s32.totalorder %s26, 0
    %p299 = por %p297, %p298
    %p300 = scmp.ne.s32.totalorder %s288, %s289
    %p301 = scmp.eq.s32.totalorder %s27, 1
    %p302 = por %p300, %p301
    %p304 = scmp.ne.s32.totalorder %s289, %s303
    %p305 = scmp.eq.s32.totalorder %s27, 0
    %p306 = por %p304, %p305
    %s308 = sadd.s32 %s307, 1
    %p311 = scmp.eq.s32.totalorder %s21, 1
    %p312 = scmp.ne.s32.totalorder %s307, %s309
    %p313 = scmp.eq.s32.totalorder %s21, 0
    %p314 = por %p312, %p313
    %p315 = scmp.ne.s32.totalorder %s307, %s309
    %p316 = scmp.eq.s32.totalorder %s26, 1
    %p317 = por %p315, %p316
    %p318 = scmp.ne.s32.totalorder %s309, %s310
    %p319 = scmp.eq.s32.totalorder %s26, 0
    %p320 = por %p318, %p319
    %p321 = scmp.ne.s32.totalorder %s309, %s310
    %p322 = scmp.eq.s32.totalorder %s27, 1
    %p323 = por %p321, %p322
    %p325 = scmp.ne.s32.totalorder %s310, %s324
    %p326 = scmp.eq.s32.totalorder %s27, 0
    %p327 = por %p325, %p326
    %s329 = sadd.s32 %s328, 1
    %p332 = scmp.eq.s32.totalorder %s21, 1
    %p333 = scmp.ne.s32.totalorder %s328, %s330
    %p334 = scmp.eq.s32.totalorder %s21, 0
    %p335 = por %p333, %p334
    %p336 = scmp.ne.s32.totalorder %s328, %s330
    %p337 = scmp.eq.s32.totalorder %s26, 1
    %p338 = por %p336, %p337
    %p339 = scmp.ne.s32.totalorder %s330, %s331
    %p340 = scmp.eq.s32.totalorder %s26, 0
    %p341 = por %p339, %p340
    %p342 = scmp.ne.s32.totalorder %s330, %s331
    %p343 = scmp.eq.s32.totalorder %s27, 1
    %p344 = por %p342, %p343
    %p346 = scmp.ne.s32.totalorder %s331, %s345
    %p347 = scmp.eq.s32.totalorder %s27, 0
    %p348 = por %p346, %p347
    %s349 = ssub.s32 %s21, %s28
    %p350 = scmp.eq.s32.totalorder %s349, 0
    %s352 = sadd.s32 %s351, 1
    %s353 = scalar_select %p350, %s351, %s352
    %p356 = pneg %p350
    %p357 = scmp.eq.s32.totalorder %s21, 1
    %p358 = por %p356, %p357
    %p359 = scmp.ne.s32.totalorder %s351, %s354
    %p360 = scmp.eq.s32.totalorder %s21, 0
    %p361 = por %p359, %p360
    %p362 = scmp.ne.s32.totalorder %s351, %s354
    %p363 = scmp.eq.s32.totalorder %s26, 1
    %p364 = por %p362, %p363
    %p365 = scmp.ne.s32.totalorder %s354, %s355
    %p366 = scmp.eq.s32.totalorder %s26, 0
    %p367 = por %p365, %p366
    %p368 = scmp.ne.s32.totalorder %s354, %s355
    %p369 = scmp.eq.s32.totalorder %s27, 1
    %p370 = por %p368, %p369
    %p372 = scmp.ne.s32.totalorder %s355, %s371
    %p373 = scmp.eq.s32.totalorder %s27, 0
    %p374 = por %p372, %p373
    %p375 = scmp.le.s32.totalorder 1, %s21
    %p376 = scmp.lt.s32.totalorder %s21, 3
    %p377 = pnand %p375, %p376
    %p378 = pneg %p377
    // Predicated region
    $region9: #{_lambda_.7} parent=5 // pred_check
      _
    $region10: #{_lambda_.7} parent=5 // pred_check_branch
      %380 = sbr.rel (%p377) target = $region12
    $region11: #{_lambda_.7} parent=5 // pred_region
      %s381 = ssub.s32 %s21, 1
      // Predicated region
      $region13: #{_lambda_.7} parent=11 // pred_check
        %p382 = pneg %p68
      $region14: #{_lambda_.7} parent=11 // pred_check_branch
        %384 = sbr.rel (%p382) target = $region16
      $region15: #{_lambda_.7} parent=11 // pred_region
        _
      $region16: #{_lambda_.7} parent=11 // pred_fallthru
        _
      // Predicated region
      $region17: #{_lambda_.7} parent=11 // pred_check
        %p385 = pneg %p89
      $region18: #{_lambda_.7} parent=11 // pred_check_branch
        %387 = sbr.rel (%p385) target = $region20
      $region19: #{_lambda_.7} parent=11 // pred_region
        _
      $region20: #{_lambda_.7} parent=11 // pred_fallthru
        _
      // Predicated region
      $region21: #{_lambda_.7} parent=11 // pred_check
        %p388 = pneg %p110
      $region22: #{_lambda_.7} parent=11 // pred_check_branch
        %390 = sbr.rel (%p388) target = $region24
      $region23: #{_lambda_.7} parent=11 // pred_region
        _
      $region24: #{_lambda_.7} parent=11 // pred_fallthru
        _
      // Predicated region
      $region25: #{_lambda_.7} parent=11 // pred_check
        %p391 = pneg %p131
      $region26: #{_lambda_.7} parent=11 // pred_check_branch
        %393 = sbr.rel (%p391) target = $region28
      $region27: #{_lambda_.7} parent=11 // pred_region
        _
      $region28: #{_lambda_.7} parent=11 // pred_fallthru
        _
      // Predicated region
      $region29: #{_lambda_.7} parent=11 // pred_check
        %p394 = pneg %p152
      $region30: #{_lambda_.7} parent=11 // pred_check_branch
        %396 = sbr.rel (%p394) target = $region32
      $region31: #{_lambda_.7} parent=11 // pred_region
        _
      $region32: #{_lambda_.7} parent=11 // pred_fallthru
        _
      // Predicated region
      $region33: #{_lambda_.7} parent=11 // pred_check
        %p397 = pneg %p173
      $region34: #{_lambda_.7} parent=11 // pred_check_branch
        %399 = sbr.rel (%p397) target = $region36
      $region35: #{_lambda_.7} parent=11 // pred_region
        _
      $region36: #{_lambda_.7} parent=11 // pred_fallthru
        _
      // Predicated region
      $region37: #{_lambda_.7} parent=11 // pred_check
        %p400 = pneg %p194
      $region38: #{_lambda_.7} parent=11 // pred_check_branch
        %402 = sbr.rel (%p400) target = $region40
      $region39: #{_lambda_.7} parent=11 // pred_region
        _
      $region40: #{_lambda_.7} parent=11 // pred_fallthru
        _
      // Predicated region
      $region41: #{_lambda_.7} parent=11 // pred_check
        %p403 = pneg %p215
      $region42: #{_lambda_.7} parent=11 // pred_check_branch
        %405 = sbr.rel (%p403) target = $region44
      $region43: #{_lambda_.7} parent=11 // pred_region
        _
      $region44: #{_lambda_.7} parent=11 // pred_fallthru
        _
      // Predicated region
      $region45: #{_lambda_.7} parent=11 // pred_check
        %p406 = pneg %p236
      $region46: #{_lambda_.7} parent=11 // pred_check_branch
        %408 = sbr.rel (%p406) target = $region48
      $region47: #{_lambda_.7} parent=11 // pred_region
        _
      $region48: #{_lambda_.7} parent=11 // pred_fallthru
        _
      // Predicated region
      $region49: #{_lambda_.7} parent=11 // pred_check
        %p409 = pneg %p257
      $region50: #{_lambda_.7} parent=11 // pred_check_branch
        %411 = sbr.rel (%p409) target = $region52
      $region51: #{_lambda_.7} parent=11 // pred_region
        _
      $region52: #{_lambda_.7} parent=11 // pred_fallthru
        _
      // Predicated region
      $region53: #{_lambda_.7} parent=11 // pred_check
        %p412 = pneg %p278
      $region54: #{_lambda_.7} parent=11 // pred_check_branch
        %414 = sbr.rel (%p412) target = $region56
      $region55: #{_lambda_.7} parent=11 // pred_region
        _
      $region56: #{_lambda_.7} parent=11 // pred_fallthru
        _
      // Predicated region
      $region57: #{_lambda_.7} parent=11 // pred_check
        %p415 = pneg %p299
      $region58: #{_lambda_.7} parent=11 // pred_check_branch
        %417 = sbr.rel (%p415) target = $region60
      $region59: #{_lambda_.7} parent=11 // pred_region
        _
      $region60: #{_lambda_.7} parent=11 // pred_fallthru
        _
      // Predicated region
      $region61: #{_lambda_.7} parent=11 // pred_check
        %p418 = pneg %p320
      $region62: #{_lambda_.7} parent=11 // pred_check_branch
        %420 = sbr.rel (%p418) target = $region64
      $region63: #{_lambda_.7} parent=11 // pred_region
        _
      $region64: #{_lambda_.7} parent=11 // pred_fallthru
        _
      // Predicated region
      $region65: #{_lambda_.7} parent=11 // pred_check
        %p421 = pneg %p341
      $region66: #{_lambda_.7} parent=11 // pred_check_branch
        %423 = sbr.rel (%p421) target = $region68
      $region67: #{_lambda_.7} parent=11 // pred_region
        _
      $region68: #{_lambda_.7} parent=11 // pred_fallthru
        _
    $region12: #{_lambda_.7} parent=5 // pred_fallthru
      _
    %p424 = scmp.lt.s32.totalorder %s21, 2
    // Predicated region
    $region69: #{_lambda_.7} parent=5 // pred_check
      %p425 = pneg %p424
    $region70: #{_lambda_.7} parent=5 // pred_check_branch
      %427 = sbr.rel (%p425) target = $region72
    $region71: #{_lambda_.7} parent=5 // pred_region
      // Predicated region
      $region73: #{_lambda_.7} parent=71 // pred_check
        %p428 = pneg %p41
      $region74: #{_lambda_.7} parent=71 // pred_check_branch
        %430 = sbr.rel (%p428) target = $region76
      $region75: #{_lambda_.7} parent=71 // pred_region
        %p431 = scmp.lt.s32.totalorder %s21, 1
        %s432 = scalar_select %p431, %s21, 1
        %s433 = smul.addr %s432, 8
        %s434 = scalar_lea.vmem %s0, %s433
      $region76: #{_lambda_.7} parent=71 // pred_fallthru
        _
    $region72: #{_lambda_.7} parent=5 // pred_fallthru
      _
    %p435 = scmp.le.s32.totalorder 1, %s21
    %p436 = scmp.lt.s32.totalorder %s21, 3
    %p437 = pnand %p435, %p436
    %p438 = pneg %p437
    // Predicated region
    $region77: #{_lambda_.7} parent=5 // pred_check
      _
    $region78: #{_lambda_.7} parent=5 // pred_check_branch
      %440 = sbr.rel (%p437) target = $region80
    $region79: #{_lambda_.7} parent=5 // pred_region
      %s441 = ssub.s32 %s21, 1
      %p442 = scmp.lt.s32.totalorder %s26, 1
      %s443 = scalar_select %p442, %s26, 1
      %s444 = smul.addr %s443, 8
      %s445 = scalar_lea.vmem %s0, %s444
      %p446 = pneg %p47
      %p447 = pneg %p44
      %p448 = pneg %p68
      %p449 = pneg %p65
      %p450 = pneg %p89
      %p451 = pneg %p86
      %p452 = pneg %p110
      %p453 = pneg %p107
      %p454 = pneg %p131
      %p455 = pneg %p128
      %p456 = pneg %p152
      %p457 = pneg %p149
      %p458 = pneg %p173
      %p459 = pneg %p170
      %p460 = pneg %p194
      %p461 = pneg %p191
      %p462 = pneg %p215
      %p463 = pneg %p212
      %p464 = pneg %p236
      %p465 = pneg %p233
      %p466 = pneg %p257
      %p467 = pneg %p254
      %p468 = pneg %p278
      %p469 = pneg %p275
      %p470 = pneg %p299
      %p471 = pneg %p296
      %p472 = pneg %p320
      %p473 = pneg %p317
      %p474 = pneg %p341
      %p475 = pneg %p338
      %p476 = pneg %p367
      %p477 = pneg %p364
      %p478 = scmp.lt.s32.totalorder %s26, 1
      %s479 = scalar_select %p478, %s26, 1
      %s480 = smul.addr %s479, 8
      %s481 = scalar_lea.vmem %s15, %s480
      %p482 = scmp.lt.s32.totalorder %s26, 1
      %s483 = scalar_select %p482, %s26, 1
      %s484 = smul.addr %s483, 8
      %s485 = scalar_lea.vmem %s0, %s484
      %p486 = scmp.lt.s32.totalorder %s26, 1
      %s487 = scalar_select %p486, %s26, 1
      %s488 = smul.addr %s487, 8
      %s489 = scalar_lea.vmem %s15, %s488
      %v490 = vld [vmem:[%s485] sm:$0x1f]
      %vm491 = vcmask 1044480
      %v492 = vsel %vm491, %v490, 0.0
      %493 = vadd.xlane.f32.xlu0 %v492
      %v494 = vpop.xlane.xlu0 %493
      %v495 = vrcp.pop 128.0
      %v496 = vmul.f32 %v494, %v495
      %v497 = vsub.f32 %v490, %v496
      %v498 = vmul.f32 %v497, %v497
      %v499 = vsel %vm491, %v498, 0.0
      %500 = vadd.xlane.f32.xlu0 %v499
      %v501 = vpop.xlane.xlu0 %500
      %v502 = vmul.f32 %v501, %v495
      %v503 = vadd.f32 %v502, 1e-05
      %v504 = vrsqrt.pop %v503
      %v505 = vmul.f32 %v497, %v504
      %v506 = vld [vmem:[%s1] sm:$0x1]
      %v508 = vlaneseq
      %v509 = vshrl.u32 %v508, 7
      %v510 = vsub.s32 0, %v509
      %v511 = vrot.slane %v506, %v510
      %v513 = vmul.f32 %v505, %v511
      %v514 = vld [vmem:[%s2] sm:$0x1]
      %v516 = vlaneseq
      %v517 = vshrl.u32 %v516, 7
      %v518 = vsub.s32 0, %v517
      %v519 = vrot.slane %v514, %v518
      %v521 = vadd.f32 %v513, %v519
      %v522 = vld [vmem:[%s3] sm:$0xff]
      %v523 = vld [vmem:[%s3 + $0x8] sm:$0xff]
      %v524 = vld [vmem:[%s3 + $0x10] sm:$0xff]
      %v525 = vld [vmem:[%s3 + $0x18] sm:$0xff]
      %v526 = vld [vmem:[%s3 + $0x20] sm:$0xff]
      %v527 = vld [vmem:[%s3 + $0x28] sm:$0xff]
      %v528 = vld [vmem:[%s3 + $0x30] sm:$0xff]
      %v529 = vld [vmem:[%s3 + $0x38] sm:$0xff]
      %v530 = vld [vmem:[%s3 + $0x40] sm:$0xff]
      %v531 = vld [vmem:[%s3 + $0x48] sm:$0xff]
      %v532 = vld [vmem:[%s3 + $0x50] sm:$0xff]
      %v533 = vld [vmem:[%s3 + $0x58] sm:$0xff]
      %v534 = vld [vmem:[%s3 + $0x60] sm:$0xff]
      %v535 = vld [vmem:[%s3 + $0x68] sm:$0xff]
      %v536 = vld [vmem:[%s3 + $0x70] sm:$0xff]
      %v537 = vld [vmem:[%s3 + $0x78] sm:$0xff]
      %v538 = vld [vmem:[%s3 + $0x80] sm:$0xff]
      %v539 = vld [vmem:[%s3 + $0x88] sm:$0xff]
      %v540 = vld [vmem:[%s3 + $0x90] sm:$0xff]
      %v541 = vld [vmem:[%s3 + $0x98] sm:$0xff]
      %v542 = vld [vmem:[%s3 + $0xa0] sm:$0xff]
      %v543 = vld [vmem:[%s3 + $0xa8] sm:$0xff]
      %v544 = vld [vmem:[%s3 + $0xb0] sm:$0xff]
      %v545 = vld [vmem:[%s3 + $0xb8] sm:$0xff]
      %v546 = vld [vmem:[%s3 + $0xc0] sm:$0xff]
      %v547 = vld [vmem:[%s3 + $0xc8] sm:$0xff]
      %v548 = vld [vmem:[%s3 + $0xd0] sm:$0xff]
      %v549 = vld [vmem:[%s3 + $0xd8] sm:$0xff]
      %v550 = vld [vmem:[%s3 + $0xe0] sm:$0xff]
      %v551 = vld [vmem:[%s3 + $0xe8] sm:$0xff]
      %v552 = vld [vmem:[%s3 + $0xf0] sm:$0xff]
      %v553 = vld [vmem:[%s3 + $0xf8] sm:$0xff]
      %v554 = vld [vmem:[%s3 + $0x100] sm:$0xff]
      %v555 = vld [vmem:[%s3 + $0x108] sm:$0xff]
      %v556 = vld [vmem:[%s3 + $0x110] sm:$0xff]
      %v557 = vld [vmem:[%s3 + $0x118] sm:$0xff]
      %v558 = vld [vmem:[%s3 + $0x120] sm:$0xff]
      %v559 = vld [vmem:[%s3 + $0x128] sm:$0xff]
      %v560 = vld [vmem:[%s3 + $0x130] sm:$0xff]
      %v561 = vld [vmem:[%s3 + $0x138] sm:$0xff]
      %v562 = vld [vmem:[%s3 + $0x140] sm:$0xff]
      %v563 = vld [vmem:[%s3 + $0x148] sm:$0xff]
      %v564 = vld [vmem:[%s3 + $0x150] sm:$0xff]
      %v565 = vld [vmem:[%s3 + $0x158] sm:$0xff]
      %v566 = vld [vmem:[%s3 + $0x160] sm:$0xff]
      %v567 = vld [vmem:[%s3 + $0x168] sm:$0xff]
      %v568 = vld [vmem:[%s3 + $0x170] sm:$0xff]
      %v569 = vld [vmem:[%s3 + $0x178] sm:$0xff]
      %v570 = vld [vmem:[%s4] sm:$0x7]
      %v572 = vlaneseq
      %v573 = vshrl.u32 %v572, 7
      %v574 = vsub.s32 0, %v573
      %v575 = vrot.slane %v570, %v574
      %v576 = vlaneseq
      %v577 = vshrl.u32 %v576, 7
      %v578 = vsub.s32 1, %v577
      %v579 = vrot.slane %v570, %v578
      %v580 = vlaneseq
      %v581 = vshrl.u32 %v580, 7
      %v582 = vsub.s32 2, %v581
      %v583 = vrot.slane %v570, %v582
      %587 = vmatprep.subr.mxu0 %v523
      %588 = vmatpush1.msra.mxu0 %v522
      %589 = vmatprep.subr.mxu0 %v526
      %590 = vmatpush1.msra.mxu0 %v525
      %591 = vmatprep.subr.mxu0 %v529
      %592 = vmatpush1.msra.mxu0 %v528
      %593 = vmatprep.subr.mxu0 %v532
      %594 = vmatpush1.msra.mxu0 %v531
      %595 = vmatprep.subr.mxu0 %v535
      %596 = vmatpush1.msra.mxu0 %v534
      %597 = vmatprep.subr.mxu0 %v538
      %598 = vmatpush1.msra.mxu0 %v537
      %599 = vmatprep.subr.mxu0 %v541
      %600 = vmatpush1.msra.mxu0 %v540
      %601 = vmatprep.subr.mxu0 %v544
      %602 = vmatpush1.msra.mxu0 %v543
      %603 = vmatprep.subr.mxu0 %v547
      %604 = vmatpush1.msra.mxu0 %v546
      %605 = vmatprep.subr.mxu0 %v550
      %606 = vmatpush1.msra.mxu0 %v549
      %607 = vmatprep.subr.mxu0 %v553
      %608 = vmatpush1.msra.mxu0 %v552
      %609 = vmatprep.subr.mxu0 %v556
      %610 = vmatpush1.msra.mxu0 %v555
      %611 = vmatprep.subr.mxu0 %v559
      %612 = vmatpush1.msra.mxu0 %v558
      %613 = vmatprep.subr.mxu0 %v562
      %614 = vmatpush1.msra.mxu0 %v561
      %615 = vmatprep.subr.mxu0 %v565
      %616 = vmatpush1.msra.mxu0 %v564
      %617 = vmatprep.subr.mxu0 %v568
      %618 = vmatpush1.msra.mxu0 %v567
      %619 = vmatprep.subr.mxu0 0.0
      %620 = vmatpush1.msra.mxu0 0.0
      %621 = vmatprep.subr.mxu0 0.0
      %622 = vmatpush1.msra.mxu0 0.0
      %623 = vmatprep.subr.mxu0 0.0
      %624 = vmatpush1.msra.mxu0 0.0
      %625 = vmatprep.subr.mxu0 0.0
      %626 = vmatpush1.msra.mxu0 0.0
      %627 = vmatprep.subr.mxu0 0.0
      %628 = vmatpush1.msra.mxu0 0.0
      %629 = vmatprep.subr.mxu0 0.0
      %630 = vmatpush1.msra.mxu0 0.0
      %631 = vmatprep.subr.mxu0 0.0
      %632 = vmatpush1.msra.mxu0 0.0
      %633 = vmatprep.subr.mxu0 0.0
      %634 = vmatpush1.msra.mxu0 0.0
      %635 = vmatprep.subr.mxu0 0.0
      %636 = vmatpush1.msra.mxu0 0.0
      %637 = vmatprep.subr.mxu0 0.0
      %638 = vmatpush1.msra.mxu0 0.0
      %639 = vmatprep.subr.mxu0 0.0
      %640 = vmatpush1.msra.mxu0 0.0
      %641 = vmatprep.subr.mxu0 0.0
      %642 = vmatpush1.msra.mxu0 0.0
      %643 = vmatprep.subr.mxu0 0.0
      %644 = vmatpush1.msra.mxu0 0.0
      %645 = vmatprep.subr.mxu0 0.0
      %646 = vmatpush1.msra.mxu0 0.0
      %647 = vmatprep.subr.mxu0 0.0
      %648 = vmatpush1.msra.mxu0 0.0
      %649 = vmatprep.subr.mxu0 0.0
      %650 = vmatpush1.msra.mxu0 0.0
      %651 = vmatprep.mubr.f32.mxu0 0.0
      %652 = vmatmul.mubr.f32.gmra.mrb[0].mxu0 %v521
      %v653 = vpop.f32.mrb[0].mxu0
      %v654 = vadd.f32 %v575, %v653
      %v655 = vpop.f32.mrb[0].mxu0
      %v656 = vadd.f32 %v579, %v655
      %657 = vdwg.mxu0
      %658 = vmatprep.subr.mxu0 0.0
      %659 = vmatpush1.msra.mxu0 %v524
      %660 = vmatprep.subr.mxu0 0.0
      %661 = vmatpush1.msra.mxu0 %v527
      %662 = vmatprep.subr.mxu0 0.0
      %663 = vmatpush1.msra.mxu0 %v530
      %664 = vmatprep.subr.mxu0 0.0
      %665 = vmatpush1.msra.mxu0 %v533
      %666 = vmatprep.subr.mxu0 0.0
      %667 = vmatpush1.msra.mxu0 %v536
      %668 = vmatprep.subr.mxu0 0.0
      %669 = vmatpush1.msra.mxu0 %v539
      %670 = vmatprep.subr.mxu0 0.0
      %671 = vmatpush1.msra.mxu0 %v542
      %672 = vmatprep.subr.mxu0 0.0
      %673 = vmatpush1.msra.mxu0 %v545
      %674 = vmatprep.subr.mxu0 0.0
      %675 = vmatpush1.msra.mxu0 %v548
      %676 = vmatprep.subr.mxu0 0.0
      %677 = vmatpush1.msra.mxu0 %v551
      %678 = vmatprep.subr.mxu0 0.0
      %679 = vmatpush1.msra.mxu0 %v554
      %680 = vmatprep.subr.mxu0 0.0
      %681 = vmatpush1.msra.mxu0 %v557
      %682 = vmatprep.subr.mxu0 0.0
      %683 = vmatpush1.msra.mxu0 %v560
      %684 = vmatprep.subr.mxu0 0.0
      %685 = vmatpush1.msra.mxu0 %v563
      %686 = vmatprep.subr.mxu0 0.0
      %687 = vmatpush1.msra.mxu0 %v566
      %688 = vmatprep.subr.mxu0 0.0
      %689 = vmatpush1.msra.mxu0 %v569
      %690 = vmatprep.subr.mxu0 0.0
      %691 = vmatpush1.msra.mxu0 0.0
      %692 = vmatprep.subr.mxu0 0.0
      %693 = vmatpush1.msra.mxu0 0.0
      %694 = vmatprep.subr.mxu0 0.0
      %695 = vmatpush1.msra.mxu0 0.0
      %696 = vmatprep.subr.mxu0 0.0
      %697 = vmatpush1.msra.mxu0 0.0
      %698 = vmatprep.subr.mxu0 0.0
      %699 = vmatpush1.msra.mxu0 0.0
      %700 = vmatprep.subr.mxu0 0.0
      %701 = vmatpush1.msra.mxu0 0.0
      %702 = vmatprep.subr.mxu0 0.0
      %703 = vmatpush1.msra.mxu0 0.0
      %704 = vmatprep.subr.mxu0 0.0
      %705 = vmatpush1.msra.mxu0 0.0
      %706 = vmatprep.subr.mxu0 0.0
      %707 = vmatpush1.msra.mxu0 0.0
      %708 = vmatprep.subr.mxu0 0.0
      %709 = vmatpush1.msra.mxu0 0.0
      %710 = vmatprep.subr.mxu0 0.0
      %711 = vmatpush1.msra.mxu0 0.0
      %712 = vmatprep.subr.mxu0 0.0
      %713 = vmatpush1.msra.mxu0 0.0
      %714 = vmatprep.subr.mxu0 0.0
      %715 = vmatpush1.msra.mxu0 0.0
      %716 = vmatprep.subr.mxu0 0.0
      %717 = vmatpush1.msra.mxu0 0.0
      %718 = vmatprep.subr.mxu0 0.0
      %719 = vmatpush1.msra.mxu0 0.0
      %720 = vmatprep.subr.mxu0 0.0
      %721 = vmatpush1.msra.mxu0 0.0
      %722 = vmatprep.mubr.f32.mxu0 0.0
      %723 = vmatmul.mubr.f32.gmra.mrb[0].mxu0 %v521
      %v724 = vpop.f32.mrb[0].mxu0
      %v725 = vadd.f32 %v583, %v724
      %v726 = vpop.f32.mrb[0].mxu0
      %727 = vdwg.mxu0
      %vm728 = vcmask 261120
      %v730 = vsel %vm728, %v654, 0
      %v733 = vsel %vm728, %v656, 0
      %735 = vmatprep.subr.mxu0 0.0
      %736 = vmatpush1.xpose.msra.mxu0 %v733
      %737 = vmatprep.subr.mxu0 0.0
      %738 = vmatpush1.xpose.msra.mxu0 0.0
      %739 = vmatprep.subr.mxu0 0.0
      %740 = vmatpush1.xpose.msra.mxu0 0.0
      %741 = vmatprep.subr.mxu0 0.0
      %742 = vmatpush1.xpose.msra.mxu0 0.0
      %743 = vmatprep.subr.mxu0 0.0
      %744 = vmatpush1.xpose.msra.mxu0 0.0
      %745 = vmatprep.subr.mxu0 0.0
      %746 = vmatpush1.xpose.msra.mxu0 0.0
      %747 = vmatprep.subr.mxu0 0.0
      %748 = vmatpush1.xpose.msra.mxu0 0.0
      %749 = vmatprep.subr.mxu0 0.0
      %750 = vmatpush1.xpose.msra.mxu0 0.0
      %751 = vmatprep.subr.mxu0 0.0
      %752 = vmatpush1.xpose.msra.mxu0 0.0
      %753 = vmatprep.subr.mxu0 0.0
      %754 = vmatpush1.xpose.msra.mxu0 0.0
      %755 = vmatprep.subr.mxu0 0.0
      %756 = vmatpush1.xpose.msra.mxu0 0.0
      %757 = vmatprep.subr.mxu0 0.0
      %758 = vmatpush1.xpose.msra.mxu0 0.0
      %759 = vmatprep.subr.mxu0 0.0
      %760 = vmatpush1.xpose.msra.mxu0 0.0
      %761 = vmatprep.subr.mxu0 0.0
      %762 = vmatpush1.xpose.msra.mxu0 0.0
      %763 = vmatprep.subr.mxu0 0.0
      %764 = vmatpush1.xpose.msra.mxu0 0.0
      %765 = vmatprep.subr.mxu0 0.0
      %766 = vmatpush1.xpose.msra.mxu0 0.0
      %767 = vmatprep.subr.mxu0 0.0
      %768 = vmatpush1.xpose.msra.mxu0 0.0
      %769 = vmatprep.subr.mxu0 0.0
      %770 = vmatpush1.xpose.msra.mxu0 0.0
      %771 = vmatprep.subr.mxu0 0.0
      %772 = vmatpush1.xpose.msra.mxu0 0.0
      %773 = vmatprep.subr.mxu0 0.0
      %774 = vmatpush1.xpose.msra.mxu0 0.0
      %775 = vmatprep.subr.mxu0 0.0
      %776 = vmatpush1.xpose.msra.mxu0 0.0
      %777 = vmatprep.subr.mxu0 0.0
      %778 = vmatpush1.xpose.msra.mxu0 0.0
      %779 = vmatprep.subr.mxu0 0.0
      %780 = vmatpush1.xpose.msra.mxu0 0.0
      %781 = vmatprep.subr.mxu0 0.0
      %782 = vmatpush1.xpose.msra.mxu0 0.0
      %783 = vmatprep.subr.mxu0 0.0
      %784 = vmatpush1.xpose.msra.mxu0 0.0
      %785 = vmatprep.subr.mxu0 0.0
      %786 = vmatpush1.xpose.msra.mxu0 0.0
      %787 = vmatprep.subr.mxu0 0.0
      %788 = vmatpush1.xpose.msra.mxu0 0.0
      %789 = vmatprep.subr.mxu0 0.0
      %790 = vmatpush1.xpose.msra.mxu0 0.0
      %791 = vmatprep.subr.mxu0 0.0
      %792 = vmatpush1.xpose.msra.mxu0 0.0
      %793 = vmatprep.subr.mxu0 0.0
      %794 = vmatpush1.xpose.msra.mxu0 0.0
      %795 = vmatprep.subr.mxu0 0.0
      %796 = vmatpush1.xpose.msra.mxu0 0.0
      %797 = vmatprep.subr.mxu0 0.0
      %798 = vmatpush1.xpose.msra.mxu0 0.0
      %799 = vmatprep.mubr.f32.mxu0 0.0
      %800 = vmatmul.mubr.f32.gmra.mrb[0].mxu0 %v730
      %v801 = vpop.f32.mrb[0].mxu0
      %v802 = vadd.f32 0.0, %v801
      %v803 = vpop.f32.mrb[0].mxu0
      %804 = vdwg.mxu0
      %v805 = vmul.f32 %v802, 0.17677669
      %vm806 = vcmask 36864
      %v807 = vsel %vm806, %v805, -inf
      %808 = vmax.xlane.f32.xlu0 %v807
      %v809 = vpop.xlane.xlu0 %808
      %v810 = vsub.f32 %v805, %v809
      %v811 = vmul.f32 %v810, 1.442695
      %v812 = vpow.pop %v811
      %v813 = vsel %vm806, %v812, 0.0
      %814 = vadd.xlane.f32.xlu0 %v813
      %v815 = vpop.xlane.xlu0 %814
      %v816 = vrcp.pop %v815
      %v817 = vmul.f32 %v812, %v816
      %vm818 = vcmask 39936
      %v820 = vsel %vm818, %v817, 0
      %v823 = vsel %vm491, %v725, 0
      %825 = vmatprep.subr.mxu0 0.0
      %826 = vmatpush1.msra.mxu0 %v823
      %827 = vmatprep.subr.mxu0 0.0
      %828 = vmatpush1.msra.mxu0 0.0
      %829 = vmatprep.subr.mxu0 0.0
      %830 = vmatpush1.msra.mxu0 0.0
      %831 = vmatprep.subr.mxu0 0.0
      %832 = vmatpush1.msra.mxu0 0.0
      %833 = vmatprep.subr.mxu0 0.0
      %834 = vmatpush1.msra.mxu0 0.0
      %835 = vmatprep.subr.mxu0 0.0
      %836 = vmatpush1.msra.mxu0 0.0
      %837 = vmatprep.subr.mxu0 0.0
      %838 = vmatpush1.msra.mxu0 0.0
      %839 = vmatprep.subr.mxu0 0.0
      %840 = vmatpush1.msra.mxu0 0.0
      %841 = vmatprep.subr.mxu0 0.0
      %842 = vmatpush1.msra.mxu0 0.0
      %843 = vmatprep.subr.mxu0 0.0
      %844 = vmatpush1.msra.mxu0 0.0
      %845 = vmatprep.subr.mxu0 0.0
      %846 = vmatpush1.msra.mxu0 0.0
      %847 = vmatprep.subr.mxu0 0.0
      %848 = vmatpush1.msra.mxu0 0.0
      %849 = vmatprep.subr.mxu0 0.0
      %850 = vmatpush1.msra.mxu0 0.0
      %851 = vmatprep.subr.mxu0 0.0
      %852 = vmatpush1.msra.mxu0 0.0
      %853 = vmatprep.subr.mxu0 0.0
      %854 = vmatpush1.msra.mxu0 0.0
      %855 = vmatprep.subr.mxu0 0.0
      %856 = vmatpush1.msra.mxu0 0.0
      %857 = vmatprep.subr.mxu0 0.0
      %858 = vmatpush1.msra.mxu0 0.0
      %859 = vmatprep.subr.mxu0 0.0
      %860 = vmatpush1.msra.mxu0 0.0
      %861 = vmatprep.subr.mxu0 0.0
      %862 = vmatpush1.msra.mxu0 0.0
      %863 = vmatprep.subr.mxu0 0.0
      %864 = vmatpush1.msra.mxu0 0.0
      %865 = vmatprep.subr.mxu0 0.0
      %866 = vmatpush1.msra.mxu0 0.0
      %867 = vmatprep.subr.mxu0 0.0
      %868 = vmatpush1.msra.mxu0 0.0
      %869 = vmatprep.subr.mxu0 0.0
      %870 = vmatpush1.msra.mxu0 0.0
      %871 = vmatprep.subr.mxu0 0.0
      %872 = vmatpush1.msra.mxu0 0.0
      %873 = vmatprep.subr.mxu0 0.0
      %874 = vmatpush1.msra.mxu0 0.0
      %875 = vmatprep.subr.mxu0 0.0
      %876 = vmatpush1.msra.mxu0 0.0
      %877 = vmatprep.subr.mxu0 0.0
      %878 = vmatpush1.msra.mxu0 0.0
      %879 = vmatprep.subr.mxu0 0.0
      %880 = vmatpush1.msra.mxu0 0.0
      %881 = vmatprep.subr.mxu0 0.0
      %882 = vmatpush1.msra.mxu0 0.0
      %883 = vmatprep.subr.mxu0 0.0
      %884 = vmatpush1.msra.mxu0 0.0
      %885 = vmatprep.subr.mxu0 0.0
      %886 = vmatpush1.msra.mxu0 0.0
      %887 = vmatprep.subr.mxu0 0.0
      %888 = vmatpush1.msra.mxu0 0.0
      %889 = vmatprep.mubr.f32.mxu0 0.0
      %890 = vmatmul.mubr.f32.gmra.mrb[0].mxu0 %v820
      %v891 = vpop.f32.mrb[0].mxu0
      %v892 = vadd.f32 0.0, %v891
      %v893 = vpop.f32.mrb[0].mxu0
      %894 = vdwg.mxu0
      %895 = vrot.lane.b32.xlu0 %v654, 96
      %v896 = vpop.permute.xlu0 %895
      %897 = vrot.lane.b32.xlu0 %v656, 96
      %v898 = vpop.permute.xlu0 %897
      %v899 = vsel %vm728, %v896, 0
      %v901 = vsel %vm728, %v898, 0
      %903 = vmatprep.subr.mxu0 0.0
      %904 = vmatpush1.xpose.msra.mxu0 %v901
      %905 = vmatprep.subr.mxu0 0.0
      %906 = vmatpush1.xpose.msra.mxu0 0.0
      %907 = vmatprep.subr.mxu0 0.0
      %908 = vmatpush1.xpose.msra.mxu0 0.0
      %909 = vmatprep.subr.mxu0 0.0
      %910 = vmatpush1.xpose.msra.mxu0 0.0
      %911 = vmatprep.subr.mxu0 0.0
      %912 = vmatpush1.xpose.msra.mxu0 0.0
      %913 = vmatprep.subr.mxu0 0.0
      %914 = vmatpush1.xpose.msra.mxu0 0.0
      %915 = vmatprep.subr.mxu0 0.0
      %916 = vmatpush1.xpose.msra.mxu0 0.0
      %917 = vmatprep.subr.mxu0 0.0
      %918 = vmatpush1.xpose.msra.mxu0 0.0
      %919 = vmatprep.subr.mxu0 0.0
      %920 = vmatpush1.xpose.msra.mxu0 0.0
      %921 = vmatprep.subr.mxu0 0.0
      %922 = vmatpush1.xpose.msra.mxu0 0.0
      %923 = vmatprep.subr.mxu0 0.0
      %924 = vmatpush1.xpose.msra.mxu0 0.0
      %925 = vmatprep.subr.mxu0 0.0
      %926 = vmatpush1.xpose.msra.mxu0 0.0
      %927 = vmatprep.subr.mxu0 0.0
      %928 = vmatpush1.xpose.msra.mxu0 0.0
      %929 = vmatprep.subr.mxu0 0.0
      %930 = vmatpush1.xpose.msra.mxu0 0.0
      %931 = vmatprep.subr.mxu0 0.0
      %932 = vmatpush1.xpose.msra.mxu0 0.0
      %933 = vmatprep.subr.mxu0 0.0
      %934 = vmatpush1.xpose.msra.mxu0 0.0
      %935 = vmatprep.subr.mxu0 0.0
      %936 = vmatpush1.xpose.msra.mxu0 0.0
      %937 = vmatprep.subr.mxu0 0.0
      %938 = vmatpush1.xpose.msra.mxu0 0.0
      %939 = vmatprep.subr.mxu0 0.0
      %940 = vmatpush1.xpose.msra.mxu0 0.0
      %941 = vmatprep.subr.mxu0 0.0
      %942 = vmatpush1.xpose.msra.mxu0 0.0
      %943 = vmatprep.subr.mxu0 0.0
      %944 = vmatpush1.xpose.msra.mxu0 0.0
      %945 = vmatprep.subr.mxu0 0.0
      %946 = vmatpush1.xpose.msra.mxu0 0.0
      %947 = vmatprep.subr.mxu0 0.0
      %948 = vmatpush1.xpose.msra.mxu0 0.0
      %949 = vmatprep.subr.mxu0 0.0
      %950 = vmatpush1.xpose.msra.mxu0 0.0
      %951 = vmatprep.subr.mxu0 0.0
      %952 = vmatpush1.xpose.msra.mxu0 0.0
      %953 = vmatprep.subr.mxu0 0.0
      %954 = vmatpush1.xpose.msra.mxu0 0.0
      %955 = vmatprep.subr.mxu0 0.0
      %956 = vmatpush1.xpose.msra.mxu0 0.0
      %957 = vmatprep.subr.mxu0 0.0
      %958 = vmatpush1.xpose.msra.mxu0 0.0
      %959 = vmatprep.subr.mxu0 0.0
      %960 = vmatpush1.xpose.msra.mxu0 0.0
      %961 = vmatprep.subr.mxu0 0.0
      %962 = vmatpush1.xpose.msra.mxu0 0.0
      %963 = vmatprep.subr.mxu0 0.0
      %964 = vmatpush1.xpose.msra.mxu0 0.0
      %965 = vmatprep.subr.mxu0 0.0
      %966 = vmatpush1.xpose.msra.mxu0 0.0
      %967 = vmatprep.mubr.f32.mxu0 0.0
      %968 = vmatmul.mubr.f32.gmra.mrb[0].mxu0 %v899
      %v969 = vpop.f32.mrb[0].mxu0
      %v970 = vadd.f32 0.0, %v969
      %v971 = vpop.f32.mrb[0].mxu0
      %972 = vdwg.mxu0
      %v973 = vmul.f32 %v970, 0.17677669
      %v974 = vsel %vm806, %v973, -inf
      %975 = vmax.xlane.f32.xlu0 %v974
      %v976 = vpop.xlane.xlu0 %975
      %v977 = vsub.f32 %v973, %v976
      %v978 = vmul.f32 %v977, 1.442695
      %v979 = vpow.pop %v978
      %v980 = vsel %vm806, %v979, 0.0
      %981 = vadd.xlane.f32.xlu0 %v980
      %v982 = vpop.xlane.xlu0 %981
      %v983 = vrcp.pop %v982
      %v984 = vmul.f32 %v979, %v983
      %985 = vrot.lane.b32.xlu0 %v725, 96
      %v986 = vpop.permute.xlu0 %985
      %v988 = vsel %vm818, %v984, 0
      %v990 = vsel %vm491, %v986, 0
      %992 = vmatprep.subr.mxu0 0.0
      %993 = vmatpush1.msra.mxu0 %v990
      %994 = vmatprep.subr.mxu0 0.0
      %995 = vmatpush1.msra.mxu0 0.0
      %996 = vmatprep.subr.mxu0 0.0
      %997 = vmatpush1.msra.mxu0 0.0
      %998 = vmatprep.subr.mxu0 0.0
      %999 = vmatpush1.msra.mxu0 0.0
      %1000 = vmatprep.subr.mxu0 0.0
      %1001 = vmatpush1.msra.mxu0 0.0
      %1002 = vmatprep.subr.mxu0 0.0
      %1003 = vmatpush1.msra.mxu0 0.0
      %1004 = vmatprep.subr.mxu0 0.0
      %1005 = vmatpush1.msra.mxu0 0.0
      %1006 = vmatprep.subr.mxu0 0.0
      %1007 = vmatpush1.msra.mxu0 0.0
      %1008 = vmatprep.subr.mxu0 0.0
      %1009 = vmatpush1.msra.mxu0 0.0
      %1010 = vmatprep.subr.mxu0 0.0
      %1011 = vmatpush1.msra.mxu0 0.0
      %1012 = vmatprep.subr.mxu0 0.0
      %1013 = vmatpush1.msra.mxu0 0.0
      %1014 = vmatprep.subr.mxu0 0.0
      %1015 = vmatpush1.msra.mxu0 0.0
      %1016 = vmatprep.subr.mxu0 0.0
      %1017 = vmatpush1.msra.mxu0 0.0
      %1018 = vmatprep.subr.mxu0 0.0
      %1019 = vmatpush1.msra.mxu0 0.0
      %1020 = vmatprep.subr.mxu0 0.0
      %1021 = vmatpush1.msra.mxu0 0.0
      %1022 = vmatprep.subr.mxu0 0.0
      %1023 = vmatpush1.msra.mxu0 0.0
      %1024 = vmatprep.subr.mxu0 0.0
      %1025 = vmatpush1.msra.mxu0 0.0
      %1026 = vmatprep.subr.mxu0 0.0
      %1027 = vmatpush1.msra.mxu0 0.0
      %1028 = vmatprep.subr.mxu0 0.0
      %1029 = vmatpush1.msra.mxu0 0.0
      %1030 = vmatprep.subr.mxu0 0.0
      %1031 = vmatpush1.msra.mxu0 0.0
      %1032 = vmatprep.subr.mxu0 0.0
      %1033 = vmatpush1.msra.mxu0 0.0
      %1034 = vmatprep.subr.mxu0 0.0
      %1035 = vmatpush1.msra.mxu0 0.0
      %1036 = vmatprep.subr.mxu0 0.0
      %1037 = vmatpush1.msra.mxu0 0.0
      %1038 = vmatprep.subr.mxu0 0.0
      %1039 = vmatpush1.msra.mxu0 0.0
      %1040 = vmatprep.subr.mxu0 0.0
      %1041 = vmatpush1.msra.mxu0 0.0
      %1042 = vmatprep.subr.mxu0 0.0
      %1043 = vmatpush1.msra.mxu0 0.0
      %1044 = vmatprep.subr.mxu0 0.0
      %1045 = vmatpush1.msra.mxu0 0.0
      %1046 = vmatprep.subr.mxu0 0.0
      %1047 = vmatpush1.msra.mxu0 0.0
      %1048 = vmatprep.subr.mxu0 0.0
      %1049 = vmatpush1.msra.mxu0 0.0
      %1050 = vmatprep.subr.mxu0 0.0
      %1051 = vmatpush1.msra.mxu0 0.0
      %1052 = vmatprep.subr.mxu0 0.0
      %1053 = vmatpush1.msra.mxu0 0.0
      %1054 = vmatprep.subr.mxu0 0.0
      %1055 = vmatpush1.msra.mxu0 0.0
      %1056 = vmatprep.mubr.f32.mxu0 0.0
      %1057 = vmatmul.mubr.f32.gmra.mrb[0].mxu0 %v988
      %v1058 = vpop.f32.mrb[0].mxu0
      %v1059 = vadd.f32 0.0, %v1058
      %v1060 = vpop.f32.mrb[0].mxu0
      %1061 = vdwg.mxu0
      %1062 = vrot.lane.b32.xlu0 %v654, 64
      %v1063 = vpop.permute.xlu0 %1062
      %1064 = vrot.lane.b32.xlu0 %v656, 64
      %v1065 = vpop.permute.xlu0 %1064
      %v1066 = vsel %vm728, %v1063, 0
      %v1068 = vsel %vm728, %v1065, 0
      %1070 = vmatprep.subr.mxu0 0.0
      %1071 = vmatpush1.xpose.msra.mxu0 %v1068
      %1072 = vmatprep.subr.mxu0 0.0
      %1073 = vmatpush1.xpose.msra.mxu0 0.0
      %1074 = vmatprep.subr.mxu0 0.0
      %1075 = vmatpush1.xpose.msra.mxu0 0.0
      %1076 = vmatprep.subr.mxu0 0.0
      %1077 = vmatpush1.xpose.msra.mxu0 0.0
      %1078 = vmatprep.subr.mxu0 0.0
      %1079 = vmatpush1.xpose.msra.mxu0 0.0
      %1080 = vmatprep.subr.mxu0 0.0
      %1081 = vmatpush1.xpose.msra.mxu0 0.0
      %1082 = vmatprep.subr.mxu0 0.0
      %1083 = vmatpush1.xpose.msra.mxu0 0.0
      %1084 = vmatprep.subr.mxu0 0.0
      %1085 = vmatpush1.xpose.msra.mxu0 0.0
      %1086 = vmatprep.subr.mxu0 0.0
      %1087 = vmatpush1.xpose.msra.mxu0 0.0
      %1088 = vmatprep.subr.mxu0 0.0
      %1089 = vmatpush1.xpose.msra.mxu0 0.0
      %1090 = vmatprep.subr.mxu0 0.0
      %1091 = vmatpush1.xpose.msra.mxu0 0.0
      %1092 = vmatprep.subr.mxu0 0.0
      %1093 = vmatpush1.xpose.msra.mxu0 0.0
      %1094 = vmatprep.subr.mxu0 0.0
      %1095 = vmatpush1.xpose.msra.mxu0 0.0
      %1096 = vmatprep.subr.mxu0 0.0
      %1097 = vmatpush1.xpose.msra.mxu0 0.0
      %1098 = vmatprep.subr.mxu0 0.0
      %1099 = vmatpush1.xpose.msra.mxu0 0.0
      %1100 = vmatprep.subr.mxu0 0.0
      %1101 = vmatpush1.xpose.msra.mxu0 0.0
      %1102 = vmatprep.subr.mxu0 0.0
      %1103 = vmatpush1.xpose.msra.mxu0 0.0
      %1104 = vmatprep.subr.mxu0 0.0
      %1105 = vmatpush1.xpose.msra.mxu0 0.0
      %1106 = vmatprep.subr.mxu0 0.0
      %1107 = vmatpush1.xpose.msra.mxu0 0.0
      %1108 = vmatprep.subr.mxu0 0.0
      %1109 = vmatpush1.xpose.msra.mxu0 0.0
      %1110 = vmatprep.subr.mxu0 0.0
      %1111 = vmatpush1.xpose.msra.mxu0 0.0
      %1112 = vmatprep.subr.mxu0 0.0
      %1113 = vmatpush1.xpose.msra.mxu0 0.0
      %1114 = vmatprep.subr.mxu0 0.0
      %1115 = vmatpush1.xpose.msra.mxu0 0.0
      %1116 = vmatprep.subr.mxu0 0.0
      %1117 = vmatpush1.xpose.msra.mxu0 0.0
      %1118 = vmatprep.subr.mxu0 0.0
      %1119 = vmatpush1.xpose.msra.mxu0 0.0
      %1120 = vmatprep.subr.mxu0 0.0
      %1121 = vmatpush1.xpose.msra.mxu0 0.0
      %1122 = vmatprep.subr.mxu0 0.0
      %1123 = vmatpush1.xpose.msra.mxu0 0.0
      %1124 = vmatprep.subr.mxu0 0.0
      %1125 = vmatpush1.xpose.msra.mxu0 0.0
      %1126 = vmatprep.subr.mxu0 0.0
      %1127 = vmatpush1.xpose.msra.mxu0 0.0
      %1128 = vmatprep.subr.mxu0 0.0
      %1129 = vmatpush1.xpose.msra.mxu0 0.0
      %1130 = vmatprep.subr.mxu0 0.0
      %1131 = vmatpush1.xpose.msra.mxu0 0.0
      %1132 = vmatprep.subr.mxu0 0.0
      %1133 = vmatpush1.xpose.msra.mxu0 0.0
      %1134 = vmatprep.mubr.f32.mxu0 0.0
      %1135 = vmatmul.mubr.f32.gmra.mrb[0].mxu0 %v1066
      %v1136 = vpop.f32.mrb[0].mxu0
      %v1137 = vadd.f32 0.0, %v1136
      %v1138 = vpop.f32.mrb[0].mxu0
      %1139 = vdwg.mxu0
      %v1140 = vmul.f32 %v1137, 0.17677669
      %v1141 = vsel %vm806, %v1140, -inf
      %1142 = vmax.xlane.f32.xlu0 %v1141
      %v1143 = vpop.xlane.xlu0 %1142
      %v1144 = vsub.f32 %v1140, %v1143
      %v1145 = vmul.f32 %v1144, 1.442695
      %v1146 = vpow.pop %v1145
      %v1147 = vsel %vm806, %v1146, 0.0
      %1148 = vadd.xlane.f32.xlu0 %v1147
      %v1149 = vpop.xlane.xlu0 %1148
      %v1150 = vrcp.pop %v1149
      %v1151 = vmul.f32 %v1146, %v1150
      %1152 = vrot.lane.b32.xlu0 %v725, 64
      %v1153 = vpop.permute.xlu0 %1152
      %v1155 = vsel %vm818, %v1151, 0
      %v1157 = vsel %vm491, %v1153, 0
      %1159 = vmatprep.subr.mxu0 0.0
      %1160 = vmatpush1.msra.mxu0 %v1157
      %1161 = vmatprep.subr.mxu0 0.0
      %1162 = vmatpush1.msra.mxu0 0.0
      %1163 = vmatprep.subr.mxu0 0.0
      %1164 = vmatpush1.msra.mxu0 0.0
      %1165 = vmatprep.subr.mxu0 0.0
      %1166 = vmatpush1.msra.mxu0 0.0
      %1167 = vmatprep.subr.mxu0 0.0
      %1168 = vmatpush1.msra.mxu0 0.0
      %1169 = vmatprep.subr.mxu0 0.0
      %1170 = vmatpush1.msra.mxu0 0.0
      %1171 = vmatprep.subr.mxu0 0.0
      %1172 = vmatpush1.msra.mxu0 0.0
      %1173 = vmatprep.subr.mxu0 0.0
      %1174 = vmatpush1.msra.mxu0 0.0
      %1175 = vmatprep.subr.mxu0 0.0
      %1176 = vmatpush1.msra.mxu0 0.0
      %1177 = vmatprep.subr.mxu0 0.0
      %1178 = vmatpush1.msra.mxu0 0.0
      %1179 = vmatprep.subr.mxu0 0.0
      %1180 = vmatpush1.msra.mxu0 0.0
      %1181 = vmatprep.subr.mxu0 0.0
      %1182 = vmatpush1.msra.mxu0 0.0
      %1183 = vmatprep.subr.mxu0 0.0
      %1184 = vmatpush1.msra.mxu0 0.0
      %1185 = vmatprep.subr.mxu0 0.0
      %1186 = vmatpush1.msra.mxu0 0.0
      %1187 = vmatprep.subr.mxu0 0.0
      %1188 = vmatpush1.msra.mxu0 0.0
      %1189 = vmatprep.subr.mxu0 0.0
      %1190 = vmatpush1.msra.mxu0 0.0
      %1191 = vmatprep.subr.mxu0 0.0
      %1192 = vmatpush1.msra.mxu0 0.0
      %1193 = vmatprep.subr.mxu0 0.0
      %1194 = vmatpush1.msra.mxu0 0.0
      %1195 = vmatprep.subr.mxu0 0.0
      %1196 = vmatpush1.msra.mxu0 0.0
      %1197 = vmatprep.subr.mxu0 0.0
      %1198 = vmatpush1.msra.mxu0 0.0
      %1199 = vmatprep.subr.mxu0 0.0
      %1200 = vmatpush1.msra.mxu0 0.0
      %1201 = vmatprep.subr.mxu0 0.0
      %1202 = vmatpush1.msra.mxu0 0.0
      %1203 = vmatprep.subr.mxu0 0.0
      %1204 = vmatpush1.msra.mxu0 0.0
      %1205 = vmatprep.subr.mxu0 0.0
      %1206 = vmatpush1.msra.mxu0 0.0
      %1207 = vmatprep.subr.mxu0 0.0
      %1208 = vmatpush1.msra.mxu0 0.0
      %1209 = vmatprep.subr.mxu0 0.0
      %1210 = vmatpush1.msra.mxu0 0.0
      %1211 = vmatprep.subr.mxu0 0.0
      %1212 = vmatpush1.msra.mxu0 0.0
      %1213 = vmatprep.subr.mxu0 0.0
      %1214 = vmatpush1.msra.mxu0 0.0
      %1215 = vmatprep.subr.mxu0 0.0
      %1216 = vmatpush1.msra.mxu0 0.0
      %1217 = vmatprep.subr.mxu0 0.0
      %1218 = vmatpush1.msra.mxu0 0.0
      %1219 = vmatprep.subr.mxu0 0.0
      %1220 = vmatpush1.msra.mxu0 0.0
      %1221 = vmatprep.subr.mxu0 0.0
      %1222 = vmatpush1.msra.mxu0 0.0
      %1223 = vmatprep.mubr.f32.mxu0 0.0
      %1224 = vmatmul.mubr.f32.gmra.mrb[0].mxu0 %v1155
      %v1225 = vpop.f32.mrb[0].mxu0
      %v1226 = vadd.f32 0.0, %v1225
      %v1227 = vpop.f32.mrb[0].mxu0
      %1228 = vdwg.mxu0
      %1229 = vrot.lane.b32.xlu0 %v654, 32
      %v1230 = vpop.permute.xlu0 %1229
      %1231 = vrot.lane.b32.xlu0 %v656, 32
      %v1232 = vpop.permute.xlu0 %1231
      %v1233 = vsel %vm728, %v1230, 0
      %v1235 = vsel %vm728, %v1232, 0
      %1237 = vmatprep.subr.mxu0 0.0
      %1238 = vmatpush1.xpose.msra.mxu0 %v1235
      %1239 = vmatprep.subr.mxu0 0.0
      %1240 = vmatpush1.xpose.msra.mxu0 0.0
      %1241 = vmatprep.subr.mxu0 0.0
      %1242 = vmatpush1.xpose.msra.mxu0 0.0
      %1243 = vmatprep.subr.mxu0 0.0
      %1244 = vmatpush1.xpose.msra.mxu0 0.0
      %1245 = vmatprep.subr.mxu0 0.0
      %1246 = vmatpush1.xpose.msra.mxu0 0.0
      %1247 = vmatprep.subr.mxu0 0.0
      %1248 = vmatpush1.xpose.msra.mxu0 0.0
      %1249 = vmatprep.subr.mxu0 0.0
      %1250 = vmatpush1.xpose.msra.mxu0 0.0
      %1251 = vmatprep.subr.mxu0 0.0
      %1252 = vmatpush1.xpose.msra.mxu0 0.0
      %1253 = vmatprep.subr.mxu0 0.0
      %1254 = vmatpush1.xpose.msra.mxu0 0.0
      %1255 = vmatprep.subr.mxu0 0.0
      %1256 = vmatpush1.xpose.msra.mxu0 0.0
      %1257 = vmatprep.subr.mxu0 0.0
      %1258 = vmatpush1.xpose.msra.mxu0 0.0
      %1259 = vmatprep.subr.mxu0 0.0
      %1260 = vmatpush1.xpose.msra.mxu0 0.0
      %1261 = vmatprep.subr.mxu0 0.0
      %1262 = vmatpush1.xpose.msra.mxu0 0.0
      %1263 = vmatprep.subr.mxu0 0.0
      %1264 = vmatpush1.xpose.msra.mxu0 0.0
      %1265 = vmatprep.subr.mxu0 0.0
      %1266 = vmatpush1.xpose.msra.mxu0 0.0
      %1267 = vmatprep.subr.mxu0 0.0
      %1268 = vmatpush1.xpose.msra.mxu0 0.0
      %1269 = vmatprep.subr.mxu0 0.0
      %1270 = vmatpush1.xpose.msra.mxu0 0.0
      %1271 = vmatprep.subr.mxu0 0.0
      %1272 = vmatpush1.xpose.msra.mxu0 0.0
      %1273 = vmatprep.subr.mxu0 0.0
      %1274 = vmatpush1.xpose.msra.mxu0 0.0
      %1275 = vmatprep.subr.mxu0 0.0
      %1276 = vmatpush1.xpose.msra.mxu0 0.0
      %1277 = vmatprep.subr.mxu0 0.0
      %1278 = vmatpush1.xpose.msra.mxu0 0.0
      %1279 = vmatprep.subr.mxu0 0.0
      %1280 = vmatpush1.xpose.msra.mxu0 0.0
      %1281 = vmatprep.subr.mxu0 0.0
      %1282 = vmatpush1.xpose.msra.mxu0 0.0
      %1283 = vmatprep.subr.mxu0 0.0
      %1284 = vmatpush1.xpose.msra.mxu0 0.0
      %1285 = vmatprep.subr.mxu0 0.0
      %1286 = vmatpush1.xpose.msra.mxu0 0.0
      %1287 = vmatprep.subr.mxu0 0.0
      %1288 = vmatpush1.xpose.msra.mxu0 0.0
      %1289 = vmatprep.subr.mxu0 0.0
      %1290 = vmatpush1.xpose.msra.mxu0 0.0
      %1291 = vmatprep.subr.mxu0 0.0
      %1292 = vmatpush1.xpose.msra.mxu0 0.0
      %1293 = vmatprep.subr.mxu0 0.0
      %1294 = vmatpush1.xpose.msra.mxu0 0.0
      %1295 = vmatprep.subr.mxu0 0.0
      %1296 = vmatpush1.xpose.msra.mxu0 0.0
      %1297 = vmatprep.subr.mxu0 0.0
      %1298 = vmatpush1.xpose.msra.mxu0 0.0
      %1299 = vmatprep.subr.mxu0 0.0
      %1300 = vmatpush1.xpose.msra.mxu0 0.0
      %1301 = vmatprep.mubr.f32.mxu0 0.0
      %1302 = vmatmul.mubr.f32.gmra.mrb[0].mxu0 %v1233
      %v1303 = vpop.f32.mrb[0].mxu0
      %v1304 = vadd.f32 0.0, %v1303
      %v1305 = vpop.f32.mrb[0].mxu0
      %1306 = vdwg.mxu0
      %v1307 = vmul.f32 %v1304, 0.17677669
      %v1308 = vsel %vm806, %v1307, -inf
      %1309 = vmax.xlane.f32.xlu0 %v1308
      %v1310 = vpop.xlane.xlu0 %1309
      %v1311 = vsub.f32 %v1307, %v1310
      %v1312 = vmul.f32 %v1311, 1.442695
      %v1313 = vpow.pop %v1312
      %v1314 = vsel %vm806, %v1313, 0.0
      %1315 = vadd.xlane.f32.xlu0 %v1314
      %v1316 = vpop.xlane.xlu0 %1315
      %v1317 = vrcp.pop %v1316
      %v1318 = vmul.f32 %v1313, %v1317
      %1319 = vrot.lane.b32.xlu0 %v725, 32
      %v1320 = vpop.permute.xlu0 %1319
      %v1322 = vsel %vm818, %v1318, 0
      %v1324 = vsel %vm491, %v1320, 0
      %1326 = vmatprep.subr.mxu0 0.0
      %1327 = vmatpush1.msra.mxu0 %v1324
      %1328 = vmatprep.subr.mxu0 0.0
      %1329 = vmatpush1.msra.mxu0 0.0
      %1330 = vmatprep.subr.mxu0 0.0
      %1331 = vmatpush1.msra.mxu0 0.0
      %1332 = vmatprep.subr.mxu0 0.0
      %1333 = vmatpush1.msra.mxu0 0.0
      %1334 = vmatprep.subr.mxu0 0.0
      %1335 = vmatpush1.msra.mxu0 0.0
      %1336 = vmatprep.subr.mxu0 0.0
      %1337 = vmatpush1.msra.mxu0 0.0
      %1338 = vmatprep.subr.mxu0 0.0
      %1339 = vmatpush1.msra.mxu0 0.0
      %1340 = vmatprep.subr.mxu0 0.0
      %1341 = vmatpush1.msra.mxu0 0.0
      %1342 = vmatprep.subr.mxu0 0.0
      %1343 = vmatpush1.msra.mxu0 0.0
      %1344 = vmatprep.subr.mxu0 0.0
      %1345 = vmatpush1.msra.mxu0 0.0
      %1346 = vmatprep.subr.mxu0 0.0
      %1347 = vmatpush1.msra.mxu0 0.0
      %1348 = vmatprep.subr.mxu0 0.0
      %1349 = vmatpush1.msra.mxu0 0.0
      %1350 = vmatprep.subr.mxu0 0.0
      %1351 = vmatpush1.msra.mxu0 0.0
      %1352 = vmatprep.subr.mxu0 0.0
      %1353 = vmatpush1.msra.mxu0 0.0
      %1354 = vmatprep.subr.mxu0 0.0
      %1355 = vmatpush1.msra.mxu0 0.0
      %1356 = vmatprep.subr.mxu0 0.0
      %1357 = vmatpush1.msra.mxu0 0.0
      %1358 = vmatprep.subr.mxu0 0.0
      %1359 = vmatpush1.msra.mxu0 0.0
      %1360 = vmatprep.subr.mxu0 0.0
      %1361 = vmatpush1.msra.mxu0 0.0
      %1362 = vmatprep.subr.mxu0 0.0
      %1363 = vmatpush1.msra.mxu0 0.0
      %1364 = vmatprep.subr.mxu0 0.0
      %1365 = vmatpush1.msra.mxu0 0.0
      %1366 = vmatprep.subr.mxu0 0.0
      %1367 = vmatpush1.msra.mxu0 0.0
      %1368 = vmatprep.subr.mxu0 0.0
      %1369 = vmatpush1.msra.mxu0 0.0
      %1370 = vmatprep.subr.mxu0 0.0
      %1371 = vmatpush1.msra.mxu0 0.0
      %1372 = vmatprep.subr.mxu0 0.0
      %1373 = vmatpush1.msra.mxu0 0.0
      %1374 = vmatprep.subr.mxu0 0.0
      %1375 = vmatpush1.msra.mxu0 0.0
      %1376 = vmatprep.subr.mxu0 0.0
      %1377 = vmatpush1.msra.mxu0 0.0
      %1378 = vmatprep.subr.mxu0 0.0
      %1379 = vmatpush1.msra.mxu0 0.0
      %1380 = vmatprep.subr.mxu0 0.0
      %1381 = vmatpush1.msra.mxu0 0.0
      %1382 = vmatprep.subr.mxu0 0.0
      %1383 = vmatpush1.msra.mxu0 0.0
      %1384 = vmatprep.subr.mxu0 0.0
      %1385 = vmatpush1.msra.mxu0 0.0
      %1386 = vmatprep.subr.mxu0 0.0
      %1387 = vmatpush1.msra.mxu0 0.0
      %1388 = vmatprep.subr.mxu0 0.0
      %1389 = vmatpush1.msra.mxu0 0.0
      %1390 = vmatprep.mubr.f32.mxu0 0.0
      %1391 = vmatmul.mubr.f32.gmra.mrb[0].mxu0 %v1322
      %v1392 = vpop.f32.mrb[0].mxu0
      %v1393 = vadd.f32 0.0, %v1392
      %v1394 = vpop.f32.mrb[0].mxu0
      %1395 = vdwg.mxu0
      %1397 = vrot.lane.b32.xlu0 %v1059, 32
      %v1398 = vpop.permute.xlu0 %1397
      %1401 = vrot.lane.b32.xlu0 %v1226, 64
      %v1402 = vpop.permute.xlu0 %1401
      %1405 = vrot.lane.b32.xlu0 %v1393, 96
      %v1406 = vpop.permute.xlu0 %1405
      %v1408 = vsel %vm728, %v892, %v1398
      %vm1409 = vcmask 523264
      %v1410 = vsel %vm1409, %v1408, %v1402
      %vm1411 = vcmask 785408
      %v1412 = vsel %vm1411, %v1410, %v1406
      %v1413 = vld [vmem:[%s5] sm:$0xff]
      %v1414 = vld [vmem:[%s5 + $0x8] sm:$0xff]
      %v1415 = vld [vmem:[%s5 + $0x10] sm:$0xff]
      %v1416 = vld [vmem:[%s5 + $0x18] sm:$0xff]
      %v1417 = vld [vmem:[%s5 + $0x20] sm:$0xff]
      %v1418 = vld [vmem:[%s5 + $0x28] sm:$0xff]
      %v1419 = vld [vmem:[%s5 + $0x30] sm:$0xff]
      %v1420 = vld [vmem:[%s5 + $0x38] sm:$0xff]
      %v1421 = vld [vmem:[%s5 + $0x40] sm:$0xff]
      %v1422 = vld [vmem:[%s5 + $0x48] sm:$0xff]
      %v1423 = vld [vmem:[%s5 + $0x50] sm:$0xff]
      %v1424 = vld [vmem:[%s5 + $0x58] sm:$0xff]
      %v1425 = vld [vmem:[%s5 + $0x60] sm:$0xff]
      %v1426 = vld [vmem:[%s5 + $0x68] sm:$0xff]
      %v1427 = vld [vmem:[%s5 + $0x70] sm:$0xff]
      %v1428 = vld [vmem:[%s5 + $0x78] sm:$0xff]
      %v1429 = vld [vmem:[%s6] sm:$0x1]
      %v1431 = vlaneseq
      %v1432 = vshrl.u32 %v1431, 7
      %v1433 = vsub.s32 0, %v1432
      %v1434 = vrot.slane %v1429, %v1433
      %1436 = vmatprep.subr.mxu0 0.0
      %1437 = vmatpush1.msra.mxu0 %v1413
      %1438 = vmatprep.subr.mxu0 0.0
      %1439 = vmatpush1.msra.mxu0 %v1414
      %1440 = vmatprep.subr.mxu0 0.0
      %1441 = vmatpush1.msra.mxu0 %v1415
      %1442 = vmatprep.subr.mxu0 0.0
      %1443 = vmatpush1.msra.mxu0 %v1416
      %1444 = vmatprep.subr.mxu0 0.0
      %1445 = vmatpush1.msra.mxu0 %v1417
      %1446 = vmatprep.subr.mxu0 0.0
      %1447 = vmatpush1.msra.mxu0 %v1418
      %1448 = vmatprep.subr.mxu0 0.0
      %1449 = vmatpush1.msra.mxu0 %v1419
      %1450 = vmatprep.subr.mxu0 0.0
      %1451 = vmatpush1.msra.mxu0 %v1420
      %1452 = vmatprep.subr.mxu0 0.0
      %1453 = vmatpush1.msra.mxu0 %v1421
      %1454 = vmatprep.subr.mxu0 0.0
      %1455 = vmatpush1.msra.mxu0 %v1422
      %1456 = vmatprep.subr.mxu0 0.0
      %1457 = vmatpush1.msra.mxu0 %v1423
      %1458 = vmatprep.subr.mxu0 0.0
      %1459 = vmatpush1.msra.mxu0 %v1424
      %1460 = vmatprep.subr.mxu0 0.0
      %1461 = vmatpush1.msra.mxu0 %v1425
      %1462 = vmatprep.subr.mxu0 0.0
      %1463 = vmatpush1.msra.mxu0 %v1426
      %1464 = vmatprep.subr.mxu0 0.0
      %1465 = vmatpush1.msra.mxu0 %v1427
      %1466 = vmatprep.subr.mxu0 0.0
      %1467 = vmatpush1.msra.mxu0 %v1428
      %1468 = vmatprep.subr.mxu0 0.0
      %1469 = vmatpush1.msra.mxu0 0.0
      %1470 = vmatprep.subr.mxu0 0.0
      %1471 = vmatpush1.msra.mxu0 0.0
      %1472 = vmatprep.subr.mxu0 0.0
      %1473 = vmatpush1.msra.mxu0 0.0
      %1474 = vmatprep.subr.mxu0 0.0
      %1475 = vmatpush1.msra.mxu0 0.0
      %1476 = vmatprep.subr.mxu0 0.0
      %1477 = vmatpush1.msra.mxu0 0.0
      %1478 = vmatprep.subr.mxu0 0.0
      %1479 = vmatpush1.msra.mxu0 0.0
      %1480 = vmatprep.subr.mxu0 0.0
      %1481 = vmatpush1.msra.mxu0 0.0
      %1482 = vmatprep.subr.mxu0 0.0
      %1483 = vmatpush1.msra.mxu0 0.0
      %1484 = vmatprep.subr.mxu0 0.0
      %1485 = vmatpush1.msra.mxu0 0.0
      %1486 = vmatprep.subr.mxu0 0.0
      %1487 = vmatpush1.msra.mxu0 0.0
      %1488 = vmatprep.subr.mxu0 0.0
      %1489 = vmatpush1.msra.mxu0 0.0
      %1490 = vmatprep.subr.mxu0 0.0
      %1491 = vmatpush1.msra.mxu0 0.0
      %1492 = vmatprep.subr.mxu0 0.0
      %1493 = vmatpush1.msra.mxu0 0.0
      %1494 = vmatprep.subr.mxu0 0.0
      %1495 = vmatpush1.msra.mxu0 0.0
      %1496 = vmatprep.subr.mxu0 0.0
      %1497 = vmatpush1.msra.mxu0 0.0
      %1498 = vmatprep.subr.mxu0 0.0
      %1499 = vmatpush1.msra.mxu0 0.0
      %1500 = vmatprep.mubr.f32.mxu0 0.0
      %1501 = vmatmul.mubr.f32.gmra.mrb[0].mxu0 %v1412
      %v1502 = vpop.f32.mrb[0].mxu0
      %v1503 = vadd.f32 %v1434, %v1502
      %v1504 = vpop.f32.mrb[0].mxu0
      %1505 = vdwg.mxu0
      %v1506 = vld [vmem:[%s7] sm:$0x1]
      %v1508 = vlaneseq
      %v1509 = vshrl.u32 %v1508, 7
      %v1510 = vsub.s32 0, %v1509
      %v1511 = vrot.slane %v1506, %v1510
      %v1513 = vmul.f32 %v1511, %v1503
      %v1514 = vadd.f32 %v490, %v1513
      %v1515 = vsel %vm491, %v1514, 0.0
      %1516 = vadd.xlane.f32.xlu0 %v1515
      %v1517 = vpop.xlane.xlu0 %1516
      %v1518 = vmul.f32 %v1517, %v495
      %v1519 = vsub.f32 %v1514, %v1518
      %v1520 = vmul.f32 %v1519, %v1519
      %v1521 = vsel %vm491, %v1520, 0.0
      %1522 = vadd.xlane.f32.xlu0 %v1521
      %v1523 = vpop.xlane.xlu0 %1522
      %v1524 = vmul.f32 %v1523, %v495
      %v1525 = vadd.f32 %v1524, 1e-05
      %v1526 = vrsqrt.pop %v1525
      %v1527 = vmul.f32 %v1519, %v1526
      %v1528 = vld [vmem:[%s8] sm:$0x1]
      %v1530 = vlaneseq
      %v1531 = vshrl.u32 %v1530, 7
      %v1532 = vsub.s32 0, %v1531
      %v1533 = vrot.slane %v1528, %v1532
      %v1535 = vmul.f32 %v1527, %v1533
      %v1536 = vld [vmem:[%s9] sm:$0x1]
      %v1538 = vlaneseq
      %v1539 = vshrl.u32 %v1538, 7
      %v1540 = vsub.s32 0, %v1539
      %v1541 = vrot.slane %v1536, %v1540
      %v1543 = vadd.f32 %v1535, %v1541
      %v1544 = vld [vmem:[%s10] sm:$0xff]
      %v1545 = vld [vmem:[%s10 + $0x8] sm:$0xff]
      %v1546 = vld [vmem:[%s10 + $0x10] sm:$0xff]
      %v1547 = vld [vmem:[%s10 + $0x18] sm:$0xff]
      %v1548 = vld [vmem:[%s10 + $0x20] sm:$0xff]
      %v1549 = vld [vmem:[%s10 + $0x28] sm:$0xff]
      %v1550 = vld [vmem:[%s10 + $0x30] sm:$0xff]
      %v1551 = vld [vmem:[%s10 + $0x38] sm:$0xff]
      %v1552 = vld [vmem:[%s10 + $0x40] sm:$0xff]
      %v1553 = vld [vmem:[%s10 + $0x48] sm:$0xff]
      %v1554 = vld [vmem:[%s10 + $0x50] sm:$0xff]
      %v1555 = vld [vmem:[%s10 + $0x58] sm:$0xff]
      %v1556 = vld [vmem:[%s10 + $0x60] sm:$0xff]
      %v1557 = vld [vmem:[%s10 + $0x68] sm:$0xff]
      %v1558 = vld [vmem:[%s10 + $0x70] sm:$0xff]
      %v1559 = vld [vmem:[%s10 + $0x78] sm:$0xff]
      %v1560 = vld [vmem:[%s10 + $0x80] sm:$0xff]
      %v1561 = vld [vmem:[%s10 + $0x88] sm:$0xff]
      %v1562 = vld [vmem:[%s10 + $0x90] sm:$0xff]
      %v1563 = vld [vmem:[%s10 + $0x98] sm:$0xff]
      %v1564 = vld [vmem:[%s10 + $0xa0] sm:$0xff]
      %v1565 = vld [vmem:[%s10 + $0xa8] sm:$0xff]
      %v1566 = vld [vmem:[%s10 + $0xb0] sm:$0xff]
      %v1567 = vld [vmem:[%s10 + $0xb8] sm:$0xff]
      %v1568 = vld [vmem:[%s10 + $0xc0] sm:$0xff]
      %v1569 = vld [vmem:[%s10 + $0xc8] sm:$0xff]
      %v1570 = vld [vmem:[%s10 + $0xd0] sm:$0xff]
      %v1571 = vld [vmem:[%s10 + $0xd8] sm:$0xff]
      %v1572 = vld [vmem:[%s10 + $0xe0] sm:$0xff]
      %v1573 = vld [vmem:[%s10 + $0xe8] sm:$0xff]
      %v1574 = vld [vmem:[%s10 + $0xf0] sm:$0xff]
      %v1575 = vld [vmem:[%s10 + $0xf8] sm:$0xff]
      %v1576 = vld [vmem:[%s10 + $0x100] sm:$0xff]
      %v1577 = vld [vmem:[%s10 + $0x108] sm:$0xff]
      %v1578 = vld [vmem:[%s10 + $0x110] sm:$0xff]
      %v1579 = vld [vmem:[%s10 + $0x118] sm:$0xff]
      %v1580 = vld [vmem:[%s10 + $0x120] sm:$0xff]
      %v1581 = vld [vmem:[%s10 + $0x128] sm:$0xff]
      %v1582 = vld [vmem:[%s10 + $0x130] sm:$0xff]
      %v1583 = vld [vmem:[%s10 + $0x138] sm:$0xff]
      %v1584 = vld [vmem:[%s10 + $0x140] sm:$0xff]
      %v1585 = vld [vmem:[%s10 + $0x148] sm:$0xff]
      %v1586 = vld [vmem:[%s10 + $0x150] sm:$0xff]
      %v1587 = vld [vmem:[%s10 + $0x158] sm:$0xff]
      %v1588 = vld [vmem:[%s10 + $0x160] sm:$0xff]
      %v1589 = vld [vmem:[%s10 + $0x168] sm:$0xff]
      %v1590 = vld [vmem:[%s10 + $0x170] sm:$0xff]
      %v1591 = vld [vmem:[%s10 + $0x178] sm:$0xff]
      %v1592 = vld [vmem:[%s10 + $0x180] sm:$0xff]
      %v1593 = vld [vmem:[%s10 + $0x188] sm:$0xff]
      %v1594 = vld [vmem:[%s10 + $0x190] sm:$0xff]
      %v1595 = vld [vmem:[%s10 + $0x198] sm:$0xff]
      %v1596 = vld [vmem:[%s10 + $0x1a0] sm:$0xff]
      %v1597 = vld [vmem:[%s10 + $0x1a8] sm:$0xff]
      %v1598 = vld [vmem:[%s10 + $0x1b0] sm:$0xff]
      %v1599 = vld [vmem:[%s10 + $0x1b8] sm:$0xff]
      %v1600 = vld [vmem:[%s10 + $0x1c0] sm:$0xff]
      %v1601 = vld [vmem:[%s10 + $0x1c8] sm:$0xff]
      %v1602 = vld [vmem:[%s10 + $0x1d0] sm:$0xff]
      %v1603 = vld [vmem:[%s10 + $0x1d8] sm:$0xff]
      %v1604 = vld [vmem:[%s10 + $0x1e0] sm:$0xff]
      %v1605 = vld [vmem:[%s10 + $0x1e8] sm:$0xff]
      %v1606 = vld [vmem:[%s10 + $0x1f0] sm:$0xff]
      %v1607 = vld [vmem:[%s10 + $0x1f8] sm:$0xff]
      %v1608 = vld [vmem:[%s11] sm:$0xf]
      %v1610 = vlaneseq
      %v1611 = vshrl.u32 %v1610, 7
      %v1612 = vsub.s32 0, %v1611
      %v1613 = vrot.slane %v1608, %v1612
      %v1614 = vlaneseq
      %v1615 = vshrl.u32 %v1614, 7
      %v1616 = vsub.s32 1, %v1615
      %v1617 = vrot.slane %v1608, %v1616
      %v1618 = vlaneseq
      %v1619 = vshrl.u32 %v1618, 7
      %v1620 = vsub.s32 2, %v1619
      %v1621 = vrot.slane %v1608, %v1620
      %v1622 = vlaneseq
      %v1623 = vshrl.u32 %v1622, 7
      %v1624 = vsub.s32 3, %v1623
      %v1625 = vrot.slane %v1608, %v1624
      %1630 = vmatprep.subr.mxu0 %v1545
      %1631 = vmatpush1.msra.mxu0 %v1544
      %1632 = vmatprep.subr.mxu0 %v1549
      %1633 = vmatpush1.msra.mxu0 %v1548
      %1634 = vmatprep.subr.mxu0 %v1553
      %1635 = vmatpush1.msra.mxu0 %v1552
      %1636 = vmatprep.subr.mxu0 %v1557
      %1637 = vmatpush1.msra.mxu0 %v1556
      %1638 = vmatprep.subr.mxu0 %v1561
      %1639 = vmatpush1.msra.mxu0 %v1560
      %1640 = vmatprep.subr.mxu0 %v1565
      %1641 = vmatpush1.msra.mxu0 %v1564
      %1642 = vmatprep.subr.mxu0 %v1569
      %1643 = vmatpush1.msra.mxu0 %v1568
      %1644 = vmatprep.subr.mxu0 %v1573
      %1645 = vmatpush1.msra.mxu0 %v1572
      %1646 = vmatprep.subr.mxu0 %v1577
      %1647 = vmatpush1.msra.mxu0 %v1576
      %1648 = vmatprep.subr.mxu0 %v1581
      %1649 = vmatpush1.msra.mxu0 %v1580
      %1650 = vmatprep.subr.mxu0 %v1585
      %1651 = vmatpush1.msra.mxu0 %v1584
      %1652 = vmatprep.subr.mxu0 %v1589
      %1653 = vmatpush1.msra.mxu0 %v1588
      %1654 = vmatprep.subr.mxu0 %v1593
      %1655 = vmatpush1.msra.mxu0 %v1592
      %1656 = vmatprep.subr.mxu0 %v1597
      %1657 = vmatpush1.msra.mxu0 %v1596
      %1658 = vmatprep.subr.mxu0 %v1601
      %1659 = vmatpush1.msra.mxu0 %v1600
      %1660 = vmatprep.subr.mxu0 %v1605
      %1661 = vmatpush1.msra.mxu0 %v1604
      %1662 = vmatprep.subr.mxu0 0.0
      %1663 = vmatpush1.msra.mxu0 0.0
      %1664 = vmatprep.subr.mxu0 0.0
      %1665 = vmatpush1.msra.mxu0 0.0
      %1666 = vmatprep.subr.mxu0 0.0
      %1667 = vmatpush1.msra.mxu0 0.0
      %1668 = vmatprep.subr.mxu0 0.0
      %1669 = vmatpush1.msra.mxu0 0.0
      %1670 = vmatprep.subr.mxu0 0.0
      %1671 = vmatpush1.msra.mxu0 0.0
      %1672 = vmatprep.subr.mxu0 0.0
      %1673 = vmatpush1.msra.mxu0 0.0
      %1674 = vmatprep.subr.mxu0 0.0
      %1675 = vmatpush1.msra.mxu0 0.0
      %1676 = vmatprep.subr.mxu0 0.0
      %1677 = vmatpush1.msra.mxu0 0.0
      %1678 = vmatprep.subr.mxu0 0.0
      %1679 = vmatpush1.msra.mxu0 0.0
      %1680 = vmatprep.subr.mxu0 0.0
      %1681 = vmatpush1.msra.mxu0 0.0
      %1682 = vmatprep.subr.mxu0 0.0
      %1683 = vmatpush1.msra.mxu0 0.0
      %1684 = vmatprep.subr.mxu0 0.0
      %1685 = vmatpush1.msra.mxu0 0.0
      %1686 = vmatprep.subr.mxu0 0.0
      %1687 = vmatpush1.msra.mxu0 0.0
      %1688 = vmatprep.subr.mxu0 0.0
      %1689 = vmatpush1.msra.mxu0 0.0
      %1690 = vmatprep.subr.mxu0 0.0
      %1691 = vmatpush1.msra.mxu0 0.0
      %1692 = vmatprep.subr.mxu0 0.0
      %1693 = vmatpush1.msra.mxu0 0.0
      %1694 = vmatprep.mubr.f32.mxu0 0.0
      %1695 = vmatmul.mubr.f32.gmra.mrb[0].mxu0 %v1543
      %v1696 = vpop.f32.mrb[0].mxu0
      %v1697 = vadd.f32 %v1613, %v1696
      %v1698 = vpop.f32.mrb[0].mxu0
      %v1699 = vadd.f32 %v1617, %v1698
      %1700 = vdwg.mxu0
      %1701 = vmatprep.subr.mxu0 %v1547
      %1702 = vmatpush1.msra.mxu0 %v1546
      %1703 = vmatprep.subr.mxu0 %v1551
      %1704 = vmatpush1.msra.mxu0 %v1550
      %1705 = vmatprep.subr.mxu0 %v1555
      %1706 = vmatpush1.msra.mxu0 %v1554
      %1707 = vmatprep.subr.mxu0 %v1559
      %1708 = vmatpush1.msra.mxu0 %v1558
      %1709 = vmatprep.subr.mxu0 %v1563
      %1710 = vmatpush1.msra.mxu0 %v1562
      %1711 = vmatprep.subr.mxu0 %v1567
      %1712 = vmatpush1.msra.mxu0 %v1566
      %1713 = vmatprep.subr.mxu0 %v1571
      %1714 = vmatpush1.msra.mxu0 %v1570
      %1715 = vmatprep.subr.mxu0 %v1575
      %1716 = vmatpush1.msra.mxu0 %v1574
      %1717 = vmatprep.subr.mxu0 %v1579
      %1718 = vmatpush1.msra.mxu0 %v1578
      %1719 = vmatprep.subr.mxu0 %v1583
      %1720 = vmatpush1.msra.mxu0 %v1582
      %1721 = vmatprep.subr.mxu0 %v1587
      %1722 = vmatpush1.msra.mxu0 %v1586
      %1723 = vmatprep.subr.mxu0 %v1591
      %1724 = vmatpush1.msra.mxu0 %v1590
      %1725 = vmatprep.subr.mxu0 %v1595
      %1726 = vmatpush1.msra.mxu0 %v1594
      %1727 = vmatprep.subr.mxu0 %v1599
      %1728 = vmatpush1.msra.mxu0 %v1598
      %1729 = vmatprep.subr.mxu0 %v1603
      %1730 = vmatpush1.msra.mxu0 %v1602
      %1731 = vmatprep.subr.mxu0 %v1607
      %1732 = vmatpush1.msra.mxu0 %v1606
      %1733 = vmatprep.subr.mxu0 0.0
      %1734 = vmatpush1.msra.mxu0 0.0
      %1735 = vmatprep.subr.mxu0 0.0
      %1736 = vmatpush1.msra.mxu0 0.0
      %1737 = vmatprep.subr.mxu0 0.0
      %1738 = vmatpush1.msra.mxu0 0.0
      %1739 = vmatprep.subr.mxu0 0.0
      %1740 = vmatpush1.msra.mxu0 0.0
      %1741 = vmatprep.subr.mxu0 0.0
      %1742 = vmatpush1.msra.mxu0 0.0
      %1743 = vmatprep.subr.mxu0 0.0
      %1744 = vmatpush1.msra.mxu0 0.0
      %1745 = vmatprep.subr.mxu0 0.0
      %1746 = vmatpush1.msra.mxu0 0.0
      %1747 = vmatprep.subr.mxu0 0.0
      %1748 = vmatpush1.msra.mxu0 0.0
      %1749 = vmatprep.subr.mxu0 0.0
      %1750 = vmatpush1.msra.mxu0 0.0
      %1751 = vmatprep.subr.mxu0 0.0
      %1752 = vmatpush1.msra.mxu0 0.0
      %1753 = vmatprep.subr.mxu0 0.0
      %1754 = vmatpush1.msra.mxu0 0.0
      %1755 = vmatprep.subr.mxu0 0.0
      %1756 = vmatpush1.msra.mxu0 0.0
      %1757 = vmatprep.subr.mxu0 0.0
      %1758 = vmatpush1.msra.mxu0 0.0
      %1759 = vmatprep.subr.mxu0 0.0
      %1760 = vmatpush1.msra.mxu0 0.0
      %1761 = vmatprep.subr.mxu0 0.0
      %1762 = vmatpush1.msra.mxu0 0.0
      %1763 = vmatprep.subr.mxu0 0.0
      %1764 = vmatpush1.msra.mxu0 0.0
      %1765 = vmatprep.mubr.f32.mxu0 0.0
      %1766 = vmatmul.mubr.f32.gmra.mrb[0].mxu0 %v1543
      %v1767 = vpop.f32.mrb[0].mxu0
      %v1768 = vadd.f32 %v1621, %v1767
      %v1769 = vpop.f32.mrb[0].mxu0
      %v1770 = vadd.f32 %v1625, %v1769
      %1771 = vdwg.mxu0
      %v1772 = vmul.f32 %v1697, %v1697
      %v1773 = vmul.f32 %v1699, %v1699
      %v1774 = vmul.f32 %v1768, %v1768
      %v1775 = vmul.f32 %v1770, %v1770
      %v1776 = vmul.f32 %v1697, %v1772
      %v1777 = vmul.f32 %v1699, %v1773
      %v1778 = vmul.f32 %v1768, %v1774
      %v1779 = vmul.f32 %v1770, %v1775
      %v1780 = vmul.f32 %v1776, 0.044715
      %v1781 = vmul.f32 %v1777, 0.044715
      %v1782 = vmul.f32 %v1778, 0.044715
      %v1783 = vmul.f32 %v1779, 0.044715
      %v1784 = vadd.f32 %v1697, %v1780
      %v1785 = vadd.f32 %v1699, %v1781
      %v1786 = vadd.f32 %v1768, %v1782
      %v1787 = vadd.f32 %v1770, %v1783
      %v1788 = vmul.f32 %v1784, 0.7978846
      %v1789 = vmul.f32 %v1785, 0.7978846
      %v1790 = vmul.f32 %v1786, 0.7978846
      %v1791 = vmul.f32 %v1787, 0.7978846
      %v1792 = vtanh.pop %v1788
      %v1793 = vtanh.pop %v1789
      %v1794 = vtanh.pop %v1790
      %v1795 = vtanh.pop %v1791
      %v1796 = vadd.f32 %v1792, 1.0
      %v1797 = vadd.f32 %v1793, 1.0
      %v1798 = vadd.f32 %v1794, 1.0
      %v1799 = vadd.f32 %v1795, 1.0
      %v1800 = vmul.f32 %v1796, 0.5
      %v1801 = vmul.f32 %v1797, 0.5
      %v1802 = vmul.f32 %v1798, 0.5
      %v1803 = vmul.f32 %v1799, 0.5
      %v1804 = vmul.f32 %v1697, %v1800
      %v1805 = vmul.f32 %v1699, %v1801
      %v1806 = vmul.f32 %v1768, %v1802
      %v1807 = vmul.f32 %v1770, %v1803
      %v1808 = vld [vmem:[%s12] sm:$0xff]
      %v1809 = vld [vmem:[%s12 + $0x8] sm:$0xff]
      %v1810 = vld [vmem:[%s12 + $0x10] sm:$0xff]
      %v1811 = vld [vmem:[%s12 + $0x18] sm:$0xff]
      %v1812 = vld [vmem:[%s12 + $0x20] sm:$0xff]
      %v1813 = vld [vmem:[%s12 + $0x28] sm:$0xff]
      %v1814 = vld [vmem:[%s12 + $0x30] sm:$0xff]
      %v1815 = vld [vmem:[%s12 + $0x38] sm:$0xff]
      %v1816 = vld [vmem:[%s12 + $0x40] sm:$0xff]
      %v1817 = vld [vmem:[%s12 + $0x48] sm:$0xff]
      %v1818 = vld [vmem:[%s12 + $0x50] sm:$0xff]
      %v1819 = vld [vmem:[%s12 + $0x58] sm:$0xff]
      %v1820 = vld [vmem:[%s12 + $0x60] sm:$0xff]
      %v1821 = vld [vmem:[%s12 + $0x68] sm:$0xff]
      %v1822 = vld [vmem:[%s12 + $0x70] sm:$0xff]
      %v1823 = vld [vmem:[%s12 + $0x78] sm:$0xff]
      %v1824 = vld [vmem:[%s12 + $0x80] sm:$0xff]
      %v1825 = vld [vmem:[%s12 + $0x88] sm:$0xff]
      %v1826 = vld [vmem:[%s12 + $0x90] sm:$0xff]
      %v1827 = vld [vmem:[%s12 + $0x98] sm:$0xff]
      %v1828 = vld [vmem:[%s12 + $0xa0] sm:$0xff]
      %v1829 = vld [vmem:[%s12 + $0xa8] sm:$0xff]
      %v1830 = vld [vmem:[%s12 + $0xb0] sm:$0xff]
      %v1831 = vld [vmem:[%s12 + $0xb8] sm:$0xff]
      %v1832 = vld [vmem:[%s12 + $0xc0] sm:$0xff]
      %v1833 = vld [vmem:[%s12 + $0xc8] sm:$0xff]
      %v1834 = vld [vmem:[%s12 + $0xd0] sm:$0xff]
      %v1835 = vld [vmem:[%s12 + $0xd8] sm:$0xff]
      %v1836 = vld [vmem:[%s12 + $0xe0] sm:$0xff]
      %v1837 = vld [vmem:[%s12 + $0xe8] sm:$0xff]
      %v1838 = vld [vmem:[%s12 + $0xf0] sm:$0xff]
      %v1839 = vld [vmem:[%s12 + $0xf8] sm:$0xff]
      %v1840 = vld [vmem:[%s12 + $0x100] sm:$0xff]
      %v1841 = vld [vmem:[%s12 + $0x108] sm:$0xff]
      %v1842 = vld [vmem:[%s12 + $0x110] sm:$0xff]
      %v1843 = vld [vmem:[%s12 + $0x118] sm:$0xff]
      %v1844 = vld [vmem:[%s12 + $0x120] sm:$0xff]
      %v1845 = vld [vmem:[%s12 + $0x128] sm:$0xff]
      %v1846 = vld [vmem:[%s12 + $0x130] sm:$0xff]
      %v1847 = vld [vmem:[%s12 + $0x138] sm:$0xff]
      %v1848 = vld [vmem:[%s12 + $0x140] sm:$0xff]
      %v1849 = vld [vmem:[%s12 + $0x148] sm:$0xff]
      %v1850 = vld [vmem:[%s12 + $0x150] sm:$0xff]
      %v1851 = vld [vmem:[%s12 + $0x158] sm:$0xff]
      %v1852 = vld [vmem:[%s12 + $0x160] sm:$0xff]
      %v1853 = vld [vmem:[%s12 + $0x168] sm:$0xff]
      %v1854 = vld [vmem:[%s12 + $0x170] sm:$0xff]
      %v1855 = vld [vmem:[%s12 + $0x178] sm:$0xff]
      %v1856 = vld [vmem:[%s12 + $0x180] sm:$0xff]
      %v1857 = vld [vmem:[%s12 + $0x188] sm:$0xff]
      %v1858 = vld [vmem:[%s12 + $0x190] sm:$0xff]
      %v1859 = vld [vmem:[%s12 + $0x198] sm:$0xff]
      %v1860 = vld [vmem:[%s12 + $0x1a0] sm:$0xff]
      %v1861 = vld [vmem:[%s12 + $0x1a8] sm:$0xff]
      %v1862 = vld [vmem:[%s12 + $0x1b0] sm:$0xff]
      %v1863 = vld [vmem:[%s12 + $0x1b8] sm:$0xff]
      %v1864 = vld [vmem:[%s12 + $0x1c0] sm:$0xff]
      %v1865 = vld [vmem:[%s12 + $0x1c8] sm:$0xff]
      %v1866 = vld [vmem:[%s12 + $0x1d0] sm:$0xff]
      %v1867 = vld [vmem:[%s12 + $0x1d8] sm:$0xff]
      %v1868 = vld [vmem:[%s12 + $0x1e0] sm:$0xff]
      %v1869 = vld [vmem:[%s12 + $0x1e8] sm:$0xff]
      %v1870 = vld [vmem:[%s12 + $0x1f0] sm:$0xff]
      %v1871 = vld [vmem:[%s12 + $0x1f8] sm:$0xff]
      %v1872 = vld [vmem:[%s13] sm:$0x1]
      %v1874 = vlaneseq
      %v1875 = vshrl.u32 %v1874, 7
      %v1876 = vsub.s32 0, %v1875
      %v1877 = vrot.slane %v1872, %v1876
      %1879 = vmatprep.subr.mxu0 0.0
      %1880 = vmatpush1.msra.mxu0 %v1808
      %1881 = vmatprep.subr.mxu0 0.0
      %1882 = vmatpush1.msra.mxu0 %v1809
      %1883 = vmatprep.subr.mxu0 0.0
      %1884 = vmatpush1.msra.mxu0 %v1810
      %1885 = vmatprep.subr.mxu0 0.0
      %1886 = vmatpush1.msra.mxu0 %v1811
      %1887 = vmatprep.subr.mxu0 0.0
      %1888 = vmatpush1.msra.mxu0 %v1812
      %1889 = vmatprep.subr.mxu0 0.0
      %1890 = vmatpush1.msra.mxu0 %v1813
      %1891 = vmatprep.subr.mxu0 0.0
      %1892 = vmatpush1.msra.mxu0 %v1814
      %1893 = vmatprep.subr.mxu0 0.0
      %1894 = vmatpush1.msra.mxu0 %v1815
      %1895 = vmatprep.subr.mxu0 0.0
      %1896 = vmatpush1.msra.mxu0 %v1816
      %1897 = vmatprep.subr.mxu0 0.0
      %1898 = vmatpush1.msra.mxu0 %v1817
      %1899 = vmatprep.subr.mxu0 0.0
      %1900 = vmatpush1.msra.mxu0 %v1818
      %1901 = vmatprep.subr.mxu0 0.0
      %1902 = vmatpush1.msra.mxu0 %v1819
      %1903 = vmatprep.subr.mxu0 0.0
      %1904 = vmatpush1.msra.mxu0 %v1820
      %1905 = vmatprep.subr.mxu0 0.0
      %1906 = vmatpush1.msra.mxu0 %v1821
      %1907 = vmatprep.subr.mxu0 0.0
      %1908 = vmatpush1.msra.mxu0 %v1822
      %1909 = vmatprep.subr.mxu0 0.0
      %1910 = vmatpush1.msra.mxu0 %v1823
      %1911 = vmatprep.subr.mxu0 0.0
      %1912 = vmatpush1.msra.mxu0 %v1824
      %1913 = vmatprep.subr.mxu0 0.0
      %1914 = vmatpush1.msra.mxu0 %v1825
      %1915 = vmatprep.subr.mxu0 0.0
      %1916 = vmatpush1.msra.mxu0 %v1826
      %1917 = vmatprep.subr.mxu0 0.0
      %1918 = vmatpush1.msra.mxu0 %v1827
      %1919 = vmatprep.subr.mxu0 0.0
      %1920 = vmatpush1.msra.mxu0 %v1828
      %1921 = vmatprep.subr.mxu0 0.0
      %1922 = vmatpush1.msra.mxu0 %v1829
      %1923 = vmatprep.subr.mxu0 0.0
      %1924 = vmatpush1.msra.mxu0 %v1830
      %1925 = vmatprep.subr.mxu0 0.0
      %1926 = vmatpush1.msra.mxu0 %v1831
      %1927 = vmatprep.subr.mxu0 0.0
      %1928 = vmatpush1.msra.mxu0 %v1832
      %1929 = vmatprep.subr.mxu0 0.0
      %1930 = vmatpush1.msra.mxu0 %v1833
      %1931 = vmatprep.subr.mxu0 0.0
      %1932 = vmatpush1.msra.mxu0 %v1834
      %1933 = vmatprep.subr.mxu0 0.0
      %1934 = vmatpush1.msra.mxu0 %v1835
      %1935 = vmatprep.subr.mxu0 0.0
      %1936 = vmatpush1.msra.mxu0 %v1836
      %1937 = vmatprep.subr.mxu0 0.0
      %1938 = vmatpush1.msra.mxu0 %v1837
      %1939 = vmatprep.subr.mxu0 0.0
      %1940 = vmatpush1.msra.mxu0 %v1838
      %1941 = vmatprep.subr.mxu0 0.0
      %1942 = vmatpush1.msra.mxu0 %v1839
      %1943 = vmatprep.mubr.f32.mxu0 %v1805
      %1944 = vmatmul.mubr.f32.gmra.mrb[0].mxu0 %v1804
      %v1945 = vpop.f32.mrb[0].mxu0
      %v1946 = vadd.f32 %v1877, %v1945
      %v1947 = vpop.f32.mrb[0].mxu0
      %1948 = vdwg.mxu0
      %1949 = vmatprep.subr.mxu0 0.0
      %1950 = vmatpush1.msra.mxu0 %v1840
      %1951 = vmatprep.subr.mxu0 0.0
      %1952 = vmatpush1.msra.mxu0 %v1841
      %1953 = vmatprep.subr.mxu0 0.0
      %1954 = vmatpush1.msra.mxu0 %v1842
      %1955 = vmatprep.subr.mxu0 0.0
      %1956 = vmatpush1.msra.mxu0 %v1843
      %1957 = vmatprep.subr.mxu0 0.0
      %1958 = vmatpush1.msra.mxu0 %v1844
      %1959 = vmatprep.subr.mxu0 0.0
      %1960 = vmatpush1.msra.mxu0 %v1845
      %1961 = vmatprep.subr.mxu0 0.0
      %1962 = vmatpush1.msra.mxu0 %v1846
      %1963 = vmatprep.subr.mxu0 0.0
      %1964 = vmatpush1.msra.mxu0 %v1847
      %1965 = vmatprep.subr.mxu0 0.0
      %1966 = vmatpush1.msra.mxu0 %v1848
      %1967 = vmatprep.subr.mxu0 0.0
      %1968 = vmatpush1.msra.mxu0 %v1849
      %1969 = vmatprep.subr.mxu0 0.0
      %1970 = vmatpush1.msra.mxu0 %v1850
      %1971 = vmatprep.subr.mxu0 0.0
      %1972 = vmatpush1.msra.mxu0 %v1851
      %1973 = vmatprep.subr.mxu0 0.0
      %1974 = vmatpush1.msra.mxu0 %v1852
      %1975 = vmatprep.subr.mxu0 0.0
      %1976 = vmatpush1.msra.mxu0 %v1853
      %1977 = vmatprep.subr.mxu0 0.0
      %1978 = vmatpush1.msra.mxu0 %v1854
      %1979 = vmatprep.subr.mxu0 0.0
      %1980 = vmatpush1.msra.mxu0 %v1855
      %1981 = vmatprep.subr.mxu0 0.0
      %1982 = vmatpush1.msra.mxu0 %v1856
      %1983 = vmatprep.subr.mxu0 0.0
      %1984 = vmatpush1.msra.mxu0 %v1857
      %1985 = vmatprep.subr.mxu0 0.0
      %1986 = vmatpush1.msra.mxu0 %v1858
      %1987 = vmatprep.subr.mxu0 0.0
      %1988 = vmatpush1.msra.mxu0 %v1859
      %1989 = vmatprep.subr.mxu0 0.0
      %1990 = vmatpush1.msra.mxu0 %v1860
      %1991 = vmatprep.subr.mxu0 0.0
      %1992 = vmatpush1.msra.mxu0 %v1861
      %1993 = vmatprep.subr.mxu0 0.0
      %1994 = vmatpush1.msra.mxu0 %v1862
      %1995 = vmatprep.subr.mxu0 0.0
      %1996 = vmatpush1.msra.mxu0 %v1863
      %1997 = vmatprep.subr.mxu0 0.0
      %1998 = vmatpush1.msra.mxu0 %v1864
      %1999 = vmatprep.subr.mxu0 0.0
      %2000 = vmatpush1.msra.mxu0 %v1865
      %2001 = vmatprep.subr.mxu0 0.0
      %2002 = vmatpush1.msra.mxu0 %v1866
      %2003 = vmatprep.subr.mxu0 0.0
      %2004 = vmatpush1.msra.mxu0 %v1867
      %2005 = vmatprep.subr.mxu0 0.0
      %2006 = vmatpush1.msra.mxu0 %v1868
      %2007 = vmatprep.subr.mxu0 0.0
      %2008 = vmatpush1.msra.mxu0 %v1869
      %2009 = vmatprep.subr.mxu0 0.0
      %2010 = vmatpush1.msra.mxu0 %v1870
      %2011 = vmatprep.subr.mxu0 0.0
      %2012 = vmatpush1.msra.mxu0 %v1871
      %2013 = vmatprep.mubr.f32.mxu0 %v1807
      %2014 = vmatmul.mubr.f32.gmra.mrb[0].mxu0 %v1806
      %v2015 = vpop.f32.mrb[0].mxu0
      %v2016 = vadd.f32 %v1946, %v2015
      %v2017 = vpop.f32.mrb[0].mxu0
      %2018 = vdwg.mxu0
      %v2019 = vld [vmem:[%s14] sm:$0x1]
      %v2021 = vlaneseq
      %v2022 = vshrl.u32 %v2021, 7
      %v2023 = vsub.s32 0, %v2022
      %v2024 = vrot.slane %v2019, %v2023
      %v2026 = vmul.f32 %v2024, %v2016
      %v2027 = vadd.f32 %v1514, %v2026
      %2028 = vst [vmem:[%s489] sm:$0x1f] %v2027
      %p2029 = scmp.lt.s32.totalorder %s26, 1
      %s2030 = scalar_select %p2029, %s26, 1
      %s2031 = smul.addr %s2030, 8
      %s2032 = scalar_lea.vmem %s15, %s2031
      // Predicated region
      $region81: #{_lambda_.7} parent=79 // pred_check
        %p2033 = pneg %p364
      $region82: #{_lambda_.7} parent=79 // pred_check_branch
        %2035 = sbr.rel (%p2033) target = $region84
      $region83: #{_lambda_.7} parent=79 // pred_region
        _
      $region84: #{_lambda_.7} parent=79 // pred_fallthru
        _
    $region80: #{_lambda_.7} parent=5 // pred_fallthru
      _
    %p2036 = scmp.le.s32.totalorder 2, %s21
    // Predicated region
    $region85: #{_lambda_.7} parent=5 // pred_check
      %p2037 = pneg %p2036
    $region86: #{_lambda_.7} parent=5 // pred_check_branch
      %2039 = sbr.rel (%p2037) target = $region88
    $region87: #{_lambda_.7} parent=5 // pred_region
      %s2040 = ssub.s32 %s21, 2
      // Predicated region
      $region89: #{_lambda_.7} parent=87 // pred_check
        %p2041 = pneg %p370
      $region90: #{_lambda_.7} parent=87 // pred_check_branch
        %2043 = sbr.rel (%p2041) target = $region92
      $region91: #{_lambda_.7} parent=87 // pred_region
        %p2044 = scmp.lt.s32.totalorder %s27, 1
        %s2045 = scalar_select %p2044, %s27, 1
        %s2046 = smul.addr %s2045, 8
        %s2047 = scalar_lea.vmem %s15, %s2046
      $region92: #{_lambda_.7} parent=87 // pred_fallthru
        _
    $region88: #{_lambda_.7} parent=5 // pred_fallthru
      _
  $region6: #{_lambda_.7} parent=0 // loop_footer
    %s25 = sadd.s32 1, %s21
  $region7: #{_lambda_.7} parent=0 // loop_footer_branch
    %20 = sbr.rel target = $region3
  $region8: #{_lambda_.7} parent=0 // loop_exit
    _

// kernel: _lambda_.10
$region0: #{_lambda_.10}
  #allocation0 [shape = 'u32[]', space=smem, size = 0x4, offset = 0x4, fixed_abs, tag = 'smem constant byte address 0x4 - core index']
  #allocation1 [shape = 'u32[144,128]{1,0:T(1,128)}', space=vmem, size = 0x12000, scoped, tag = 'internal scratch']
  %s0 = inlined_call_operand.vmem [shape: f32[2,1,128], index: 0, kind: input, shape index: {}]
  %s1 = inlined_call_operand.vmem [shape: f32[2,4,128], index: 1, kind: input, shape index: {}]
  %s2 = inlined_call_operand.vmem [shape: f32[1,128], index: 2, kind: input, shape index: {}]
  %s3 = inlined_call_operand.vmem [shape: f32[1,128], index: 3, kind: input, shape index: {}]
  %s4 = inlined_call_operand.vmem [shape: f32[128,384], index: 4, kind: input, shape index: {}]
  %s5 = inlined_call_operand.vmem [shape: f32[1,384], index: 5, kind: input, shape index: {}]
  %s6 = inlined_call_operand.vmem [shape: f32[128,128], index: 6, kind: input, shape index: {}]
  %s7 = inlined_call_operand.vmem [shape: f32[1,128], index: 7, kind: input, shape index: {}]
  %s8 = inlined_call_operand.vmem [shape: f32[1,128], index: 8, kind: input, shape index: {}]
  %s9 = inlined_call_operand.vmem [shape: f32[1,128], index: 9, kind: input, shape index: {}]
  %s10 = inlined_call_operand.vmem [shape: f32[128,128], index: 10, kind: input, shape index: {}]
  %s11 = inlined_call_operand.vmem [shape: f32[1,128], index: 11, kind: input, shape index: {}]
  %s12 = inlined_call_operand.vmem [shape: f32[1,128], index: 12, kind: input, shape index: {}]
  %s13 = inlined_call_operand.vmem [shape: f32[1,128], index: 13, kind: input, shape index: {}]
  %s14 = inlined_call_operand.vmem [shape: f32[128,512], index: 14, kind: input, shape index: {}]
  %s15 = inlined_call_operand.vmem [shape: f32[1,512], index: 15, kind: input, shape index: {}]
  %s16 = inlined_call_operand.vmem [shape: f32[512,128], index: 16, kind: input, shape index: {}]
  %s17 = inlined_call_operand.vmem [shape: f32[1,128], index: 17, kind: input, shape index: {}]
  %s18 = inlined_call_operand.vmem [shape: f32[2,1,128], index: 18, kind: output, shape index: {}]
  %s19 = sld [smem:[#allocation0]]
  $region105: #{_lambda_.10} parent=0
    _
  %s21 = ssub.s32 1, %s19
  %s22 = scalar_select 0, %s21, %s19
  loop: start=0, step=1, limit=4
  $region2: #{_lambda_.10} parent=0 // loop_pre_header
    _
  $region3: #{_lambda_.10} parent=0 // loop_header
    %s24 = sphi 0, %s28
    %p25 = scmp.ge.s32.totalorder %s24, 4
    %s34 = sphi 0, %s36
    %s37 = sphi 0, %s34
    %s38 = sphi 0, %s37
    %s54 = sphi 0, %s38
    %s60 = sphi 0, %s62
    %s63 = sphi 0, %s60
    %s64 = sphi 0, %s63
    %s80 = sphi 0, %s64
    %s84 = sphi 0, %s84
    %s86 = sphi 0, %s84
    %s87 = sphi 0, %s86
    %s101 = sphi 0, %s87
    %s105 = sphi 0, %s105
    %s107 = sphi 0, %s105
    %s108 = sphi 0, %s107
    %s122 = sphi 0, %s108
    %s126 = sphi 0, %s126
    %s128 = sphi 0, %s126
    %s129 = sphi 0, %s128
    %s143 = sphi 0, %s129
    %s147 = sphi 0, %s147
    %s149 = sphi 0, %s147
    %s150 = sphi 0, %s149
    %s164 = sphi 0, %s150
    %s168 = sphi 0, %s168
    %s170 = sphi 0, %s168
    %s171 = sphi 0, %s170
    %s185 = sphi 0, %s171
    %s189 = sphi 0, %s189
    %s191 = sphi 0, %s189
    %s192 = sphi 0, %s191
    %s206 = sphi 0, %s192
    %s210 = sphi 0, %s210
    %s212 = sphi 0, %s210
    %s213 = sphi 0, %s212
    %s227 = sphi 0, %s213
    %s231 = sphi 0, %s231
    %s233 = sphi 0, %s231
    %s234 = sphi 0, %s233
    %s248 = sphi 0, %s234
    %s252 = sphi 0, %s252
    %s254 = sphi 0, %s252
    %s255 = sphi 0, %s254
    %s269 = sphi 0, %s255
    %s273 = sphi 0, %s273
    %s275 = sphi 0, %s273
    %s276 = sphi 0, %s275
    %s290 = sphi 0, %s276
    %s294 = sphi 0, %s294
    %s296 = sphi 0, %s294
    %s297 = sphi 0, %s296
    %s311 = sphi 0, %s297
    %s315 = sphi 0, %s315
    %s317 = sphi 0, %s315
    %s318 = sphi 0, %s317
    %s332 = sphi 0, %s318
    %s336 = sphi 0, %s336
    %s338 = sphi 0, %s336
    %s339 = sphi 0, %s338
    %s353 = sphi 0, %s339
    %s357 = sphi 0, %s357
    %s359 = sphi 0, %s357
    %s360 = sphi 0, %s359
    %s374 = sphi 0, %s360
    %s378 = sphi 0, %s378
    %s380 = sphi 0, %s378
    %s381 = sphi 0, %s380
    %s395 = sphi 0, %s381
    %s399 = sphi 0, %s399
    %s401 = sphi 0, %s399
    %s402 = sphi 0, %s401
    %s416 = sphi 0, %s402
    %s422 = sphi 0, %s424
    %s425 = sphi 0, %s422
    %s426 = sphi 0, %s425
    %s442 = sphi 0, %s426
  $region4: #{_lambda_.10} parent=0 // loop_header_branch
    %27 = sbr.rel (%p25) target = $region8
  $region5: #{_lambda_.10} parent=0 // loop_body
    %s29 = ssub.s32 %s24, 1
    %s30 = ssub.s32 %s24, 2
    %s31 = sadd.s32 %s24, 1
    %s32 = ssub.s32 %s24, %s31
    %p33 = scmp.eq.s32.totalorder %s32, 0
    %s35 = sadd.s32 %s34, 1
    %s36 = scalar_select %p33, %s34, %s35
    %p39 = pneg %p33
    %p40 = scmp.eq.s32.totalorder %s24, 1
    %p41 = por %p39, %p40
    %p42 = scmp.ne.s32.totalorder %s34, %s37
    %p43 = scmp.eq.s32.totalorder %s24, 0
    %p44 = por %p42, %p43
    %p45 = scmp.ne.s32.totalorder %s34, %s37
    %p46 = scmp.eq.s32.totalorder %s29, 1
    %p47 = por %p45, %p46
    %p48 = scmp.ne.s32.totalorder %s37, %s38
    %p49 = scmp.eq.s32.totalorder %s29, 0
    %p50 = por %p48, %p49
    %p51 = scmp.ne.s32.totalorder %s37, %s38
    %p52 = scmp.eq.s32.totalorder %s30, 1
    %p53 = por %p51, %p52
    %p55 = scmp.ne.s32.totalorder %s38, %s54
    %p56 = scmp.eq.s32.totalorder %s30, 0
    %p57 = por %p55, %p56
    %s58 = ssub.s32 %s24, %s31
    %p59 = scmp.eq.s32.totalorder %s58, 0
    %s61 = sadd.s32 %s60, 1
    %s62 = scalar_select %p59, %s60, %s61
    %p65 = pneg %p59
    %p66 = scmp.eq.s32.totalorder %s24, 1
    %p67 = por %p65, %p66
    %p68 = scmp.ne.s32.totalorder %s60, %s63
    %p69 = scmp.eq.s32.totalorder %s24, 0
    %p70 = por %p68, %p69
    %p71 = scmp.ne.s32.totalorder %s60, %s63
    %p72 = scmp.eq.s32.totalorder %s29, 1
    %p73 = por %p71, %p72
    %p74 = scmp.ne.s32.totalorder %s63, %s64
    %p75 = scmp.eq.s32.totalorder %s29, 0
    %p76 = por %p74, %p75
    %p77 = scmp.ne.s32.totalorder %s63, %s64
    %p78 = scmp.eq.s32.totalorder %s30, 1
    %p79 = por %p77, %p78
    %p81 = scmp.ne.s32.totalorder %s64, %s80
    %p82 = scmp.eq.s32.totalorder %s30, 0
    %p83 = por %p81, %p82
    %s85 = sadd.s32 %s84, 1
    %p88 = scmp.eq.s32.totalorder %s24, 1
    %p89 = scmp.ne.s32.totalorder %s84, %s86
    %p90 = scmp.eq.s32.totalorder %s24, 0
    %p91 = por %p89, %p90
    %p92 = scmp.ne.s32.totalorder %s84, %s86
    %p93 = scmp.eq.s32.totalorder %s29, 1
    %p94 = por %p92, %p93
    %p95 = scmp.ne.s32.totalorder %s86, %s87
    %p96 = scmp.eq.s32.totalorder %s29, 0
    %p97 = por %p95, %p96
    %p98 = scmp.ne.s32.totalorder %s86, %s87
    %p99 = scmp.eq.s32.totalorder %s30, 1
    %p100 = por %p98, %p99
    %p102 = scmp.ne.s32.totalorder %s87, %s101
    %p103 = scmp.eq.s32.totalorder %s30, 0
    %p104 = por %p102, %p103
    %s106 = sadd.s32 %s105, 1
    %p109 = scmp.eq.s32.totalorder %s24, 1
    %p110 = scmp.ne.s32.totalorder %s105, %s107
    %p111 = scmp.eq.s32.totalorder %s24, 0
    %p112 = por %p110, %p111
    %p113 = scmp.ne.s32.totalorder %s105, %s107
    %p114 = scmp.eq.s32.totalorder %s29, 1
    %p115 = por %p113, %p114
    %p116 = scmp.ne.s32.totalorder %s107, %s108
    %p117 = scmp.eq.s32.totalorder %s29, 0
    %p118 = por %p116, %p117
    %p119 = scmp.ne.s32.totalorder %s107, %s108
    %p120 = scmp.eq.s32.totalorder %s30, 1
    %p121 = por %p119, %p120
    %p123 = scmp.ne.s32.totalorder %s108, %s122
    %p124 = scmp.eq.s32.totalorder %s30, 0
    %p125 = por %p123, %p124
    %s127 = sadd.s32 %s126, 1
    %p130 = scmp.eq.s32.totalorder %s24, 1
    %p131 = scmp.ne.s32.totalorder %s126, %s128
    %p132 = scmp.eq.s32.totalorder %s24, 0
    %p133 = por %p131, %p132
    %p134 = scmp.ne.s32.totalorder %s126, %s128
    %p135 = scmp.eq.s32.totalorder %s29, 1
    %p136 = por %p134, %p135
    %p137 = scmp.ne.s32.totalorder %s128, %s129
    %p138 = scmp.eq.s32.totalorder %s29, 0
    %p139 = por %p137, %p138
    %p140 = scmp.ne.s32.totalorder %s128, %s129
    %p141 = scmp.eq.s32.totalorder %s30, 1
    %p142 = por %p140, %p141
    %p144 = scmp.ne.s32.totalorder %s129, %s143
    %p145 = scmp.eq.s32.totalorder %s30, 0
    %p146 = por %p144, %p145
    %s148 = sadd.s32 %s147, 1
    %p151 = scmp.eq.s32.totalorder %s24, 1
    %p152 = scmp.ne.s32.totalorder %s147, %s149
    %p153 = scmp.eq.s32.totalorder %s24, 0
    %p154 = por %p152, %p153
    %p155 = scmp.ne.s32.totalorder %s147, %s149
    %p156 = scmp.eq.s32.totalorder %s29, 1
    %p157 = por %p155, %p156
    %p158 = scmp.ne.s32.totalorder %s149, %s150
    %p159 = scmp.eq.s32.totalorder %s29, 0
    %p160 = por %p158, %p159
    %p161 = scmp.ne.s32.totalorder %s149, %s150
    %p162 = scmp.eq.s32.totalorder %s30, 1
    %p163 = por %p161, %p162
    %p165 = scmp.ne.s32.totalorder %s150, %s164
    %p166 = scmp.eq.s32.totalorder %s30, 0
    %p167 = por %p165, %p166
    %s169 = sadd.s32 %s168, 1
    %p172 = scmp.eq.s32.totalorder %s24, 1
    %p173 = scmp.ne.s32.totalorder %s168, %s170
    %p174 = scmp.eq.s32.totalorder %s24, 0
    %p175 = por %p173, %p174
    %p176 = scmp.ne.s32.totalorder %s168, %s170
    %p177 = scmp.eq.s32.totalorder %s29, 1
    %p178 = por %p176, %p177
    %p179 = scmp.ne.s32.totalorder %s170, %s171
    %p180 = scmp.eq.s32.totalorder %s29, 0
    %p181 = por %p179, %p180
    %p182 = scmp.ne.s32.totalorder %s170, %s171
    %p183 = scmp.eq.s32.totalorder %s30, 1
    %p184 = por %p182, %p183
    %p186 = scmp.ne.s32.totalorder %s171, %s185
    %p187 = scmp.eq.s32.totalorder %s30, 0
    %p188 = por %p186, %p187
    %s190 = sadd.s32 %s189, 1
    %p193 = scmp.eq.s32.totalorder %s24, 1
    %p194 = scmp.ne.s32.totalorder %s189, %s191
    %p195 = scmp.eq.s32.totalorder %s24, 0
    %p196 = por %p194, %p195
    %p197 = scmp.ne.s32.totalorder %s189, %s191
    %p198 = scmp.eq.s32.totalorder %s29, 1
    %p199 = por %p197, %p198
    %p200 = scmp.ne.s32.totalorder %s191, %s192
    %p201 = scmp.eq.s32.totalorder %s29, 0
    %p202 = por %p200, %p201
    %p203 = scmp.ne.s32.totalorder %s191, %s192
    %p204 = scmp.eq.s32.totalorder %s30, 1
    %p205 = por %p203, %p204
    %p207 = scmp.ne.s32.totalorder %s192, %s206
    %p208 = scmp.eq.s32.totalorder %s30, 0
    %p209 = por %p207, %p208
    %s211 = sadd.s32 %s210, 1
    %p214 = scmp.eq.s32.totalorder %s24, 1
    %p215 = scmp.ne.s32.totalorder %s210, %s212
    %p216 = scmp.eq.s32.totalorder %s24, 0
    %p217 = por %p215, %p216
    %p218 = scmp.ne.s32.totalorder %s210, %s212
    %p219 = scmp.eq.s32.totalorder %s29, 1
    %p220 = por %p218, %p219
    %p221 = scmp.ne.s32.totalorder %s212, %s213
    %p222 = scmp.eq.s32.totalorder %s29, 0
    %p223 = por %p221, %p222
    %p224 = scmp.ne.s32.totalorder %s212, %s213
    %p225 = scmp.eq.s32.totalorder %s30, 1
    %p226 = por %p224, %p225
    %p228 = scmp.ne.s32.totalorder %s213, %s227
    %p229 = scmp.eq.s32.totalorder %s30, 0
    %p230 = por %p228, %p229
    %s232 = sadd.s32 %s231, 1
    %p235 = scmp.eq.s32.totalorder %s24, 1
    %p236 = scmp.ne.s32.totalorder %s231, %s233
    %p237 = scmp.eq.s32.totalorder %s24, 0
    %p238 = por %p236, %p237
    %p239 = scmp.ne.s32.totalorder %s231, %s233
    %p240 = scmp.eq.s32.totalorder %s29, 1
    %p241 = por %p239, %p240
    %p242 = scmp.ne.s32.totalorder %s233, %s234
    %p243 = scmp.eq.s32.totalorder %s29, 0
    %p244 = por %p242, %p243
    %p245 = scmp.ne.s32.totalorder %s233, %s234
    %p246 = scmp.eq.s32.totalorder %s30, 1
    %p247 = por %p245, %p246
    %p249 = scmp.ne.s32.totalorder %s234, %s248
    %p250 = scmp.eq.s32.totalorder %s30, 0
    %p251 = por %p249, %p250
    %s253 = sadd.s32 %s252, 1
    %p256 = scmp.eq.s32.totalorder %s24, 1
    %p257 = scmp.ne.s32.totalorder %s252, %s254
    %p258 = scmp.eq.s32.totalorder %s24, 0
    %p259 = por %p257, %p258
    %p260 = scmp.ne.s32.totalorder %s252, %s254
    %p261 = scmp.eq.s32.totalorder %s29, 1
    %p262 = por %p260, %p261
    %p263 = scmp.ne.s32.totalorder %s254, %s255
    %p264 = scmp.eq.s32.totalorder %s29, 0
    %p265 = por %p263, %p264
    %p266 = scmp.ne.s32.totalorder %s254, %s255
    %p267 = scmp.eq.s32.totalorder %s30, 1
    %p268 = por %p266, %p267
    %p270 = scmp.ne.s32.totalorder %s255, %s269
    %p271 = scmp.eq.s32.totalorder %s30, 0
    %p272 = por %p270, %p271
    %s274 = sadd.s32 %s273, 1
    %p277 = scmp.eq.s32.totalorder %s24, 1
    %p278 = scmp.ne.s32.totalorder %s273, %s275
    %p279 = scmp.eq.s32.totalorder %s24, 0
    %p280 = por %p278, %p279
    %p281 = scmp.ne.s32.totalorder %s273, %s275
    %p282 = scmp.eq.s32.totalorder %s29, 1
    %p283 = por %p281, %p282
    %p284 = scmp.ne.s32.totalorder %s275, %s276
    %p285 = scmp.eq.s32.totalorder %s29, 0
    %p286 = por %p284, %p285
    %p287 = scmp.ne.s32.totalorder %s275, %s276
    %p288 = scmp.eq.s32.totalorder %s30, 1
    %p289 = por %p287, %p288
    %p291 = scmp.ne.s32.totalorder %s276, %s290
    %p292 = scmp.eq.s32.totalorder %s30, 0
    %p293 = por %p291, %p292
    %s295 = sadd.s32 %s294, 1
    %p298 = scmp.eq.s32.totalorder %s24, 1
    %p299 = scmp.ne.s32.totalorder %s294, %s296
    %p300 = scmp.eq.s32.totalorder %s24, 0
    %p301 = por %p299, %p300
    %p302 = scmp.ne.s32.totalorder %s294, %s296
    %p303 = scmp.eq.s32.totalorder %s29, 1
    %p304 = por %p302, %p303
    %p305 = scmp.ne.s32.totalorder %s296, %s297
    %p306 = scmp.eq.s32.totalorder %s29, 0
    %p307 = por %p305, %p306
    %p308 = scmp.ne.s32.totalorder %s296, %s297
    %p309 = scmp.eq.s32.totalorder %s30, 1
    %p310 = por %p308, %p309
    %p312 = scmp.ne.s32.totalorder %s297, %s311
    %p313 = scmp.eq.s32.totalorder %s30, 0
    %p314 = por %p312, %p313
    %s316 = sadd.s32 %s315, 1
    %p319 = scmp.eq.s32.totalorder %s24, 1
    %p320 = scmp.ne.s32.totalorder %s315, %s317
    %p321 = scmp.eq.s32.totalorder %s24, 0
    %p322 = por %p320, %p321
    %p323 = scmp.ne.s32.totalorder %s315, %s317
    %p324 = scmp.eq.s32.totalorder %s29, 1
    %p325 = por %p323, %p324
    %p326 = scmp.ne.s32.totalorder %s317, %s318
    %p327 = scmp.eq.s32.totalorder %s29, 0
    %p328 = por %p326, %p327
    %p329 = scmp.ne.s32.totalorder %s317, %s318
    %p330 = scmp.eq.s32.totalorder %s30, 1
    %p331 = por %p329, %p330
    %p333 = scmp.ne.s32.totalorder %s318, %s332
    %p334 = scmp.eq.s32.totalorder %s30, 0
    %p335 = por %p333, %p334
    %s337 = sadd.s32 %s336, 1
    %p340 = scmp.eq.s32.totalorder %s24, 1
    %p341 = scmp.ne.s32.totalorder %s336, %s338
    %p342 = scmp.eq.s32.totalorder %s24, 0
    %p343 = por %p341, %p342
    %p344 = scmp.ne.s32.totalorder %s336, %s338
    %p345 = scmp.eq.s32.totalorder %s29, 1
    %p346 = por %p344, %p345
    %p347 = scmp.ne.s32.totalorder %s338, %s339
    %p348 = scmp.eq.s32.totalorder %s29, 0
    %p349 = por %p347, %p348
    %p350 = scmp.ne.s32.totalorder %s338, %s339
    %p351 = scmp.eq.s32.totalorder %s30, 1
    %p352 = por %p350, %p351
    %p354 = scmp.ne.s32.totalorder %s339, %s353
    %p355 = scmp.eq.s32.totalorder %s30, 0
    %p356 = por %p354, %p355
    %s358 = sadd.s32 %s357, 1
    %p361 = scmp.eq.s32.totalorder %s24, 1
    %p362 = scmp.ne.s32.totalorder %s357, %s359
    %p363 = scmp.eq.s32.totalorder %s24, 0
    %p364 = por %p362, %p363
    %p365 = scmp.ne.s32.totalorder %s357, %s359
    %p366 = scmp.eq.s32.totalorder %s29, 1
    %p367 = por %p365, %p366
    %p368 = scmp.ne.s32.totalorder %s359, %s360
    %p369 = scmp.eq.s32.totalorder %s29, 0
    %p370 = por %p368, %p369
    %p371 = scmp.ne.s32.totalorder %s359, %s360
    %p372 = scmp.eq.s32.totalorder %s30, 1
    %p373 = por %p371, %p372
    %p375 = scmp.ne.s32.totalorder %s360, %s374
    %p376 = scmp.eq.s32.totalorder %s30, 0
    %p377 = por %p375, %p376
    %s379 = sadd.s32 %s378, 1
    %p382 = scmp.eq.s32.totalorder %s24, 1
    %p383 = scmp.ne.s32.totalorder %s378, %s380
    %p384 = scmp.eq.s32.totalorder %s24, 0
    %p385 = por %p383, %p384
    %p386 = scmp.ne.s32.totalorder %s378, %s380
    %p387 = scmp.eq.s32.totalorder %s29, 1
    %p388 = por %p386, %p387
    %p389 = scmp.ne.s32.totalorder %s380, %s381
    %p390 = scmp.eq.s32.totalorder %s29, 0
    %p391 = por %p389, %p390
    %p392 = scmp.ne.s32.totalorder %s380, %s381
    %p393 = scmp.eq.s32.totalorder %s30, 1
    %p394 = por %p392, %p393
    %p396 = scmp.ne.s32.totalorder %s381, %s395
    %p397 = scmp.eq.s32.totalorder %s30, 0
    %p398 = por %p396, %p397
    %s400 = sadd.s32 %s399, 1
    %p403 = scmp.eq.s32.totalorder %s24, 1
    %p404 = scmp.ne.s32.totalorder %s399, %s401
    %p405 = scmp.eq.s32.totalorder %s24, 0
    %p406 = por %p404, %p405
    %p407 = scmp.ne.s32.totalorder %s399, %s401
    %p408 = scmp.eq.s32.totalorder %s29, 1
    %p409 = por %p407, %p408
    %p410 = scmp.ne.s32.totalorder %s401, %s402
    %p411 = scmp.eq.s32.totalorder %s29, 0
    %p412 = por %p410, %p411
    %p413 = scmp.ne.s32.totalorder %s401, %s402
    %p414 = scmp.eq.s32.totalorder %s30, 1
    %p415 = por %p413, %p414
    %p417 = scmp.ne.s32.totalorder %s402, %s416
    %p418 = scmp.eq.s32.totalorder %s30, 0
    %p419 = por %p417, %p418
    %s420 = ssub.s32 %s24, %s31
    %p421 = scmp.eq.s32.totalorder %s420, 0
    %s423 = sadd.s32 %s422, 1
    %s424 = scalar_select %p421, %s422, %s423
    %p427 = pneg %p421
    %p428 = scmp.eq.s32.totalorder %s24, 1
    %p429 = por %p427, %p428
    %p430 = scmp.ne.s32.totalorder %s422, %s425
    %p431 = scmp.eq.s32.totalorder %s24, 0
    %p432 = por %p430, %p431
    %p433 = scmp.ne.s32.totalorder %s422, %s425
    %p434 = scmp.eq.s32.totalorder %s29, 1
    %p435 = por %p433, %p434
    %p436 = scmp.ne.s32.totalorder %s425, %s426
    %p437 = scmp.eq.s32.totalorder %s29, 0
    %p438 = por %p436, %p437
    %p439 = scmp.ne.s32.totalorder %s425, %s426
    %p440 = scmp.eq.s32.totalorder %s30, 1
    %p441 = por %p439, %p440
    %p443 = scmp.ne.s32.totalorder %s426, %s442
    %p444 = scmp.eq.s32.totalorder %s30, 0
    %p445 = por %p443, %p444
    %p446 = scmp.le.s32.totalorder 1, %s24
    %p447 = scmp.lt.s32.totalorder %s24, 3
    %p448 = pnand %p446, %p447
    %p449 = pneg %p448
    // Predicated region
    $region9: #{_lambda_.10} parent=5 // pred_check
      _
    $region10: #{_lambda_.10} parent=5 // pred_check_branch
      %451 = sbr.rel (%p448) target = $region12
    $region11: #{_lambda_.10} parent=5 // pred_region
      %s452 = ssub.s32 %s24, 1
      // Predicated region
      $region13: #{_lambda_.10} parent=11 // pred_check
        %p453 = pneg %p97
      $region14: #{_lambda_.10} parent=11 // pred_check_branch
        %455 = sbr.rel (%p453) target = $region16
      $region15: #{_lambda_.10} parent=11 // pred_region
        _
      $region16: #{_lambda_.10} parent=11 // pred_fallthru
        _
      // Predicated region
      $region17: #{_lambda_.10} parent=11 // pred_check
        %p456 = pneg %p118
      $region18: #{_lambda_.10} parent=11 // pred_check_branch
        %458 = sbr.rel (%p456) target = $region20
      $region19: #{_lambda_.10} parent=11 // pred_region
        _
      $region20: #{_lambda_.10} parent=11 // pred_fallthru
        _
      // Predicated region
      $region21: #{_lambda_.10} parent=11 // pred_check
        %p459 = pneg %p139
      $region22: #{_lambda_.10} parent=11 // pred_check_branch
        %461 = sbr.rel (%p459) target = $region24
      $region23: #{_lambda_.10} parent=11 // pred_region
        _
      $region24: #{_lambda_.10} parent=11 // pred_fallthru
        _
      // Predicated region
      $region25: #{_lambda_.10} parent=11 // pred_check
        %p462 = pneg %p160
      $region26: #{_lambda_.10} parent=11 // pred_check_branch
        %464 = sbr.rel (%p462) target = $region28
      $region27: #{_lambda_.10} parent=11 // pred_region
        _
      $region28: #{_lambda_.10} parent=11 // pred_fallthru
        _
      // Predicated region
      $region29: #{_lambda_.10} parent=11 // pred_check
        %p465 = pneg %p181
      $region30: #{_lambda_.10} parent=11 // pred_check_branch
        %467 = sbr.rel (%p465) target = $region32
      $region31: #{_lambda_.10} parent=11 // pred_region
        _
      $region32: #{_lambda_.10} parent=11 // pred_fallthru
        _
      // Predicated region
      $region33: #{_lambda_.10} parent=11 // pred_check
        %p468 = pneg %p202
      $region34: #{_lambda_.10} parent=11 // pred_check_branch
        %470 = sbr.rel (%p468) target = $region36
      $region35: #{_lambda_.10} parent=11 // pred_region
        _
      $region36: #{_lambda_.10} parent=11 // pred_fallthru
        _
      // Predicated region
      $region37: #{_lambda_.10} parent=11 // pred_check
        %p471 = pneg %p223
      $region38: #{_lambda_.10} parent=11 // pred_check_branch
        %473 = sbr.rel (%p471) target = $region40
      $region39: #{_lambda_.10} parent=11 // pred_region
        _
      $region40: #{_lambda_.10} parent=11 // pred_fallthru
        _
      // Predicated region
      $region41: #{_lambda_.10} parent=11 // pred_check
        %p474 = pneg %p244
      $region42: #{_lambda_.10} parent=11 // pred_check_branch
        %476 = sbr.rel (%p474) target = $region44
      $region43: #{_lambda_.10} parent=11 // pred_region
        _
      $region44: #{_lambda_.10} parent=11 // pred_fallthru
        _
      // Predicated region
      $region45: #{_lambda_.10} parent=11 // pred_check
        %p477 = pneg %p265
      $region46: #{_lambda_.10} parent=11 // pred_check_branch
        %479 = sbr.rel (%p477) target = $region48
      $region47: #{_lambda_.10} parent=11 // pred_region
        _
      $region48: #{_lambda_.10} parent=11 // pred_fallthru
        _
      // Predicated region
      $region49: #{_lambda_.10} parent=11 // pred_check
        %p480 = pneg %p286
      $region50: #{_lambda_.10} parent=11 // pred_check_branch
        %482 = sbr.rel (%p480) target = $region52
      $region51: #{_lambda_.10} parent=11 // pred_region
        _
      $region52: #{_lambda_.10} parent=11 // pred_fallthru
        _
      // Predicated region
      $region53: #{_lambda_.10} parent=11 // pred_check
        %p483 = pneg %p307
      $region54: #{_lambda_.10} parent=11 // pred_check_branch
        %485 = sbr.rel (%p483) target = $region56
      $region55: #{_lambda_.10} parent=11 // pred_region
        _
      $region56: #{_lambda_.10} parent=11 // pred_fallthru
        _
      // Predicated region
      $region57: #{_lambda_.10} parent=11 // pred_check
        %p486 = pneg %p328
      $region58: #{_lambda_.10} parent=11 // pred_check_branch
        %488 = sbr.rel (%p486) target = $region60
      $region59: #{_lambda_.10} parent=11 // pred_region
        _
      $region60: #{_lambda_.10} parent=11 // pred_fallthru
        _
      // Predicated region
      $region61: #{_lambda_.10} parent=11 // pred_check
        %p489 = pneg %p349
      $region62: #{_lambda_.10} parent=11 // pred_check_branch
        %491 = sbr.rel (%p489) target = $region64
      $region63: #{_lambda_.10} parent=11 // pred_region
        _
      $region64: #{_lambda_.10} parent=11 // pred_fallthru
        _
      // Predicated region
      $region65: #{_lambda_.10} parent=11 // pred_check
        %p492 = pneg %p370
      $region66: #{_lambda_.10} parent=11 // pred_check_branch
        %494 = sbr.rel (%p492) target = $region68
      $region67: #{_lambda_.10} parent=11 // pred_region
        _
      $region68: #{_lambda_.10} parent=11 // pred_fallthru
        _
      // Predicated region
      $region69: #{_lambda_.10} parent=11 // pred_check
        %p495 = pneg %p391
      $region70: #{_lambda_.10} parent=11 // pred_check_branch
        %497 = sbr.rel (%p495) target = $region72
      $region71: #{_lambda_.10} parent=11 // pred_region
        _
      $region72: #{_lambda_.10} parent=11 // pred_fallthru
        _
      // Predicated region
      $region73: #{_lambda_.10} parent=11 // pred_check
        %p498 = pneg %p412
      $region74: #{_lambda_.10} parent=11 // pred_check_branch
        %500 = sbr.rel (%p498) target = $region76
      $region75: #{_lambda_.10} parent=11 // pred_region
        _
      $region76: #{_lambda_.10} parent=11 // pred_fallthru
        _
    $region12: #{_lambda_.10} parent=5 // pred_fallthru
      _
    %p501 = scmp.lt.s32.totalorder %s24, 2
    // Predicated region
    $region77: #{_lambda_.10} parent=5 // pred_check
      %p502 = pneg %p501
    $region78: #{_lambda_.10} parent=5 // pred_check_branch
      %504 = sbr.rel (%p502) target = $region80
    $region79: #{_lambda_.10} parent=5 // pred_region
      // Predicated region
      $region81: #{_lambda_.10} parent=79 // pred_check
        %p505 = pneg %p44
      $region82: #{_lambda_.10} parent=79 // pred_check_branch
        %507 = sbr.rel (%p505) target = $region84
      $region83: #{_lambda_.10} parent=79 // pred_region
        %p508 = scmp.lt.s32.totalorder %s24, 1
        %s509 = scalar_select %p508, %s24, 1
        %s510 = scalar_lea.vmem %s0, %s509
      $region84: #{_lambda_.10} parent=79 // pred_fallthru
        _
      // Predicated region
      $region85: #{_lambda_.10} parent=79 // pred_check
        %p511 = pneg %p70
      $region86: #{_lambda_.10} parent=79 // pred_check_branch
        %513 = sbr.rel (%p511) target = $region88
      $region87: #{_lambda_.10} parent=79 // pred_region
        %p514 = scmp.lt.s32.totalorder %s24, 1
        %s515 = scalar_select %p514, %s24, 1
        %s516 = smul.addr %s515, 4
        %s517 = scalar_lea.vmem %s1, %s516
      $region88: #{_lambda_.10} parent=79 // pred_fallthru
        _
    $region80: #{_lambda_.10} parent=5 // pred_fallthru
      _
    %p518 = scmp.le.s32.totalorder 1, %s24
    %p519 = scmp.lt.s32.totalorder %s24, 3
    %p520 = pnand %p518, %p519
    %p521 = pneg %p520
    // Predicated region
    $region89: #{_lambda_.10} parent=5 // pred_check
      _
    $region90: #{_lambda_.10} parent=5 // pred_check_branch
      %523 = sbr.rel (%p520) target = $region92
    $region91: #{_lambda_.10} parent=5 // pred_region
      %s524 = ssub.s32 %s24, 1
      %p525 = scmp.lt.s32.totalorder %s29, 1
      %s526 = scalar_select %p525, %s29, 1
      %s527 = scalar_lea.vmem %s0, %s526
      %p528 = pneg %p50
      %p529 = pneg %p47
      %p530 = scmp.lt.s32.totalorder %s29, 1
      %s531 = scalar_select %p530, %s29, 1
      %s532 = smul.addr %s531, 4
      %s533 = scalar_lea.vmem %s1, %s532
      %p534 = pneg %p76
      %p535 = pneg %p73
      %p536 = pneg %p97
      %p537 = pneg %p94
      %p538 = pneg %p118
      %p539 = pneg %p115
      %p540 = pneg %p139
      %p541 = pneg %p136
      %p542 = pneg %p160
      %p543 = pneg %p157
      %p544 = pneg %p181
      %p545 = pneg %p178
      %p546 = pneg %p202
      %p547 = pneg %p199
      %p548 = pneg %p223
      %p549 = pneg %p220
      %p550 = pneg %p244
      %p551 = pneg %p241
      %p552 = pneg %p265
      %p553 = pneg %p262
      %p554 = pneg %p286
      %p555 = pneg %p283
      %p556 = pneg %p307
      %p557 = pneg %p304
      %p558 = pneg %p328
      %p559 = pneg %p325
      %p560 = pneg %p349
      %p561 = pneg %p346
      %p562 = pneg %p370
      %p563 = pneg %p367
      %p564 = pneg %p391
      %p565 = pneg %p388
      %p566 = pneg %p412
      %p567 = pneg %p409
      %p568 = pneg %p438
      %p569 = pneg %p435
      %p570 = scmp.lt.s32.totalorder %s29, 1
      %s571 = scalar_select %p570, %s29, 1
      %s572 = scalar_lea.vmem %s18, %s571
      %p573 = scmp.lt.s32.totalorder %s29, 1
      %s574 = scalar_select %p573, %s29, 1
      %s575 = scalar_lea.vmem %s0, %s574
      %p576 = scmp.lt.s32.totalorder %s29, 1
      %s577 = scalar_select %p576, %s29, 1
      %s578 = smul.addr %s577, 4
      %s579 = scalar_lea.vmem %s1, %s578
      %p580 = scmp.lt.s32.totalorder %s29, 1
      %s581 = scalar_select %p580, %s29, 1
      %s582 = scalar_lea.vmem %s18, %s581
      %v583 = vld [vmem:[%s575] sm:$0x1]
      %v584 = vld [vmem:[%s579] sm:$0xf]
      %vm585 = vcmask 1040384
      %v586 = vsel %vm585, %v583, 0.0
      %587 = vadd.xlane.f32.xlu0 %v586
      %v588 = vpop.xlane.xlu0 %587
      %v589 = vrcp.pop 128.0
      %v590 = vmul.f32 %v588, %v589
      %v591 = vsub.f32 %v583, %v590
      %v592 = vmul.f32 %v591, %v591
      %v593 = vsel %vm585, %v592, 0.0
      %594 = vadd.xlane.f32.xlu0 %v593
      %v595 = vpop.xlane.xlu0 %594
      %v596 = vmul.f32 %v595, %v589
      %v597 = vadd.f32 %v596, 1e-05
      %v598 = vrsqrt.pop %v597
      %v599 = vmul.f32 %v591, %v598
      %v600 = vld [vmem:[%s2] sm:$0x1]
      %v601 = vmul.f32 %v599, %v600
      %v602 = vld [vmem:[%s3] sm:$0x1]
      %v603 = vadd.f32 %v601, %v602
      %v604 = vld [vmem:[%s4 + $0x10] sm:$0xff]
      %v605 = vld [vmem:[%s4 + $0x28] sm:$0xff]
      %v606 = vld [vmem:[%s4 + $0x40] sm:$0xff]
      %v607 = vld [vmem:[%s4 + $0x58] sm:$0xff]
      %v608 = vld [vmem:[%s4 + $0x70] sm:$0xff]
      %v609 = vld [vmem:[%s4 + $0x88] sm:$0xff]
      %v610 = vld [vmem:[%s4 + $0xa0] sm:$0xff]
      %v611 = vld [vmem:[%s4 + $0xb8] sm:$0xff]
      %v612 = vld [vmem:[%s4 + $0xd0] sm:$0xff]
      %v613 = vld [vmem:[%s4 + $0xe8] sm:$0xff]
      %v614 = vld [vmem:[%s4 + $0x100] sm:$0xff]
      %v615 = vld [vmem:[%s4 + $0x118] sm:$0xff]
      %v616 = vld [vmem:[%s4 + $0x130] sm:$0xff]
      %v617 = vld [vmem:[%s4 + $0x148] sm:$0xff]
      %v618 = vld [vmem:[%s4 + $0x160] sm:$0xff]
      %v619 = vld [vmem:[%s4 + $0x178] sm:$0xff]
      %v620 = vld [vmem:[%s5] sm:$0x7]
      %v622 = vlaneseq
      %v623 = vshrl.u32 %v622, 7
      %v624 = vsub.s32 2, %v623
      %v625 = vrot.slane %v620, %v624
      %627 = vmatprep.subr.mxu0 0.0
      %628 = vmatpush1.msra.mxu0 %v604
      %629 = vmatprep.subr.mxu0 0.0
      %630 = vmatpush1.msra.mxu0 %v605
      %631 = vmatprep.subr.mxu0 0.0
      %632 = vmatpush1.msra.mxu0 %v606
      %633 = vmatprep.subr.mxu0 0.0
      %634 = vmatpush1.msra.mxu0 %v607
      %635 = vmatprep.subr.mxu0 0.0
      %636 = vmatpush1.msra.mxu0 %v608
      %637 = vmatprep.subr.mxu0 0.0
      %638 = vmatpush1.msra.mxu0 %v609
      %639 = vmatprep.subr.mxu0 0.0
      %640 = vmatpush1.msra.mxu0 %v610
      %641 = vmatprep.subr.mxu0 0.0
      %642 = vmatpush1.msra.mxu0 %v611
      %643 = vmatprep.subr.mxu0 0.0
      %644 = vmatpush1.msra.mxu0 %v612
      %645 = vmatprep.subr.mxu0 0.0
      %646 = vmatpush1.msra.mxu0 %v613
      %647 = vmatprep.subr.mxu0 0.0
      %648 = vmatpush1.msra.mxu0 %v614
      %649 = vmatprep.subr.mxu0 0.0
      %650 = vmatpush1.msra.mxu0 %v615
      %651 = vmatprep.subr.mxu0 0.0
      %652 = vmatpush1.msra.mxu0 %v616
      %653 = vmatprep.subr.mxu0 0.0
      %654 = vmatpush1.msra.mxu0 %v617
      %655 = vmatprep.subr.mxu0 0.0
      %656 = vmatpush1.msra.mxu0 %v618
      %657 = vmatprep.subr.mxu0 0.0
      %658 = vmatpush1.msra.mxu0 %v619
      %659 = vmatprep.subr.mxu0 0.0
      %660 = vmatpush1.msra.mxu0 0.0
      %661 = vmatprep.subr.mxu0 0.0
      %662 = vmatpush1.msra.mxu0 0.0
      %663 = vmatprep.subr.mxu0 0.0
      %664 = vmatpush1.msra.mxu0 0.0
      %665 = vmatprep.subr.mxu0 0.0
      %666 = vmatpush1.msra.mxu0 0.0
      %667 = vmatprep.subr.mxu0 0.0
      %668 = vmatpush1.msra.mxu0 0.0
      %669 = vmatprep.subr.mxu0 0.0
      %670 = vmatpush1.msra.mxu0 0.0
      %671 = vmatprep.subr.mxu0 0.0
      %672 = vmatpush1.msra.mxu0 0.0
      %673 = vmatprep.subr.mxu0 0.0
      %674 = vmatpush1.msra.mxu0 0.0
      %675 = vmatprep.subr.mxu0 0.0
      %676 = vmatpush1.msra.mxu0 0.0
      %677 = vmatprep.subr.mxu0 0.0
      %678 = vmatpush1.msra.mxu0 0.0
      %679 = vmatprep.subr.mxu0 0.0
      %680 = vmatpush1.msra.mxu0 0.0
      %681 = vmatprep.subr.mxu0 0.0
      %682 = vmatpush1.msra.mxu0 0.0
      %683 = vmatprep.subr.mxu0 0.0
      %684 = vmatpush1.msra.mxu0 0.0
      %685 = vmatprep.subr.mxu0 0.0
      %686 = vmatpush1.msra.mxu0 0.0
      %687 = vmatprep.subr.mxu0 0.0
      %688 = vmatpush1.msra.mxu0 0.0
      %689 = vmatprep.subr.mxu0 0.0
      %690 = vmatpush1.msra.mxu0 0.0
      %691 = vmatprep.mubr.f32.mxu0 0.0
      %692 = vmatmul.mubr.f32.gmra.mrb[0].mxu0 %v603
      %v693 = vpop.f32.mrb[0].mxu0
      %v694 = vadd.f32 %v625, %v693
      %v695 = vpop.f32.mrb[0].mxu0
      %696 = vdwg.mxu0
      %v697 = vld [vmem:[%s6] sm:$0xff]
      %v698 = vld [vmem:[%s6 + $0x8] sm:$0xff]
      %v699 = vld [vmem:[%s6 + $0x10] sm:$0xff]
      %v700 = vld [vmem:[%s6 + $0x18] sm:$0xff]
      %v701 = vld [vmem:[%s6 + $0x20] sm:$0xff]
      %v702 = vld [vmem:[%s6 + $0x28] sm:$0xff]
      %v703 = vld [vmem:[%s6 + $0x30] sm:$0xff]
      %v704 = vld [vmem:[%s6 + $0x38] sm:$0xff]
      %v705 = vld [vmem:[%s6 + $0x40] sm:$0xff]
      %v706 = vld [vmem:[%s6 + $0x48] sm:$0xff]
      %v707 = vld [vmem:[%s6 + $0x50] sm:$0xff]
      %v708 = vld [vmem:[%s6 + $0x58] sm:$0xff]
      %v709 = vld [vmem:[%s6 + $0x60] sm:$0xff]
      %v710 = vld [vmem:[%s6 + $0x68] sm:$0xff]
      %v711 = vld [vmem:[%s6 + $0x70] sm:$0xff]
      %v712 = vld [vmem:[%s6 + $0x78] sm:$0xff]
      %v713 = vld [vmem:[%s7] sm:$0x1]
      %714 = vmatprep.subr.mxu0 0.0
      %715 = vmatpush1.msra.mxu0 %v697
      %716 = vmatprep.subr.mxu0 0.0
      %717 = vmatpush1.msra.mxu0 %v698
      %718 = vmatprep.subr.mxu0 0.0
      %719 = vmatpush1.msra.mxu0 %v699
      %720 = vmatprep.subr.mxu0 0.0
      %721 = vmatpush1.msra.mxu0 %v700
      %722 = vmatprep.subr.mxu0 0.0
      %723 = vmatpush1.msra.mxu0 %v701
      %724 = vmatprep.subr.mxu0 0.0
      %725 = vmatpush1.msra.mxu0 %v702
      %726 = vmatprep.subr.mxu0 0.0
      %727 = vmatpush1.msra.mxu0 %v703
      %728 = vmatprep.subr.mxu0 0.0
      %729 = vmatpush1.msra.mxu0 %v704
      %730 = vmatprep.subr.mxu0 0.0
      %731 = vmatpush1.msra.mxu0 %v705
      %732 = vmatprep.subr.mxu0 0.0
      %733 = vmatpush1.msra.mxu0 %v706
      %734 = vmatprep.subr.mxu0 0.0
      %735 = vmatpush1.msra.mxu0 %v707
      %736 = vmatprep.subr.mxu0 0.0
      %737 = vmatpush1.msra.mxu0 %v708
      %738 = vmatprep.subr.mxu0 0.0
      %739 = vmatpush1.msra.mxu0 %v709
      %740 = vmatprep.subr.mxu0 0.0
      %741 = vmatpush1.msra.mxu0 %v710
      %742 = vmatprep.subr.mxu0 0.0
      %743 = vmatpush1.msra.mxu0 %v711
      %744 = vmatprep.subr.mxu0 0.0
      %745 = vmatpush1.msra.mxu0 %v712
      %746 = vmatprep.subr.mxu0 0.0
      %747 = vmatpush1.msra.mxu0 0.0
      %748 = vmatprep.subr.mxu0 0.0
      %749 = vmatpush1.msra.mxu0 0.0
      %750 = vmatprep.subr.mxu0 0.0
      %751 = vmatpush1.msra.mxu0 0.0
      %752 = vmatprep.subr.mxu0 0.0
      %753 = vmatpush1.msra.mxu0 0.0
      %754 = vmatprep.subr.mxu0 0.0
      %755 = vmatpush1.msra.mxu0 0.0
      %756 = vmatprep.subr.mxu0 0.0
      %757 = vmatpush1.msra.mxu0 0.0
      %758 = vmatprep.subr.mxu0 0.0
      %759 = vmatpush1.msra.mxu0 0.0
      %760 = vmatprep.subr.mxu0 0.0
      %761 = vmatpush1.msra.mxu0 0.0
      %762 = vmatprep.subr.mxu0 0.0
      %763 = vmatpush1.msra.mxu0 0.0
      %764 = vmatprep.subr.mxu0 0.0
      %765 = vmatpush1.msra.mxu0 0.0
      %766 = vmatprep.subr.mxu0 0.0
      %767 = vmatpush1.msra.mxu0 0.0
      %768 = vmatprep.subr.mxu0 0.0
      %769 = vmatpush1.msra.mxu0 0.0
      %770 = vmatprep.subr.mxu0 0.0
      %771 = vmatpush1.msra.mxu0 0.0
      %772 = vmatprep.subr.mxu0 0.0
      %773 = vmatpush1.msra.mxu0 0.0
      %774 = vmatprep.subr.mxu0 0.0
      %775 = vmatpush1.msra.mxu0 0.0
      %776 = vmatprep.subr.mxu0 0.0
      %777 = vmatpush1.msra.mxu0 0.0
      %778 = vmatprep.mubr.f32.mxu0 0.0
      %779 = vmatmul.mubr.f32.gmra.mrb[0].mxu0 %v694
      %v780 = vpop.f32.mrb[0].mxu0
      %v781 = vadd.f32 %v713, %v780
      %v782 = vpop.f32.mrb[0].mxu0
      %783 = vdwg.mxu0
      %v784 = vadd.f32 %v583, %v781
      %v785 = vsel %vm585, %v784, 0.0
      %786 = vadd.xlane.f32.xlu0 %v785
      %v787 = vpop.xlane.xlu0 %786
      %v788 = vmul.f32 %v787, %v589
      %v789 = vsub.f32 %v784, %v788
      %v790 = vmul.f32 %v789, %v789
      %v791 = vsel %vm585, %v790, 0.0
      %792 = vadd.xlane.f32.xlu0 %v791
      %v793 = vpop.xlane.xlu0 %792
      %v794 = vmul.f32 %v793, %v589
      %v795 = vadd.f32 %v794, 1e-05
      %v796 = vrsqrt.pop %v795
      %v797 = vmul.f32 %v789, %v796
      %v798 = vld [vmem:[%s8] sm:$0x1]
      %v799 = vmul.f32 %v797, %v798
      %v800 = vld [vmem:[%s9] sm:$0x1]
      %v801 = vadd.f32 %v799, %v800
      %vm802 = vcmask 261120
      %v804 = vsel %vm802, %v801, 0
      %v807 = vsel %vm802, %v584, 0
      %809 = vmatprep.subr.mxu0 0.0
      %810 = vmatpush1.xpose.msra.mxu0 %v807
      %811 = vmatprep.subr.mxu0 0.0
      %812 = vmatpush1.xpose.msra.mxu0 0.0
      %813 = vmatprep.subr.mxu0 0.0
      %814 = vmatpush1.xpose.msra.mxu0 0.0
      %815 = vmatprep.subr.mxu0 0.0
      %816 = vmatpush1.xpose.msra.mxu0 0.0
      %817 = vmatprep.subr.mxu0 0.0
      %818 = vmatpush1.xpose.msra.mxu0 0.0
      %819 = vmatprep.subr.mxu0 0.0
      %820 = vmatpush1.xpose.msra.mxu0 0.0
      %821 = vmatprep.subr.mxu0 0.0
      %822 = vmatpush1.xpose.msra.mxu0 0.0
      %823 = vmatprep.subr.mxu0 0.0
      %824 = vmatpush1.xpose.msra.mxu0 0.0
      %825 = vmatprep.subr.mxu0 0.0
      %826 = vmatpush1.xpose.msra.mxu0 0.0
      %827 = vmatprep.subr.mxu0 0.0
      %828 = vmatpush1.xpose.msra.mxu0 0.0
      %829 = vmatprep.subr.mxu0 0.0
      %830 = vmatpush1.xpose.msra.mxu0 0.0
      %831 = vmatprep.subr.mxu0 0.0
      %832 = vmatpush1.xpose.msra.mxu0 0.0
      %833 = vmatprep.subr.mxu0 0.0
      %834 = vmatpush1.xpose.msra.mxu0 0.0
      %835 = vmatprep.subr.mxu0 0.0
      %836 = vmatpush1.xpose.msra.mxu0 0.0
      %837 = vmatprep.subr.mxu0 0.0
      %838 = vmatpush1.xpose.msra.mxu0 0.0
      %839 = vmatprep.subr.mxu0 0.0
      %840 = vmatpush1.xpose.msra.mxu0 0.0
      %841 = vmatprep.subr.mxu0 0.0
      %842 = vmatpush1.xpose.msra.mxu0 0.0
      %843 = vmatprep.subr.mxu0 0.0
      %844 = vmatpush1.xpose.msra.mxu0 0.0
      %845 = vmatprep.subr.mxu0 0.0
      %846 = vmatpush1.xpose.msra.mxu0 0.0
      %847 = vmatprep.subr.mxu0 0.0
      %848 = vmatpush1.xpose.msra.mxu0 0.0
      %849 = vmatprep.subr.mxu0 0.0
      %850 = vmatpush1.xpose.msra.mxu0 0.0
      %851 = vmatprep.subr.mxu0 0.0
      %852 = vmatpush1.xpose.msra.mxu0 0.0
      %853 = vmatprep.subr.mxu0 0.0
      %854 = vmatpush1.xpose.msra.mxu0 0.0
      %855 = vmatprep.subr.mxu0 0.0
      %856 = vmatpush1.xpose.msra.mxu0 0.0
      %857 = vmatprep.subr.mxu0 0.0
      %858 = vmatpush1.xpose.msra.mxu0 0.0
      %859 = vmatprep.subr.mxu0 0.0
      %860 = vmatpush1.xpose.msra.mxu0 0.0
      %861 = vmatprep.subr.mxu0 0.0
      %862 = vmatpush1.xpose.msra.mxu0 0.0
      %863 = vmatprep.subr.mxu0 0.0
      %864 = vmatpush1.xpose.msra.mxu0 0.0
      %865 = vmatprep.subr.mxu0 0.0
      %866 = vmatpush1.xpose.msra.mxu0 0.0
      %867 = vmatprep.subr.mxu0 0.0
      %868 = vmatpush1.xpose.msra.mxu0 0.0
      %869 = vmatprep.subr.mxu0 0.0
      %870 = vmatpush1.xpose.msra.mxu0 0.0
      %871 = vmatprep.subr.mxu0 0.0
      %872 = vmatpush1.xpose.msra.mxu0 0.0
      %873 = vmatprep.mubr.f32.mxu0 0.0
      %874 = vmatmul.mubr.f32.gmra.mrb[0].mxu0 %v804
      %v875 = vpop.f32.mrb[0].mxu0
      %v876 = vadd.f32 0.0, %v875
      %v877 = vpop.f32.mrb[0].mxu0
      %878 = vdwg.mxu0
      %v879 = vmul.f32 %v876, 0.17677669
      %vm880 = vcmask 24576
      %v881 = vsel %vm880, %v879, -inf
      %882 = vmax.xlane.f32.xlu0 %v881
      %v883 = vpop.xlane.xlu0 %882
      %v884 = vsub.f32 %v879, %v883
      %v885 = vmul.f32 %v884, 1.442695
      %v886 = vpow.pop %v885
      %v887 = vsel %vm880, %v886, 0.0
      %888 = vadd.xlane.f32.xlu0 %v887
      %v889 = vpop.xlane.xlu0 %888
      %v890 = vrcp.pop %v889
      %v891 = vmul.f32 %v886, %v890
      %vm892 = vcmask 31744
      %v894 = vsel %vm892, %v891, 0
      %vm896 = vcmask 1043456
      %v897 = vsel %vm896, %v584, 0
      %899 = vmatprep.subr.mxu0 0.0
      %900 = vmatpush1.msra.mxu0 %v897
      %901 = vmatprep.subr.mxu0 0.0
      %902 = vmatpush1.msra.mxu0 0.0
      %903 = vmatprep.subr.mxu0 0.0
      %904 = vmatpush1.msra.mxu0 0.0
      %905 = vmatprep.subr.mxu0 0.0
      %906 = vmatpush1.msra.mxu0 0.0
      %907 = vmatprep.subr.mxu0 0.0
      %908 = vmatpush1.msra.mxu0 0.0
      %909 = vmatprep.subr.mxu0 0.0
      %910 = vmatpush1.msra.mxu0 0.0
      %911 = vmatprep.subr.mxu0 0.0
      %912 = vmatpush1.msra.mxu0 0.0
      %913 = vmatprep.subr.mxu0 0.0
      %914 = vmatpush1.msra.mxu0 0.0
      %915 = vmatprep.subr.mxu0 0.0
      %916 = vmatpush1.msra.mxu0 0.0
      %917 = vmatprep.subr.mxu0 0.0
      %918 = vmatpush1.msra.mxu0 0.0
      %919 = vmatprep.subr.mxu0 0.0
      %920 = vmatpush1.msra.mxu0 0.0
      %921 = vmatprep.subr.mxu0 0.0
      %922 = vmatpush1.msra.mxu0 0.0
      %923 = vmatprep.subr.mxu0 0.0
      %924 = vmatpush1.msra.mxu0 0.0
      %925 = vmatprep.subr.mxu0 0.0
      %926 = vmatpush1.msra.mxu0 0.0
      %927 = vmatprep.subr.mxu0 0.0
      %928 = vmatpush1.msra.mxu0 0.0
      %929 = vmatprep.subr.mxu0 0.0
      %930 = vmatpush1.msra.mxu0 0.0
      %931 = vmatprep.subr.mxu0 0.0
      %932 = vmatpush1.msra.mxu0 0.0
      %933 = vmatprep.subr.mxu0 0.0
      %934 = vmatpush1.msra.mxu0 0.0
      %935 = vmatprep.subr.mxu0 0.0
      %936 = vmatpush1.msra.mxu0 0.0
      %937 = vmatprep.subr.mxu0 0.0
      %938 = vmatpush1.msra.mxu0 0.0
      %939 = vmatprep.subr.mxu0 0.0
      %940 = vmatpush1.msra.mxu0 0.0
      %941 = vmatprep.subr.mxu0 0.0
      %942 = vmatpush1.msra.mxu0 0.0
      %943 = vmatprep.subr.mxu0 0.0
      %944 = vmatpush1.msra.mxu0 0.0
      %945 = vmatprep.subr.mxu0 0.0
      %946 = vmatpush1.msra.mxu0 0.0
      %947 = vmatprep.subr.mxu0 0.0
      %948 = vmatpush1.msra.mxu0 0.0
      %949 = vmatprep.subr.mxu0 0.0
      %950 = vmatpush1.msra.mxu0 0.0
      %951 = vmatprep.subr.mxu0 0.0
      %952 = vmatpush1.msra.mxu0 0.0
      %953 = vmatprep.subr.mxu0 0.0
      %954 = vmatpush1.msra.mxu0 0.0
      %955 = vmatprep.subr.mxu0 0.0
      %956 = vmatpush1.msra.mxu0 0.0
      %957 = vmatprep.subr.mxu0 0.0
      %958 = vmatpush1.msra.mxu0 0.0
      %959 = vmatprep.subr.mxu0 0.0
      %960 = vmatpush1.msra.mxu0 0.0
      %961 = vmatprep.subr.mxu0 0.0
      %962 = vmatpush1.msra.mxu0 0.0
      %963 = vmatprep.mubr.f32.mxu0 0.0
      %964 = vmatmul.mubr.f32.gmra.mrb[0].mxu0 %v894
      %v965 = vpop.f32.mrb[0].mxu0
      %v966 = vadd.f32 0.0, %v965
      %v967 = vpop.f32.mrb[0].mxu0
      %968 = vdwg.mxu0
      %v969 = vlaneseq
      %v970 = vshrl.u32 %v969, 7
      %v971 = vsub.s32 0, %v970
      %v972 = vrot.slane %v801, %v971
      %973 = vrot.lane.b32.xlu0 %v972, 96
      %v974 = vpop.permute.xlu0 %973
      %975 = vrot.lane.b32.xlu0 %v584, 96
      %v976 = vpop.permute.xlu0 %975
      %v977 = vsel %vm802, %v974, 0
      %v979 = vsel %vm802, %v976, 0
      %981 = vmatprep.subr.mxu0 0.0
      %982 = vmatpush1.xpose.msra.mxu0 %v979
      %983 = vmatprep.subr.mxu0 0.0
      %984 = vmatpush1.xpose.msra.mxu0 0.0
      %985 = vmatprep.subr.mxu0 0.0
      %986 = vmatpush1.xpose.msra.mxu0 0.0
      %987 = vmatprep.subr.mxu0 0.0
      %988 = vmatpush1.xpose.msra.mxu0 0.0
      %989 = vmatprep.subr.mxu0 0.0
      %990 = vmatpush1.xpose.msra.mxu0 0.0
      %991 = vmatprep.subr.mxu0 0.0
      %992 = vmatpush1.xpose.msra.mxu0 0.0
      %993 = vmatprep.subr.mxu0 0.0
      %994 = vmatpush1.xpose.msra.mxu0 0.0
      %995 = vmatprep.subr.mxu0 0.0
      %996 = vmatpush1.xpose.msra.mxu0 0.0
      %997 = vmatprep.subr.mxu0 0.0
      %998 = vmatpush1.xpose.msra.mxu0 0.0
      %999 = vmatprep.subr.mxu0 0.0
      %1000 = vmatpush1.xpose.msra.mxu0 0.0
      %1001 = vmatprep.subr.mxu0 0.0
      %1002 = vmatpush1.xpose.msra.mxu0 0.0
      %1003 = vmatprep.subr.mxu0 0.0
      %1004 = vmatpush1.xpose.msra.mxu0 0.0
      %1005 = vmatprep.subr.mxu0 0.0
      %1006 = vmatpush1.xpose.msra.mxu0 0.0
      %1007 = vmatprep.subr.mxu0 0.0
      %1008 = vmatpush1.xpose.msra.mxu0 0.0
      %1009 = vmatprep.subr.mxu0 0.0
      %1010 = vmatpush1.xpose.msra.mxu0 0.0
      %1011 = vmatprep.subr.mxu0 0.0
      %1012 = vmatpush1.xpose.msra.mxu0 0.0
      %1013 = vmatprep.subr.mxu0 0.0
      %1014 = vmatpush1.xpose.msra.mxu0 0.0
      %1015 = vmatprep.subr.mxu0 0.0
      %1016 = vmatpush1.xpose.msra.mxu0 0.0
      %1017 = vmatprep.subr.mxu0 0.0
      %1018 = vmatpush1.xpose.msra.mxu0 0.0
      %1019 = vmatprep.subr.mxu0 0.0
      %1020 = vmatpush1.xpose.msra.mxu0 0.0
      %1021 = vmatprep.subr.mxu0 0.0
      %1022 = vmatpush1.xpose.msra.mxu0 0.0
      %1023 = vmatprep.subr.mxu0 0.0
      %1024 = vmatpush1.xpose.msra.mxu0 0.0
      %1025 = vmatprep.subr.mxu0 0.0
      %1026 = vmatpush1.xpose.msra.mxu0 0.0
      %1027 = vmatprep.subr.mxu0 0.0
      %1028 = vmatpush1.xpose.msra.mxu0 0.0
      %1029 = vmatprep.subr.mxu0 0.0
      %1030 = vmatpush1.xpose.msra.mxu0 0.0
      %1031 = vmatprep.subr.mxu0 0.0
      %1032 = vmatpush1.xpose.msra.mxu0 0.0
      %1033 = vmatprep.subr.mxu0 0.0
      %1034 = vmatpush1.xpose.msra.mxu0 0.0
      %1035 = vmatprep.subr.mxu0 0.0
      %1036 = vmatpush1.xpose.msra.mxu0 0.0
      %1037 = vmatprep.subr.mxu0 0.0
      %1038 = vmatpush1.xpose.msra.mxu0 0.0
      %1039 = vmatprep.subr.mxu0 0.0
      %1040 = vmatpush1.xpose.msra.mxu0 0.0
      %1041 = vmatprep.subr.mxu0 0.0
      %1042 = vmatpush1.xpose.msra.mxu0 0.0
      %1043 = vmatprep.subr.mxu0 0.0
      %1044 = vmatpush1.xpose.msra.mxu0 0.0
      %1045 = vmatprep.mubr.f32.mxu0 0.0
      %1046 = vmatmul.mubr.f32.gmra.mrb[0].mxu0 %v977
      %v1047 = vpop.f32.mrb[0].mxu0
      %v1048 = vadd.f32 0.0, %v1047
      %v1049 = vpop.f32.mrb[0].mxu0
      %1050 = vdwg.mxu0
      %v1051 = vmul.f32 %v1048, 0.17677669
      %v1052 = vsel %vm880, %v1051, -inf
      %1053 = vmax.xlane.f32.xlu0 %v1052
      %v1054 = vpop.xlane.xlu0 %1053
      %v1055 = vsub.f32 %v1051, %v1054
      %v1056 = vmul.f32 %v1055, 1.442695
      %v1057 = vpow.pop %v1056
      %v1058 = vsel %vm880, %v1057, 0.0
      %1059 = vadd.xlane.f32.xlu0 %v1058
      %v1060 = vpop.xlane.xlu0 %1059
      %v1061 = vrcp.pop %v1060
      %v1062 = vmul.f32 %v1057, %v1061
      %v1064 = vsel %vm892, %v1062, 0
      %v1066 = vsel %vm896, %v976, 0
      %1068 = vmatprep.subr.mxu0 0.0
      %1069 = vmatpush1.msra.mxu0 %v1066
      %1070 = vmatprep.subr.mxu0 0.0
      %1071 = vmatpush1.msra.mxu0 0.0
      %1072 = vmatprep.subr.mxu0 0.0
      %1073 = vmatpush1.msra.mxu0 0.0
      %1074 = vmatprep.subr.mxu0 0.0
      %1075 = vmatpush1.msra.mxu0 0.0
      %1076 = vmatprep.subr.mxu0 0.0
      %1077 = vmatpush1.msra.mxu0 0.0
      %1078 = vmatprep.subr.mxu0 0.0
      %1079 = vmatpush1.msra.mxu0 0.0
      %1080 = vmatprep.subr.mxu0 0.0
      %1081 = vmatpush1.msra.mxu0 0.0
      %1082 = vmatprep.subr.mxu0 0.0
      %1083 = vmatpush1.msra.mxu0 0.0
      %1084 = vmatprep.subr.mxu0 0.0
      %1085 = vmatpush1.msra.mxu0 0.0
      %1086 = vmatprep.subr.mxu0 0.0
      %1087 = vmatpush1.msra.mxu0 0.0
      %1088 = vmatprep.subr.mxu0 0.0
      %1089 = vmatpush1.msra.mxu0 0.0
      %1090 = vmatprep.subr.mxu0 0.0
      %1091 = vmatpush1.msra.mxu0 0.0
      %1092 = vmatprep.subr.mxu0 0.0
      %1093 = vmatpush1.msra.mxu0 0.0
      %1094 = vmatprep.subr.mxu0 0.0
      %1095 = vmatpush1.msra.mxu0 0.0
      %1096 = vmatprep.subr.mxu0 0.0
      %1097 = vmatpush1.msra.mxu0 0.0
      %1098 = vmatprep.subr.mxu0 0.0
      %1099 = vmatpush1.msra.mxu0 0.0
      %1100 = vmatprep.subr.mxu0 0.0
      %1101 = vmatpush1.msra.mxu0 0.0
      %1102 = vmatprep.subr.mxu0 0.0
      %1103 = vmatpush1.msra.mxu0 0.0
      %1104 = vmatprep.subr.mxu0 0.0
      %1105 = vmatpush1.msra.mxu0 0.0
      %1106 = vmatprep.subr.mxu0 0.0
      %1107 = vmatpush1.msra.mxu0 0.0
      %1108 = vmatprep.subr.mxu0 0.0
      %1109 = vmatpush1.msra.mxu0 0.0
      %1110 = vmatprep.subr.mxu0 0.0
      %1111 = vmatpush1.msra.mxu0 0.0
      %1112 = vmatprep.subr.mxu0 0.0
      %1113 = vmatpush1.msra.mxu0 0.0
      %1114 = vmatprep.subr.mxu0 0.0
      %1115 = vmatpush1.msra.mxu0 0.0
      %1116 = vmatprep.subr.mxu0 0.0
      %1117 = vmatpush1.msra.mxu0 0.0
      %1118 = vmatprep.subr.mxu0 0.0
      %1119 = vmatpush1.msra.mxu0 0.0
      %1120 = vmatprep.subr.mxu0 0.0
      %1121 = vmatpush1.msra.mxu0 0.0
      %1122 = vmatprep.subr.mxu0 0.0
      %1123 = vmatpush1.msra.mxu0 0.0
      %1124 = vmatprep.subr.mxu0 0.0
      %1125 = vmatpush1.msra.mxu0 0.0
      %1126 = vmatprep.subr.mxu0 0.0
      %1127 = vmatpush1.msra.mxu0 0.0
      %1128 = vmatprep.subr.mxu0 0.0
      %1129 = vmatpush1.msra.mxu0 0.0
      %1130 = vmatprep.subr.mxu0 0.0
      %1131 = vmatpush1.msra.mxu0 0.0
      %1132 = vmatprep.mubr.f32.mxu0 0.0
      %1133 = vmatmul.mubr.f32.gmra.mrb[0].mxu0 %v1064
      %v1134 = vpop.f32.mrb[0].mxu0
      %v1135 = vadd.f32 0.0, %v1134
      %v1136 = vpop.f32.mrb[0].mxu0
      %1137 = vdwg.mxu0
      %1138 = vrot.lane.b32.xlu0 %v972, 64
      %v1139 = vpop.permute.xlu0 %1138
      %1140 = vrot.lane.b32.xlu0 %v584, 64
      %v1141 = vpop.permute.xlu0 %1140
      %v1142 = vsel %vm802, %v1139, 0
      %v1144 = vsel %vm802, %v1141, 0
      %1146 = vmatprep.subr.mxu0 0.0
      %1147 = vmatpush1.xpose.msra.mxu0 %v1144
      %1148 = vmatprep.subr.mxu0 0.0
      %1149 = vmatpush1.xpose.msra.mxu0 0.0
      %1150 = vmatprep.subr.mxu0 0.0
      %1151 = vmatpush1.xpose.msra.mxu0 0.0
      %1152 = vmatprep.subr.mxu0 0.0
      %1153 = vmatpush1.xpose.msra.mxu0 0.0
      %1154 = vmatprep.subr.mxu0 0.0
      %1155 = vmatpush1.xpose.msra.mxu0 0.0
      %1156 = vmatprep.subr.mxu0 0.0
      %1157 = vmatpush1.xpose.msra.mxu0 0.0
      %1158 = vmatprep.subr.mxu0 0.0
      %1159 = vmatpush1.xpose.msra.mxu0 0.0
      %1160 = vmatprep.subr.mxu0 0.0
      %1161 = vmatpush1.xpose.msra.mxu0 0.0
      %1162 = vmatprep.subr.mxu0 0.0
      %1163 = vmatpush1.xpose.msra.mxu0 0.0
      %1164 = vmatprep.subr.mxu0 0.0
      %1165 = vmatpush1.xpose.msra.mxu0 0.0
      %1166 = vmatprep.subr.mxu0 0.0
      %1167 = vmatpush1.xpose.msra.mxu0 0.0
      %1168 = vmatprep.subr.mxu0 0.0
      %1169 = vmatpush1.xpose.msra.mxu0 0.0
      %1170 = vmatprep.subr.mxu0 0.0
      %1171 = vmatpush1.xpose.msra.mxu0 0.0
      %1172 = vmatprep.subr.mxu0 0.0
      %1173 = vmatpush1.xpose.msra.mxu0 0.0
      %1174 = vmatprep.subr.mxu0 0.0
      %1175 = vmatpush1.xpose.msra.mxu0 0.0
      %1176 = vmatprep.subr.mxu0 0.0
      %1177 = vmatpush1.xpose.msra.mxu0 0.0
      %1178 = vmatprep.subr.mxu0 0.0
      %1179 = vmatpush1.xpose.msra.mxu0 0.0
      %1180 = vmatprep.subr.mxu0 0.0
      %1181 = vmatpush1.xpose.msra.mxu0 0.0
      %1182 = vmatprep.subr.mxu0 0.0
      %1183 = vmatpush1.xpose.msra.mxu0 0.0
      %1184 = vmatprep.subr.mxu0 0.0
      %1185 = vmatpush1.xpose.msra.mxu0 0.0
      %1186 = vmatprep.subr.mxu0 0.0
      %1187 = vmatpush1.xpose.msra.mxu0 0.0
      %1188 = vmatprep.subr.mxu0 0.0
      %1189 = vmatpush1.xpose.msra.mxu0 0.0
      %1190 = vmatprep.subr.mxu0 0.0
      %1191 = vmatpush1.xpose.msra.mxu0 0.0
      %1192 = vmatprep.subr.mxu0 0.0
      %1193 = vmatpush1.xpose.msra.mxu0 0.0
      %1194 = vmatprep.subr.mxu0 0.0
      %1195 = vmatpush1.xpose.msra.mxu0 0.0
      %1196 = vmatprep.subr.mxu0 0.0
      %1197 = vmatpush1.xpose.msra.mxu0 0.0
      %1198 = vmatprep.subr.mxu0 0.0
      %1199 = vmatpush1.xpose.msra.mxu0 0.0
      %1200 = vmatprep.subr.mxu0 0.0
      %1201 = vmatpush1.xpose.msra.mxu0 0.0
      %1202 = vmatprep.subr.mxu0 0.0
      %1203 = vmatpush1.xpose.msra.mxu0 0.0
      %1204 = vmatprep.subr.mxu0 0.0
      %1205 = vmatpush1.xpose.msra.mxu0 0.0
      %1206 = vmatprep.subr.mxu0 0.0
      %1207 = vmatpush1.xpose.msra.mxu0 0.0
      %1208 = vmatprep.subr.mxu0 0.0
      %1209 = vmatpush1.xpose.msra.mxu0 0.0
      %1210 = vmatprep.mubr.f32.mxu0 0.0
      %1211 = vmatmul.mubr.f32.gmra.mrb[0].mxu0 %v1142
      %v1212 = vpop.f32.mrb[0].mxu0
      %v1213 = vadd.f32 0.0, %v1212
      %v1214 = vpop.f32.mrb[0].mxu0
      %1215 = vdwg.mxu0
      %v1216 = vmul.f32 %v1213, 0.17677669
      %v1217 = vsel %vm880, %v1216, -inf
      %1218 = vmax.xlane.f32.xlu0 %v1217
      %v1219 = vpop.xlane.xlu0 %1218
      %v1220 = vsub.f32 %v1216, %v1219
      %v1221 = vmul.f32 %v1220, 1.442695
      %v1222 = vpow.pop %v1221
      %v1223 = vsel %vm880, %v1222, 0.0
      %1224 = vadd.xlane.f32.xlu0 %v1223
      %v1225 = vpop.xlane.xlu0 %1224
      %v1226 = vrcp.pop %v1225
      %v1227 = vmul.f32 %v1222, %v1226
      %v1229 = vsel %vm892, %v1227, 0
      %v1231 = vsel %vm896, %v1141, 0
      %1233 = vmatprep.subr.mxu0 0.0
      %1234 = vmatpush1.msra.mxu0 %v1231
      %1235 = vmatprep.subr.mxu0 0.0
      %1236 = vmatpush1.msra.mxu0 0.0
      %1237 = vmatprep.subr.mxu0 0.0
      %1238 = vmatpush1.msra.mxu0 0.0
      %1239 = vmatprep.subr.mxu0 0.0
      %1240 = vmatpush1.msra.mxu0 0.0
      %1241 = vmatprep.subr.mxu0 0.0
      %1242 = vmatpush1.msra.mxu0 0.0
      %1243 = vmatprep.subr.mxu0 0.0
      %1244 = vmatpush1.msra.mxu0 0.0
      %1245 = vmatprep.subr.mxu0 0.0
      %1246 = vmatpush1.msra.mxu0 0.0
      %1247 = vmatprep.subr.mxu0 0.0
      %1248 = vmatpush1.msra.mxu0 0.0
      %1249 = vmatprep.subr.mxu0 0.0
      %1250 = vmatpush1.msra.mxu0 0.0
      %1251 = vmatprep.subr.mxu0 0.0
      %1252 = vmatpush1.msra.mxu0 0.0
      %1253 = vmatprep.subr.mxu0 0.0
      %1254 = vmatpush1.msra.mxu0 0.0
      %1255 = vmatprep.subr.mxu0 0.0
      %1256 = vmatpush1.msra.mxu0 0.0
      %1257 = vmatprep.subr.mxu0 0.0
      %1258 = vmatpush1.msra.mxu0 0.0
      %1259 = vmatprep.subr.mxu0 0.0
      %1260 = vmatpush1.msra.mxu0 0.0
      %1261 = vmatprep.subr.mxu0 0.0
      %1262 = vmatpush1.msra.mxu0 0.0
      %1263 = vmatprep.subr.mxu0 0.0
      %1264 = vmatpush1.msra.mxu0 0.0
      %1265 = vmatprep.subr.mxu0 0.0
      %1266 = vmatpush1.msra.mxu0 0.0
      %1267 = vmatprep.subr.mxu0 0.0
      %1268 = vmatpush1.msra.mxu0 0.0
      %1269 = vmatprep.subr.mxu0 0.0
      %1270 = vmatpush1.msra.mxu0 0.0
      %1271 = vmatprep.subr.mxu0 0.0
      %1272 = vmatpush1.msra.mxu0 0.0
      %1273 = vmatprep.subr.mxu0 0.0
      %1274 = vmatpush1.msra.mxu0 0.0
      %1275 = vmatprep.subr.mxu0 0.0
      %1276 = vmatpush1.msra.mxu0 0.0
      %1277 = vmatprep.subr.mxu0 0.0
      %1278 = vmatpush1.msra.mxu0 0.0
      %1279 = vmatprep.subr.mxu0 0.0
      %1280 = vmatpush1.msra.mxu0 0.0
      %1281 = vmatprep.subr.mxu0 0.0
      %1282 = vmatpush1.msra.mxu0 0.0
      %1283 = vmatprep.subr.mxu0 0.0
      %1284 = vmatpush1.msra.mxu0 0.0
      %1285 = vmatprep.subr.mxu0 0.0
      %1286 = vmatpush1.msra.mxu0 0.0
      %1287 = vmatprep.subr.mxu0 0.0
      %1288 = vmatpush1.msra.mxu0 0.0
      %1289 = vmatprep.subr.mxu0 0.0
      %1290 = vmatpush1.msra.mxu0 0.0
      %1291 = vmatprep.subr.mxu0 0.0
      %1292 = vmatpush1.msra.mxu0 0.0
      %1293 = vmatprep.subr.mxu0 0.0
      %1294 = vmatpush1.msra.mxu0 0.0
      %1295 = vmatprep.subr.mxu0 0.0
      %1296 = vmatpush1.msra.mxu0 0.0
      %1297 = vmatprep.mubr.f32.mxu0 0.0
      %1298 = vmatmul.mubr.f32.gmra.mrb[0].mxu0 %v1229
      %v1299 = vpop.f32.mrb[0].mxu0
      %v1300 = vadd.f32 0.0, %v1299
      %v1301 = vpop.f32.mrb[0].mxu0
      %1302 = vdwg.mxu0
      %1303 = vrot.lane.b32.xlu0 %v972, 32
      %v1304 = vpop.permute.xlu0 %1303
      %1305 = vrot.lane.b32.xlu0 %v584, 32
      %v1306 = vpop.permute.xlu0 %1305
      %v1307 = vsel %vm802, %v1304, 0
      %v1309 = vsel %vm802, %v1306, 0
      %1311 = vmatprep.subr.mxu0 0.0
      %1312 = vmatpush1.xpose.msra.mxu0 %v1309
      %1313 = vmatprep.subr.mxu0 0.0
      %1314 = vmatpush1.xpose.msra.mxu0 0.0
      %1315 = vmatprep.subr.mxu0 0.0
      %1316 = vmatpush1.xpose.msra.mxu0 0.0
      %1317 = vmatprep.subr.mxu0 0.0
      %1318 = vmatpush1.xpose.msra.mxu0 0.0
      %1319 = vmatprep.subr.mxu0 0.0
      %1320 = vmatpush1.xpose.msra.mxu0 0.0
      %1321 = vmatprep.subr.mxu0 0.0
      %1322 = vmatpush1.xpose.msra.mxu0 0.0
      %1323 = vmatprep.subr.mxu0 0.0
      %1324 = vmatpush1.xpose.msra.mxu0 0.0
      %1325 = vmatprep.subr.mxu0 0.0
      %1326 = vmatpush1.xpose.msra.mxu0 0.0
      %1327 = vmatprep.subr.mxu0 0.0
      %1328 = vmatpush1.xpose.msra.mxu0 0.0
      %1329 = vmatprep.subr.mxu0 0.0
      %1330 = vmatpush1.xpose.msra.mxu0 0.0
      %1331 = vmatprep.subr.mxu0 0.0
      %1332 = vmatpush1.xpose.msra.mxu0 0.0
      %1333 = vmatprep.subr.mxu0 0.0
      %1334 = vmatpush1.xpose.msra.mxu0 0.0
      %1335 = vmatprep.subr.mxu0 0.0
      %1336 = vmatpush1.xpose.msra.mxu0 0.0
      %1337 = vmatprep.subr.mxu0 0.0
      %1338 = vmatpush1.xpose.msra.mxu0 0.0
      %1339 = vmatprep.subr.mxu0 0.0
      %1340 = vmatpush1.xpose.msra.mxu0 0.0
      %1341 = vmatprep.subr.mxu0 0.0
      %1342 = vmatpush1.xpose.msra.mxu0 0.0
      %1343 = vmatprep.subr.mxu0 0.0
      %1344 = vmatpush1.xpose.msra.mxu0 0.0
      %1345 = vmatprep.subr.mxu0 0.0
      %1346 = vmatpush1.xpose.msra.mxu0 0.0
      %1347 = vmatprep.subr.mxu0 0.0
      %1348 = vmatpush1.xpose.msra.mxu0 0.0
      %1349 = vmatprep.subr.mxu0 0.0
      %1350 = vmatpush1.xpose.msra.mxu0 0.0
      %1351 = vmatprep.subr.mxu0 0.0
      %1352 = vmatpush1.xpose.msra.mxu0 0.0
      %1353 = vmatprep.subr.mxu0 0.0
      %1354 = vmatpush1.xpose.msra.mxu0 0.0
      %1355 = vmatprep.subr.mxu0 0.0
      %1356 = vmatpush1.xpose.msra.mxu0 0.0
      %1357 = vmatprep.subr.mxu0 0.0
      %1358 = vmatpush1.xpose.msra.mxu0 0.0
      %1359 = vmatprep.subr.mxu0 0.0
      %1360 = vmatpush1.xpose.msra.mxu0 0.0
      %1361 = vmatprep.subr.mxu0 0.0
      %1362 = vmatpush1.xpose.msra.mxu0 0.0
      %1363 = vmatprep.subr.mxu0 0.0
      %1364 = vmatpush1.xpose.msra.mxu0 0.0
      %1365 = vmatprep.subr.mxu0 0.0
      %1366 = vmatpush1.xpose.msra.mxu0 0.0
      %1367 = vmatprep.subr.mxu0 0.0
      %1368 = vmatpush1.xpose.msra.mxu0 0.0
      %1369 = vmatprep.subr.mxu0 0.0
      %1370 = vmatpush1.xpose.msra.mxu0 0.0
      %1371 = vmatprep.subr.mxu0 0.0
      %1372 = vmatpush1.xpose.msra.mxu0 0.0
      %1373 = vmatprep.subr.mxu0 0.0
      %1374 = vmatpush1.xpose.msra.mxu0 0.0
      %1375 = vmatprep.mubr.f32.mxu0 0.0
      %1376 = vmatmul.mubr.f32.gmra.mrb[0].mxu0 %v1307
      %v1377 = vpop.f32.mrb[0].mxu0
      %v1378 = vadd.f32 0.0, %v1377
      %v1379 = vpop.f32.mrb[0].mxu0
      %1380 = vdwg.mxu0
      %v1381 = vmul.f32 %v1378, 0.17677669
      %v1382 = vsel %vm880, %v1381, -inf
      %1383 = vmax.xlane.f32.xlu0 %v1382
      %v1384 = vpop.xlane.xlu0 %1383
      %v1385 = vsub.f32 %v1381, %v1384
      %v1386 = vmul.f32 %v1385, 1.442695
      %v1387 = vpow.pop %v1386
      %v1388 = vsel %vm880, %v1387, 0.0
      %1389 = vadd.xlane.f32.xlu0 %v1388
      %v1390 = vpop.xlane.xlu0 %1389
      %v1391 = vrcp.pop %v1390
      %v1392 = vmul.f32 %v1387, %v1391
      %v1394 = vsel %vm892, %v1392, 0
      %v1396 = vsel %vm896, %v1306, 0
      %1398 = vmatprep.subr.mxu0 0.0
      %1399 = vmatpush1.msra.mxu0 %v1396
      %1400 = vmatprep.subr.mxu0 0.0
      %1401 = vmatpush1.msra.mxu0 0.0
      %1402 = vmatprep.subr.mxu0 0.0
      %1403 = vmatpush1.msra.mxu0 0.0
      %1404 = vmatprep.subr.mxu0 0.0
      %1405 = vmatpush1.msra.mxu0 0.0
      %1406 = vmatprep.subr.mxu0 0.0
      %1407 = vmatpush1.msra.mxu0 0.0
      %1408 = vmatprep.subr.mxu0 0.0
      %1409 = vmatpush1.msra.mxu0 0.0
      %1410 = vmatprep.subr.mxu0 0.0
      %1411 = vmatpush1.msra.mxu0 0.0
      %1412 = vmatprep.subr.mxu0 0.0
      %1413 = vmatpush1.msra.mxu0 0.0
      %1414 = vmatprep.subr.mxu0 0.0
      %1415 = vmatpush1.msra.mxu0 0.0
      %1416 = vmatprep.subr.mxu0 0.0
      %1417 = vmatpush1.msra.mxu0 0.0
      %1418 = vmatprep.subr.mxu0 0.0
      %1419 = vmatpush1.msra.mxu0 0.0
      %1420 = vmatprep.subr.mxu0 0.0
      %1421 = vmatpush1.msra.mxu0 0.0
      %1422 = vmatprep.subr.mxu0 0.0
      %1423 = vmatpush1.msra.mxu0 0.0
      %1424 = vmatprep.subr.mxu0 0.0
      %1425 = vmatpush1.msra.mxu0 0.0
      %1426 = vmatprep.subr.mxu0 0.0
      %1427 = vmatpush1.msra.mxu0 0.0
      %1428 = vmatprep.subr.mxu0 0.0
      %1429 = vmatpush1.msra.mxu0 0.0
      %1430 = vmatprep.subr.mxu0 0.0
      %1431 = vmatpush1.msra.mxu0 0.0
      %1432 = vmatprep.subr.mxu0 0.0
      %1433 = vmatpush1.msra.mxu0 0.0
      %1434 = vmatprep.subr.mxu0 0.0
      %1435 = vmatpush1.msra.mxu0 0.0
      %1436 = vmatprep.subr.mxu0 0.0
      %1437 = vmatpush1.msra.mxu0 0.0
      %1438 = vmatprep.subr.mxu0 0.0
      %1439 = vmatpush1.msra.mxu0 0.0
      %1440 = vmatprep.subr.mxu0 0.0
      %1441 = vmatpush1.msra.mxu0 0.0
      %1442 = vmatprep.subr.mxu0 0.0
      %1443 = vmatpush1.msra.mxu0 0.0
      %1444 = vmatprep.subr.mxu0 0.0
      %1445 = vmatpush1.msra.mxu0 0.0
      %1446 = vmatprep.subr.mxu0 0.0
      %1447 = vmatpush1.msra.mxu0 0.0
      %1448 = vmatprep.subr.mxu0 0.0
      %1449 = vmatpush1.msra.mxu0 0.0
      %1450 = vmatprep.subr.mxu0 0.0
      %1451 = vmatpush1.msra.mxu0 0.0
      %1452 = vmatprep.subr.mxu0 0.0
      %1453 = vmatpush1.msra.mxu0 0.0
      %1454 = vmatprep.subr.mxu0 0.0
      %1455 = vmatpush1.msra.mxu0 0.0
      %1456 = vmatprep.subr.mxu0 0.0
      %1457 = vmatpush1.msra.mxu0 0.0
      %1458 = vmatprep.subr.mxu0 0.0
      %1459 = vmatpush1.msra.mxu0 0.0
      %1460 = vmatprep.subr.mxu0 0.0
      %1461 = vmatpush1.msra.mxu0 0.0
      %1462 = vmatprep.mubr.f32.mxu0 0.0
      %1463 = vmatmul.mubr.f32.gmra.mrb[0].mxu0 %v1394
      %v1464 = vpop.f32.mrb[0].mxu0
      %v1465 = vadd.f32 0.0, %v1464
      %v1466 = vpop.f32.mrb[0].mxu0
      %1467 = vdwg.mxu0
      %1469 = vrot.lane.b32.xlu0 %v1135, 32
      %v1470 = vpop.permute.xlu0 %1469
      %1473 = vrot.lane.b32.xlu0 %v1300, 64
      %v1474 = vpop.permute.xlu0 %1473
      %1477 = vrot.lane.b32.xlu0 %v1465, 96
      %v1478 = vpop.permute.xlu0 %1477
      %v1480 = vsel %vm802, %v966, %v1470
      %vm1481 = vcmask 523264
      %v1482 = vsel %vm1481, %v1480, %v1474
      %vm1483 = vcmask 785408
      %v1484 = vsel %vm1483, %v1482, %v1478
      %v1485 = vld [vmem:[%s10] sm:$0xff]
      %v1486 = vld [vmem:[%s10 + $0x8] sm:$0xff]
      %v1487 = vld [vmem:[%s10 + $0x10] sm:$0xff]
      %v1488 = vld [vmem:[%s10 + $0x18] sm:$0xff]
      %v1489 = vld [vmem:[%s10 + $0x20] sm:$0xff]
      %v1490 = vld [vmem:[%s10 + $0x28] sm:$0xff]
      %v1491 = vld [vmem:[%s10 + $0x30] sm:$0xff]
      %v1492 = vld [vmem:[%s10 + $0x38] sm:$0xff]
      %v1493 = vld [vmem:[%s10 + $0x40] sm:$0xff]
      %v1494 = vld [vmem:[%s10 + $0x48] sm:$0xff]
      %v1495 = vld [vmem:[%s10 + $0x50] sm:$0xff]
      %v1496 = vld [vmem:[%s10 + $0x58] sm:$0xff]
      %v1497 = vld [vmem:[%s10 + $0x60] sm:$0xff]
      %v1498 = vld [vmem:[%s10 + $0x68] sm:$0xff]
      %v1499 = vld [vmem:[%s10 + $0x70] sm:$0xff]
      %v1500 = vld [vmem:[%s10 + $0x78] sm:$0xff]
      %v1501 = vld [vmem:[%s11] sm:$0x1]
      %1502 = vmatprep.subr.mxu0 0.0
      %1503 = vmatpush1.msra.mxu0 %v1485
      %1504 = vmatprep.subr.mxu0 0.0
      %1505 = vmatpush1.msra.mxu0 %v1486
      %1506 = vmatprep.subr.mxu0 0.0
      %1507 = vmatpush1.msra.mxu0 %v1487
      %1508 = vmatprep.subr.mxu0 0.0
      %1509 = vmatpush1.msra.mxu0 %v1488
      %1510 = vmatprep.subr.mxu0 0.0
      %1511 = vmatpush1.msra.mxu0 %v1489
      %1512 = vmatprep.subr.mxu0 0.0
      %1513 = vmatpush1.msra.mxu0 %v1490
      %1514 = vmatprep.subr.mxu0 0.0
      %1515 = vmatpush1.msra.mxu0 %v1491
      %1516 = vmatprep.subr.mxu0 0.0
      %1517 = vmatpush1.msra.mxu0 %v1492
      %1518 = vmatprep.subr.mxu0 0.0
      %1519 = vmatpush1.msra.mxu0 %v1493
      %1520 = vmatprep.subr.mxu0 0.0
      %1521 = vmatpush1.msra.mxu0 %v1494
      %1522 = vmatprep.subr.mxu0 0.0
      %1523 = vmatpush1.msra.mxu0 %v1495
      %1524 = vmatprep.subr.mxu0 0.0
      %1525 = vmatpush1.msra.mxu0 %v1496
      %1526 = vmatprep.subr.mxu0 0.0
      %1527 = vmatpush1.msra.mxu0 %v1497
      %1528 = vmatprep.subr.mxu0 0.0
      %1529 = vmatpush1.msra.mxu0 %v1498
      %1530 = vmatprep.subr.mxu0 0.0
      %1531 = vmatpush1.msra.mxu0 %v1499
      %1532 = vmatprep.subr.mxu0 0.0
      %1533 = vmatpush1.msra.mxu0 %v1500
      %1534 = vmatprep.subr.mxu0 0.0
      %1535 = vmatpush1.msra.mxu0 0.0
      %1536 = vmatprep.subr.mxu0 0.0
      %1537 = vmatpush1.msra.mxu0 0.0
      %1538 = vmatprep.subr.mxu0 0.0
      %1539 = vmatpush1.msra.mxu0 0.0
      %1540 = vmatprep.subr.mxu0 0.0
      %1541 = vmatpush1.msra.mxu0 0.0
      %1542 = vmatprep.subr.mxu0 0.0
      %1543 = vmatpush1.msra.mxu0 0.0
      %1544 = vmatprep.subr.mxu0 0.0
      %1545 = vmatpush1.msra.mxu0 0.0
      %1546 = vmatprep.subr.mxu0 0.0
      %1547 = vmatpush1.msra.mxu0 0.0
      %1548 = vmatprep.subr.mxu0 0.0
      %1549 = vmatpush1.msra.mxu0 0.0
      %1550 = vmatprep.subr.mxu0 0.0
      %1551 = vmatpush1.msra.mxu0 0.0
      %1552 = vmatprep.subr.mxu0 0.0
      %1553 = vmatpush1.msra.mxu0 0.0
      %1554 = vmatprep.subr.mxu0 0.0
      %1555 = vmatpush1.msra.mxu0 0.0
      %1556 = vmatprep.subr.mxu0 0.0
      %1557 = vmatpush1.msra.mxu0 0.0
      %1558 = vmatprep.subr.mxu0 0.0
      %1559 = vmatpush1.msra.mxu0 0.0
      %1560 = vmatprep.subr.mxu0 0.0
      %1561 = vmatpush1.msra.mxu0 0.0
      %1562 = vmatprep.subr.mxu0 0.0
      %1563 = vmatpush1.msra.mxu0 0.0
      %1564 = vmatprep.subr.mxu0 0.0
      %1565 = vmatpush1.msra.mxu0 0.0
      %1566 = vmatprep.mubr.f32.mxu0 0.0
      %1567 = vmatmul.mubr.f32.gmra.mrb[0].mxu0 %v1484
      %v1568 = vpop.f32.mrb[0].mxu0
      %v1569 = vadd.f32 %v1501, %v1568
      %v1570 = vpop.f32.mrb[0].mxu0
      %1571 = vdwg.mxu0
      %v1572 = vadd.f32 %v784, %v1569
      %v1573 = vsel %vm585, %v1572, 0.0
      %1574 = vadd.xlane.f32.xlu0 %v1573
      %v1575 = vpop.xlane.xlu0 %1574
      %v1576 = vmul.f32 %v1575, %v589
      %v1577 = vsub.f32 %v1572, %v1576
      %v1578 = vmul.f32 %v1577, %v1577
      %v1579 = vsel %vm585, %v1578, 0.0
      %1580 = vadd.xlane.f32.xlu0 %v1579
      %v1581 = vpop.xlane.xlu0 %1580
      %v1582 = vmul.f32 %v1581, %v589
      %v1583 = vadd.f32 %v1582, 1e-05
      %v1584 = vrsqrt.pop %v1583
      %v1585 = vmul.f32 %v1577, %v1584
      %v1586 = vld [vmem:[%s12] sm:$0x1]
      %v1587 = vmul.f32 %v1585, %v1586
      %v1588 = vld [vmem:[%s13] sm:$0x1]
      %v1589 = vadd.f32 %v1587, %v1588
      %v1590 = vld [vmem:[%s14] sm:$0xff]
      %v1591 = vld [vmem:[%s14 + $0x8] sm:$0xff]
      %v1592 = vld [vmem:[%s14 + $0x10] sm:$0xff]
      %v1593 = vld [vmem:[%s14 + $0x18] sm:$0xff]
      %v1594 = vld [vmem:[%s14 + $0x20] sm:$0xff]
      %v1595 = vld [vmem:[%s14 + $0x28] sm:$0xff]
      %v1596 = vld [vmem:[%s14 + $0x30] sm:$0xff]
      %v1597 = vld [vmem:[%s14 + $0x38] sm:$0xff]
      %v1598 = vld [vmem:[%s14 + $0x40] sm:$0xff]
      %v1599 = vld [vmem:[%s14 + $0x48] sm:$0xff]
      %v1600 = vld [vmem:[%s14 + $0x50] sm:$0xff]
      %v1601 = vld [vmem:[%s14 + $0x58] sm:$0xff]
      %v1602 = vld [vmem:[%s14 + $0x60] sm:$0xff]
      %v1603 = vld [vmem:[%s14 + $0x68] sm:$0xff]
      %v1604 = vld [vmem:[%s14 + $0x70] sm:$0xff]
      %v1605 = vld [vmem:[%s14 + $0x78] sm:$0xff]
      %v1606 = vld [vmem:[%s14 + $0x80] sm:$0xff]
      %v1607 = vld [vmem:[%s14 + $0x88] sm:$0xff]
      %v1608 = vld [vmem:[%s14 + $0x90] sm:$0xff]
      %v1609 = vld [vmem:[%s14 + $0x98] sm:$0xff]
      %v1610 = vld [vmem:[%s14 + $0xa0] sm:$0xff]
      %v1611 = vld [vmem:[%s14 + $0xa8] sm:$0xff]
      %v1612 = vld [vmem:[%s14 + $0xb0] sm:$0xff]
      %v1613 = vld [vmem:[%s14 + $0xb8] sm:$0xff]
      %v1614 = vld [vmem:[%s14 + $0xc0] sm:$0xff]
      %v1615 = vld [vmem:[%s14 + $0xc8] sm:$0xff]
      %v1616 = vld [vmem:[%s14 + $0xd0] sm:$0xff]
      %v1617 = vld [vmem:[%s14 + $0xd8] sm:$0xff]
      %v1618 = vld [vmem:[%s14 + $0xe0] sm:$0xff]
      %v1619 = vld [vmem:[%s14 + $0xe8] sm:$0xff]
      %v1620 = vld [vmem:[%s14 + $0xf0] sm:$0xff]
      %v1621 = vld [vmem:[%s14 + $0xf8] sm:$0xff]
      %v1622 = vld [vmem:[%s14 + $0x100] sm:$0xff]
      %v1623 = vld [vmem:[%s14 + $0x108] sm:$0xff]
      %v1624 = vld [vmem:[%s14 + $0x110] sm:$0xff]
      %v1625 = vld [vmem:[%s14 + $0x118] sm:$0xff]
      %v1626 = vld [vmem:[%s14 + $0x120] sm:$0xff]
      %v1627 = vld [vmem:[%s14 + $0x128] sm:$0xff]
      %v1628 = vld [vmem:[%s14 + $0x130] sm:$0xff]
      %v1629 = vld [vmem:[%s14 + $0x138] sm:$0xff]
      %v1630 = vld [vmem:[%s14 + $0x140] sm:$0xff]
      %v1631 = vld [vmem:[%s14 + $0x148] sm:$0xff]
      %v1632 = vld [vmem:[%s14 + $0x150] sm:$0xff]
      %v1633 = vld [vmem:[%s14 + $0x158] sm:$0xff]
      %v1634 = vld [vmem:[%s14 + $0x160] sm:$0xff]
      %v1635 = vld [vmem:[%s14 + $0x168] sm:$0xff]
      %v1636 = vld [vmem:[%s14 + $0x170] sm:$0xff]
      %v1637 = vld [vmem:[%s14 + $0x178] sm:$0xff]
      %v1638 = vld [vmem:[%s14 + $0x180] sm:$0xff]
      %v1639 = vld [vmem:[%s14 + $0x188] sm:$0xff]
      %v1640 = vld [vmem:[%s14 + $0x190] sm:$0xff]
      %v1641 = vld [vmem:[%s14 + $0x198] sm:$0xff]
      %v1642 = vld [vmem:[%s14 + $0x1a0] sm:$0xff]
      %v1643 = vld [vmem:[%s14 + $0x1a8] sm:$0xff]
      %v1644 = vld [vmem:[%s14 + $0x1b0] sm:$0xff]
      %v1645 = vld [vmem:[%s14 + $0x1b8] sm:$0xff]
      %v1646 = vld [vmem:[%s14 + $0x1c0] sm:$0xff]
      %v1647 = vld [vmem:[%s14 + $0x1c8] sm:$0xff]
      %v1648 = vld [vmem:[%s14 + $0x1d0] sm:$0xff]
      %v1649 = vld [vmem:[%s14 + $0x1d8] sm:$0xff]
      %v1650 = vld [vmem:[%s14 + $0x1e0] sm:$0xff]
      %v1651 = vld [vmem:[%s14 + $0x1e8] sm:$0xff]
      %v1652 = vld [vmem:[%s14 + $0x1f0] sm:$0xff]
      %v1653 = vld [vmem:[%s14 + $0x1f8] sm:$0xff]
      %v1654 = vld [vmem:[%s15] sm:$0xf]
      %v1656 = vlaneseq
      %v1657 = vshrl.u32 %v1656, 7
      %v1658 = vsub.s32 0, %v1657
      %v1659 = vrot.slane %v1654, %v1658
      %v1660 = vlaneseq
      %v1661 = vshrl.u32 %v1660, 7
      %v1662 = vsub.s32 1, %v1661
      %v1663 = vrot.slane %v1654, %v1662
      %v1664 = vlaneseq
      %v1665 = vshrl.u32 %v1664, 7
      %v1666 = vsub.s32 2, %v1665
      %v1667 = vrot.slane %v1654, %v1666
      %v1668 = vlaneseq
      %v1669 = vshrl.u32 %v1668, 7
      %v1670 = vsub.s32 3, %v1669
      %v1671 = vrot.slane %v1654, %v1670
      %1676 = vmatprep.subr.mxu0 %v1591
      %1677 = vmatpush1.msra.mxu0 %v1590
      %1678 = vmatprep.subr.mxu0 %v1595
      %1679 = vmatpush1.msra.mxu0 %v1594
      %1680 = vmatprep.subr.mxu0 %v1599
      %1681 = vmatpush1.msra.mxu0 %v1598
      %1682 = vmatprep.subr.mxu0 %v1603
      %1683 = vmatpush1.msra.mxu0 %v1602
      %1684 = vmatprep.subr.mxu0 %v1607
      %1685 = vmatpush1.msra.mxu0 %v1606
      %1686 = vmatprep.subr.mxu0 %v1611
      %1687 = vmatpush1.msra.mxu0 %v1610
      %1688 = vmatprep.subr.mxu0 %v1615
      %1689 = vmatpush1.msra.mxu0 %v1614
      %1690 = vmatprep.subr.mxu0 %v1619
      %1691 = vmatpush1.msra.mxu0 %v1618
      %1692 = vmatprep.subr.mxu0 %v1623
      %1693 = vmatpush1.msra.mxu0 %v1622
      %1694 = vmatprep.subr.mxu0 %v1627
      %1695 = vmatpush1.msra.mxu0 %v1626
      %1696 = vmatprep.subr.mxu0 %v1631
      %1697 = vmatpush1.msra.mxu0 %v1630
      %1698 = vmatprep.subr.mxu0 %v1635
      %1699 = vmatpush1.msra.mxu0 %v1634
      %1700 = vmatprep.subr.mxu0 %v1639
      %1701 = vmatpush1.msra.mxu0 %v1638
      %1702 = vmatprep.subr.mxu0 %v1643
      %1703 = vmatpush1.msra.mxu0 %v1642
      %1704 = vmatprep.subr.mxu0 %v1647
      %1705 = vmatpush1.msra.mxu0 %v1646
      %1706 = vmatprep.subr.mxu0 %v1651
      %1707 = vmatpush1.msra.mxu0 %v1650
      %1708 = vmatprep.subr.mxu0 0.0
      %1709 = vmatpush1.msra.mxu0 0.0
      %1710 = vmatprep.subr.mxu0 0.0
      %1711 = vmatpush1.msra.mxu0 0.0
      %1712 = vmatprep.subr.mxu0 0.0
      %1713 = vmatpush1.msra.mxu0 0.0
      %1714 = vmatprep.subr.mxu0 0.0
      %1715 = vmatpush1.msra.mxu0 0.0
      %1716 = vmatprep.subr.mxu0 0.0
      %1717 = vmatpush1.msra.mxu0 0.0
      %1718 = vmatprep.subr.mxu0 0.0
      %1719 = vmatpush1.msra.mxu0 0.0
      %1720 = vmatprep.subr.mxu0 0.0
      %1721 = vmatpush1.msra.mxu0 0.0
      %1722 = vmatprep.subr.mxu0 0.0
      %1723 = vmatpush1.msra.mxu0 0.0
      %1724 = vmatprep.subr.mxu0 0.0
      %1725 = vmatpush1.msra.mxu0 0.0
      %1726 = vmatprep.subr.mxu0 0.0
      %1727 = vmatpush1.msra.mxu0 0.0
      %1728 = vmatprep.subr.mxu0 0.0
      %1729 = vmatpush1.msra.mxu0 0.0
      %1730 = vmatprep.subr.mxu0 0.0
      %1731 = vmatpush1.msra.mxu0 0.0
      %1732 = vmatprep.subr.mxu0 0.0
      %1733 = vmatpush1.msra.mxu0 0.0
      %1734 = vmatprep.subr.mxu0 0.0
      %1735 = vmatpush1.msra.mxu0 0.0
      %1736 = vmatprep.subr.mxu0 0.0
      %1737 = vmatpush1.msra.mxu0 0.0
      %1738 = vmatprep.subr.mxu0 0.0
      %1739 = vmatpush1.msra.mxu0 0.0
      %1740 = vmatprep.mubr.f32.mxu0 0.0
      %1741 = vmatmul.mubr.f32.gmra.mrb[0].mxu0 %v1589
      %v1742 = vpop.f32.mrb[0].mxu0
      %v1743 = vadd.f32 %v1659, %v1742
      %v1744 = vpop.f32.mrb[0].mxu0
      %v1745 = vadd.f32 %v1663, %v1744
      %1746 = vdwg.mxu0
      %1747 = vmatprep.subr.mxu0 %v1593
      %1748 = vmatpush1.msra.mxu0 %v1592
      %1749 = vmatprep.subr.mxu0 %v1597
      %1750 = vmatpush1.msra.mxu0 %v1596
      %1751 = vmatprep.subr.mxu0 %v1601
      %1752 = vmatpush1.msra.mxu0 %v1600
      %1753 = vmatprep.subr.mxu0 %v1605
      %1754 = vmatpush1.msra.mxu0 %v1604
      %1755 = vmatprep.subr.mxu0 %v1609
      %1756 = vmatpush1.msra.mxu0 %v1608
      %1757 = vmatprep.subr.mxu0 %v1613
      %1758 = vmatpush1.msra.mxu0 %v1612
      %1759 = vmatprep.subr.mxu0 %v1617
      %1760 = vmatpush1.msra.mxu0 %v1616
      %1761 = vmatprep.subr.mxu0 %v1621
      %1762 = vmatpush1.msra.mxu0 %v1620
      %1763 = vmatprep.subr.mxu0 %v1625
      %1764 = vmatpush1.msra.mxu0 %v1624
      %1765 = vmatprep.subr.mxu0 %v1629
      %1766 = vmatpush1.msra.mxu0 %v1628
      %1767 = vmatprep.subr.mxu0 %v1633
      %1768 = vmatpush1.msra.mxu0 %v1632
      %1769 = vmatprep.subr.mxu0 %v1637
      %1770 = vmatpush1.msra.mxu0 %v1636
      %1771 = vmatprep.subr.mxu0 %v1641
      %1772 = vmatpush1.msra.mxu0 %v1640
      %1773 = vmatprep.subr.mxu0 %v1645
      %1774 = vmatpush1.msra.mxu0 %v1644
      %1775 = vmatprep.subr.mxu0 %v1649
      %1776 = vmatpush1.msra.mxu0 %v1648
      %1777 = vmatprep.subr.mxu0 %v1653
      %1778 = vmatpush1.msra.mxu0 %v1652
      %1779 = vmatprep.subr.mxu0 0.0
      %1780 = vmatpush1.msra.mxu0 0.0
      %1781 = vmatprep.subr.mxu0 0.0
      %1782 = vmatpush1.msra.mxu0 0.0
      %1783 = vmatprep.subr.mxu0 0.0
      %1784 = vmatpush1.msra.mxu0 0.0
      %1785 = vmatprep.subr.mxu0 0.0
      %1786 = vmatpush1.msra.mxu0 0.0
      %1787 = vmatprep.subr.mxu0 0.0
      %1788 = vmatpush1.msra.mxu0 0.0
      %1789 = vmatprep.subr.mxu0 0.0
      %1790 = vmatpush1.msra.mxu0 0.0
      %1791 = vmatprep.subr.mxu0 0.0
      %1792 = vmatpush1.msra.mxu0 0.0
      %1793 = vmatprep.subr.mxu0 0.0
      %1794 = vmatpush1.msra.mxu0 0.0
      %1795 = vmatprep.subr.mxu0 0.0
      %1796 = vmatpush1.msra.mxu0 0.0
      %1797 = vmatprep.subr.mxu0 0.0
      %1798 = vmatpush1.msra.mxu0 0.0
      %1799 = vmatprep.subr.mxu0 0.0
      %1800 = vmatpush1.msra.mxu0 0.0
      %1801 = vmatprep.subr.mxu0 0.0
      %1802 = vmatpush1.msra.mxu0 0.0
      %1803 = vmatprep.subr.mxu0 0.0
      %1804 = vmatpush1.msra.mxu0 0.0
      %1805 = vmatprep.subr.mxu0 0.0
      %1806 = vmatpush1.msra.mxu0 0.0
      %1807 = vmatprep.subr.mxu0 0.0
      %1808 = vmatpush1.msra.mxu0 0.0
      %1809 = vmatprep.subr.mxu0 0.0
      %1810 = vmatpush1.msra.mxu0 0.0
      %1811 = vmatprep.mubr.f32.mxu0 0.0
      %1812 = vmatmul.mubr.f32.gmra.mrb[0].mxu0 %v1589
      %v1813 = vpop.f32.mrb[0].mxu0
      %v1814 = vadd.f32 %v1667, %v1813
      %v1815 = vpop.f32.mrb[0].mxu0
      %v1816 = vadd.f32 %v1671, %v1815
      %1817 = vdwg.mxu0
      %v1818 = vmul.f32 %v1743, %v1743
      %v1819 = vmul.f32 %v1745, %v1745
      %v1820 = vmul.f32 %v1814, %v1814
      %v1821 = vmul.f32 %v1816, %v1816
      %v1822 = vmul.f32 %v1743, %v1818
      %v1823 = vmul.f32 %v1745, %v1819
      %v1824 = vmul.f32 %v1814, %v1820
      %v1825 = vmul.f32 %v1816, %v1821
      %v1826 = vmul.f32 %v1822, 0.044715
      %v1827 = vmul.f32 %v1823, 0.044715
      %v1828 = vmul.f32 %v1824, 0.044715
      %v1829 = vmul.f32 %v1825, 0.044715
      %v1830 = vadd.f32 %v1743, %v1826
      %v1831 = vadd.f32 %v1745, %v1827
      %v1832 = vadd.f32 %v1814, %v1828
      %v1833 = vadd.f32 %v1816, %v1829
      %v1834 = vmul.f32 %v1830, 0.7978846
      %v1835 = vmul.f32 %v1831, 0.7978846
      %v1836 = vmul.f32 %v1832, 0.7978846
      %v1837 = vmul.f32 %v1833, 0.7978846
      %v1838 = vtanh.pop %v1834
      %v1839 = vtanh.pop %v1835
      %v1840 = vtanh.pop %v1836
      %v1841 = vtanh.pop %v1837
      %v1842 = vadd.f32 %v1838, 1.0
      %v1843 = vadd.f32 %v1839, 1.0
      %v1844 = vadd.f32 %v1840, 1.0
      %v1845 = vadd.f32 %v1841, 1.0
      %v1846 = vmul.f32 %v1842, 0.5
      %v1847 = vmul.f32 %v1843, 0.5
      %v1848 = vmul.f32 %v1844, 0.5
      %v1849 = vmul.f32 %v1845, 0.5
      %v1850 = vmul.f32 %v1743, %v1846
      %v1851 = vmul.f32 %v1745, %v1847
      %v1852 = vmul.f32 %v1814, %v1848
      %v1853 = vmul.f32 %v1816, %v1849
      %v1854 = vld [vmem:[%s16] sm:$0xff]
      %v1855 = vld [vmem:[%s16 + $0x8] sm:$0xff]
      %v1856 = vld [vmem:[%s16 + $0x10] sm:$0xff]
      %v1857 = vld [vmem:[%s16 + $0x18] sm:$0xff]
      %v1858 = vld [vmem:[%s16 + $0x20] sm:$0xff]
      %v1859 = vld [vmem:[%s16 + $0x28] sm:$0xff]
      %v1860 = vld [vmem:[%s16 + $0x30] sm:$0xff]
      %v1861 = vld [vmem:[%s16 + $0x38] sm:$0xff]
      %v1862 = vld [vmem:[%s16 + $0x40] sm:$0xff]
      %v1863 = vld [vmem:[%s16 + $0x48] sm:$0xff]
      %v1864 = vld [vmem:[%s16 + $0x50] sm:$0xff]
      %v1865 = vld [vmem:[%s16 + $0x58] sm:$0xff]
      %v1866 = vld [vmem:[%s16 + $0x60] sm:$0xff]
      %v1867 = vld [vmem:[%s16 + $0x68] sm:$0xff]
      %v1868 = vld [vmem:[%s16 + $0x70] sm:$0xff]
      %v1869 = vld [vmem:[%s16 + $0x78] sm:$0xff]
      %v1870 = vld [vmem:[%s16 + $0x80] sm:$0xff]
      %v1871 = vld [vmem:[%s16 + $0x88] sm:$0xff]
      %v1872 = vld [vmem:[%s16 + $0x90] sm:$0xff]
      %v1873 = vld [vmem:[%s16 + $0x98] sm:$0xff]
      %v1874 = vld [vmem:[%s16 + $0xa0] sm:$0xff]
      %v1875 = vld [vmem:[%s16 + $0xa8] sm:$0xff]
      %v1876 = vld [vmem:[%s16 + $0xb0] sm:$0xff]
      %v1877 = vld [vmem:[%s16 + $0xb8] sm:$0xff]
      %v1878 = vld [vmem:[%s16 + $0xc0] sm:$0xff]
      %v1879 = vld [vmem:[%s16 + $0xc8] sm:$0xff]
      %v1880 = vld [vmem:[%s16 + $0xd0] sm:$0xff]
      %v1881 = vld [vmem:[%s16 + $0xd8] sm:$0xff]
      %v1882 = vld [vmem:[%s16 + $0xe0] sm:$0xff]
      %v1883 = vld [vmem:[%s16 + $0xe8] sm:$0xff]
      %v1884 = vld [vmem:[%s16 + $0xf0] sm:$0xff]
      %v1885 = vld [vmem:[%s16 + $0xf8] sm:$0xff]
      %v1886 = vld [vmem:[%s16 + $0x100] sm:$0xff]
      %v1887 = vld [vmem:[%s16 + $0x108] sm:$0xff]
      %v1888 = vld [vmem:[%s16 + $0x110] sm:$0xff]
      %v1889 = vld [vmem:[%s16 + $0x118] sm:$0xff]
      %v1890 = vld [vmem:[%s16 + $0x120] sm:$0xff]
      %v1891 = vld [vmem:[%s16 + $0x128] sm:$0xff]
      %v1892 = vld [vmem:[%s16 + $0x130] sm:$0xff]
      %v1893 = vld [vmem:[%s16 + $0x138] sm:$0xff]
      %v1894 = vld [vmem:[%s16 + $0x140] sm:$0xff]
      %v1895 = vld [vmem:[%s16 + $0x148] sm:$0xff]
      %v1896 = vld [vmem:[%s16 + $0x150] sm:$0xff]
      %v1897 = vld [vmem:[%s16 + $0x158] sm:$0xff]
      %v1898 = vld [vmem:[%s16 + $0x160] sm:$0xff]
      %v1899 = vld [vmem:[%s16 + $0x168] sm:$0xff]
      %v1900 = vld [vmem:[%s16 + $0x170] sm:$0xff]
      %v1901 = vld [vmem:[%s16 + $0x178] sm:$0xff]
      %v1902 = vld [vmem:[%s16 + $0x180] sm:$0xff]
      %v1903 = vld [vmem:[%s16 + $0x188] sm:$0xff]
      %v1904 = vld [vmem:[%s16 + $0x190] sm:$0xff]
      %v1905 = vld [vmem:[%s16 + $0x198] sm:$0xff]
      %v1906 = vld [vmem:[%s16 + $0x1a0] sm:$0xff]
      %v1907 = vld [vmem:[%s16 + $0x1a8] sm:$0xff]
      %v1908 = vld [vmem:[%s16 + $0x1b0] sm:$0xff]
      %v1909 = vld [vmem:[%s16 + $0x1b8] sm:$0xff]
      %v1910 = vld [vmem:[%s16 + $0x1c0] sm:$0xff]
      %v1911 = vld [vmem:[%s16 + $0x1c8] sm:$0xff]
      %v1912 = vld [vmem:[%s16 + $0x1d0] sm:$0xff]
      %v1913 = vld [vmem:[%s16 + $0x1d8] sm:$0xff]
      %v1914 = vld [vmem:[%s16 + $0x1e0] sm:$0xff]
      %v1915 = vld [vmem:[%s16 + $0x1e8] sm:$0xff]
      %v1916 = vld [vmem:[%s16 + $0x1f0] sm:$0xff]
      %v1917 = vld [vmem:[%s16 + $0x1f8] sm:$0xff]
      %v1918 = vld [vmem:[%s17] sm:$0x1]
      %1919 = vmatprep.subr.mxu0 0.0
      %1920 = vmatpush1.msra.mxu0 %v1854
      %1921 = vmatprep.subr.mxu0 0.0
      %1922 = vmatpush1.msra.mxu0 %v1855
      %1923 = vmatprep.subr.mxu0 0.0
      %1924 = vmatpush1.msra.mxu0 %v1856
      %1925 = vmatprep.subr.mxu0 0.0
      %1926 = vmatpush1.msra.mxu0 %v1857
      %1927 = vmatprep.subr.mxu0 0.0
      %1928 = vmatpush1.msra.mxu0 %v1858
      %1929 = vmatprep.subr.mxu0 0.0
      %1930 = vmatpush1.msra.mxu0 %v1859
      %1931 = vmatprep.subr.mxu0 0.0
      %1932 = vmatpush1.msra.mxu0 %v1860
      %1933 = vmatprep.subr.mxu0 0.0
      %1934 = vmatpush1.msra.mxu0 %v1861
      %1935 = vmatprep.subr.mxu0 0.0
      %1936 = vmatpush1.msra.mxu0 %v1862
      %1937 = vmatprep.subr.mxu0 0.0
      %1938 = vmatpush1.msra.mxu0 %v1863
      %1939 = vmatprep.subr.mxu0 0.0
      %1940 = vmatpush1.msra.mxu0 %v1864
      %1941 = vmatprep.subr.mxu0 0.0
      %1942 = vmatpush1.msra.mxu0 %v1865
      %1943 = vmatprep.subr.mxu0 0.0
      %1944 = vmatpush1.msra.mxu0 %v1866
      %1945 = vmatprep.subr.mxu0 0.0
      %1946 = vmatpush1.msra.mxu0 %v1867
      %1947 = vmatprep.subr.mxu0 0.0
      %1948 = vmatpush1.msra.mxu0 %v1868
      %1949 = vmatprep.subr.mxu0 0.0
      %1950 = vmatpush1.msra.mxu0 %v1869
      %1951 = vmatprep.subr.mxu0 0.0
      %1952 = vmatpush1.msra.mxu0 %v1870
      %1953 = vmatprep.subr.mxu0 0.0
      %1954 = vmatpush1.msra.mxu0 %v1871
      %1955 = vmatprep.subr.mxu0 0.0
      %1956 = vmatpush1.msra.mxu0 %v1872
      %1957 = vmatprep.subr.mxu0 0.0
      %1958 = vmatpush1.msra.mxu0 %v1873
      %1959 = vmatprep.subr.mxu0 0.0
      %1960 = vmatpush1.msra.mxu0 %v1874
      %1961 = vmatprep.subr.mxu0 0.0
      %1962 = vmatpush1.msra.mxu0 %v1875
      %1963 = vmatprep.subr.mxu0 0.0
      %1964 = vmatpush1.msra.mxu0 %v1876
      %1965 = vmatprep.subr.mxu0 0.0
      %1966 = vmatpush1.msra.mxu0 %v1877
      %1967 = vmatprep.subr.mxu0 0.0
      %1968 = vmatpush1.msra.mxu0 %v1878
      %1969 = vmatprep.subr.mxu0 0.0
      %1970 = vmatpush1.msra.mxu0 %v1879
      %1971 = vmatprep.subr.mxu0 0.0
      %1972 = vmatpush1.msra.mxu0 %v1880
      %1973 = vmatprep.subr.mxu0 0.0
      %1974 = vmatpush1.msra.mxu0 %v1881
      %1975 = vmatprep.subr.mxu0 0.0
      %1976 = vmatpush1.msra.mxu0 %v1882
      %1977 = vmatprep.subr.mxu0 0.0
      %1978 = vmatpush1.msra.mxu0 %v1883
      %1979 = vmatprep.subr.mxu0 0.0
      %1980 = vmatpush1.msra.mxu0 %v1884
      %1981 = vmatprep.subr.mxu0 0.0
      %1982 = vmatpush1.msra.mxu0 %v1885
      %1983 = vmatprep.mubr.f32.mxu0 %v1851
      %1984 = vmatmul.mubr.f32.gmra.mrb[0].mxu0 %v1850
      %v1985 = vpop.f32.mrb[0].mxu0
      %v1986 = vadd.f32 %v1918, %v1985
      %v1987 = vpop.f32.mrb[0].mxu0
      %1988 = vdwg.mxu0
      %1989 = vmatprep.subr.mxu0 0.0
      %1990 = vmatpush1.msra.mxu0 %v1886
      %1991 = vmatprep.subr.mxu0 0.0
      %1992 = vmatpush1.msra.mxu0 %v1887
      %1993 = vmatprep.subr.mxu0 0.0
      %1994 = vmatpush1.msra.mxu0 %v1888
      %1995 = vmatprep.subr.mxu0 0.0
      %1996 = vmatpush1.msra.mxu0 %v1889
      %1997 = vmatprep.subr.mxu0 0.0
      %1998 = vmatpush1.msra.mxu0 %v1890
      %1999 = vmatprep.subr.mxu0 0.0
      %2000 = vmatpush1.msra.mxu0 %v1891
      %2001 = vmatprep.subr.mxu0 0.0
      %2002 = vmatpush1.msra.mxu0 %v1892
      %2003 = vmatprep.subr.mxu0 0.0
      %2004 = vmatpush1.msra.mxu0 %v1893
      %2005 = vmatprep.subr.mxu0 0.0
      %2006 = vmatpush1.msra.mxu0 %v1894
      %2007 = vmatprep.subr.mxu0 0.0
      %2008 = vmatpush1.msra.mxu0 %v1895
      %2009 = vmatprep.subr.mxu0 0.0
      %2010 = vmatpush1.msra.mxu0 %v1896
      %2011 = vmatprep.subr.mxu0 0.0
      %2012 = vmatpush1.msra.mxu0 %v1897
      %2013 = vmatprep.subr.mxu0 0.0
      %2014 = vmatpush1.msra.mxu0 %v1898
      %2015 = vmatprep.subr.mxu0 0.0
      %2016 = vmatpush1.msra.mxu0 %v1899
      %2017 = vmatprep.subr.mxu0 0.0
      %2018 = vmatpush1.msra.mxu0 %v1900
      %2019 = vmatprep.subr.mxu0 0.0
      %2020 = vmatpush1.msra.mxu0 %v1901
      %2021 = vmatprep.subr.mxu0 0.0
      %2022 = vmatpush1.msra.mxu0 %v1902
      %2023 = vmatprep.subr.mxu0 0.0
      %2024 = vmatpush1.msra.mxu0 %v1903
      %2025 = vmatprep.subr.mxu0 0.0
      %2026 = vmatpush1.msra.mxu0 %v1904
      %2027 = vmatprep.subr.mxu0 0.0
      %2028 = vmatpush1.msra.mxu0 %v1905
      %2029 = vmatprep.subr.mxu0 0.0
      %2030 = vmatpush1.msra.mxu0 %v1906
      %2031 = vmatprep.subr.mxu0 0.0
      %2032 = vmatpush1.msra.mxu0 %v1907
      %2033 = vmatprep.subr.mxu0 0.0
      %2034 = vmatpush1.msra.mxu0 %v1908
      %2035 = vmatprep.subr.mxu0 0.0
      %2036 = vmatpush1.msra.mxu0 %v1909
      %2037 = vmatprep.subr.mxu0 0.0
      %2038 = vmatpush1.msra.mxu0 %v1910
      %2039 = vmatprep.subr.mxu0 0.0
      %2040 = vmatpush1.msra.mxu0 %v1911
      %2041 = vmatprep.subr.mxu0 0.0
      %2042 = vmatpush1.msra.mxu0 %v1912
      %2043 = vmatprep.subr.mxu0 0.0
      %2044 = vmatpush1.msra.mxu0 %v1913
      %2045 = vmatprep.subr.mxu0 0.0
      %2046 = vmatpush1.msra.mxu0 %v1914
      %2047 = vmatprep.subr.mxu0 0.0
      %2048 = vmatpush1.msra.mxu0 %v1915
      %2049 = vmatprep.subr.mxu0 0.0
      %2050 = vmatpush1.msra.mxu0 %v1916
      %2051 = vmatprep.subr.mxu0 0.0
      %2052 = vmatpush1.msra.mxu0 %v1917
      %2053 = vmatprep.mubr.f32.mxu0 %v1853
      %2054 = vmatmul.mubr.f32.gmra.mrb[0].mxu0 %v1852
      %v2055 = vpop.f32.mrb[0].mxu0
      %v2056 = vadd.f32 %v1986, %v2055
      %v2057 = vpop.f32.mrb[0].mxu0
      %2058 = vdwg.mxu0
      %v2059 = vadd.f32 %v1572, %v2056
      %2060 = vst [vmem:[%s582] sm:$0x1] %v2059
      %p2061 = scmp.lt.s32.totalorder %s29, 1
      %s2062 = scalar_select %p2061, %s29, 1
      %s2063 = scalar_lea.vmem %s18, %s2062
      // Predicated region
      $region93: #{_lambda_.10} parent=91 // pred_check
        %p2064 = pneg %p435
      $region94: #{_lambda_.10} parent=91 // pred_check_branch
        %2066 = sbr.rel (%p2064) target = $region96
      $region95: #{_lambda_.10} parent=91 // pred_region
        _
      $region96: #{_lambda_.10} parent=91 // pred_fallthru
        _
    $region92: #{_lambda_.10} parent=5 // pred_fallthru
      _
    %p2067 = scmp.le.s32.totalorder 2, %s24
    // Predicated region
    $region97: #{_lambda_.10} parent=5 // pred_check
      %p2068 = pneg %p2067
    $region98: #{_lambda_.10} parent=5 // pred_check_branch
      %2070 = sbr.rel (%p2068) target = $region100
    $region99: #{_lambda_.10} parent=5 // pred_region
      %s2071 = ssub.s32 %s24, 2
      // Predicated region
      $region101: #{_lambda_.10} parent=99 // pred_check
        %p2072 = pneg %p441
      $region102: #{_lambda_.10} parent=99 // pred_check_branch
        %2074 = sbr.rel (%p2072) target = $region104
      $region103: #{_lambda_.10} parent=99 // pred_region
        %p2075 = scmp.lt.s32.totalorder %s30, 1
        %s2076 = scalar_select %p2075, %s30, 1
        %s2077 = scalar_lea.vmem %s18, %s2076
      $region104: #{_lambda_.10} parent=99 // pred_fallthru
        _
    $region100: #{_lambda_.10} parent=5 // pred_fallthru
      _
  $region6: #{_lambda_.10} parent=0 // loop_footer
    %s28 = sadd.s32 1, %s24
  $region7: #{_lambda_.10} parent=0 // loop_footer_branch
    %23 = sbr.rel target = $region3
  $region8: #{_lambda_.10} parent=0 // loop_exit
    _

</llo_original>
